<compile_context>
chip_gen: v6e
topology: v6e:2x2x1
jax: 0.10.0
libtpu: 0.0.40
codegen_flags: <defaults>
</compile_context>

<pallas_src>
import numpy as np
import jax
import jax.numpy as jnp
from jax.experimental import pallas as pl
from jax.experimental.pallas import tpu as pltpu  # noqa: F401  (TPU backend)

# ---- synthetic "small BERT" config -----------------------------------------
HIDDEN = 32
NUM_HEADS = 4
HEAD_DIM = HIDDEN // NUM_HEADS
FFN = 64
NUM_LAYERS = 2
VOCAB = 50
MAX_LENGTH = 8          # per-chunk length incl. [CLS]/[SEP]
OVERLAP = 2
NUM_LABELS = 2
CLS_ID, SEP_ID, PAD_ID = 1, 2, 0
LN_EPS = 1e-12

LANE = 128              # TPU lane width; small dims are packed / padded to it
CHUNK_BUCKET = 4        # pad chunk count up to a multiple of this (shape reuse)

# rows of the packed per-layer vector buffer (L, 8, 128)
(VEC_BQKV, VEC_BO, VEC_LN1G, VEC_LN1B,
 VEC_B1, VEC_B2, VEC_LN2G, VEC_LN2B) = range(8)


# ---------------------------------------------------------------------------
# helpers (traced both in glue and inside the kernel)
# ---------------------------------------------------------------------------
def _layer_norm(x, gamma, beta, eps=LN_EPS):
    mu = jnp.mean(x, axis=-1, keepdims=True)
    var = jnp.mean((x - mu) ** 2, axis=-1, keepdims=True)
    return (x - mu) * jax.lax.rsqrt(var + eps) * gamma + beta


# ---------------------------------------------------------------------------
# Pallas kernel: all encoder layers + CLS-mean pooling + classifier, one launch
# ---------------------------------------------------------------------------
def fused_doc_bert_kernel(x_ref, neg_ref, sel_ref,
                          wqkv_ref, wo_ref, w1_ref, w2_ref, vec_ref,
                          clsw_ref, clsb_ref,
                          logits_ref):
    """
    x_ref     : (P, H)          f32   all chunks flattened onto sublanes
    neg_ref   : (P, P)          f32   block-diagonal additive attention mask
    sel_ref   : (B, P)          f32   per-doc mean-of-chunk-CLS selection matrix
    wqkv_ref  : (L, H, 128)     bf16  [Wq | Wk | Wv] lane-padded to 128
    wo_ref    : (L, NH, HD, H)  bf16  per-head rows of the output projection
    w1_ref    : (L, H, FFN)     bf16
    w2_ref    : (L, FFN, H)     bf16
    vec_ref   : (L, 8, 128)     f32   packed biases / LayerNorm params
    clsw_ref  : (H, 128)        f32   classifier weight, lane-padded
    clsb_ref  : (1, 128)        f32
    logits_ref: (B, 128)        f32   lane-dense output (cols >= NUM_LABELS == 0)
    """
    x = x_ref[...]                               # (P, H) f32
    neg = neg_ref[...]                           # (P, P) f32
    scale = 1.0 / (HEAD_DIM ** 0.5)

    for l in range(NUM_LAYERS):                  # static unroll; weights stay in VMEM
        vec = vec_ref[l]                         # (8, 128) f32

        # fused Q/K/V projection: one (P,H)@(H,128) bf16 matmul, f32 accumulation
        qkv = jnp.dot(x.astype(jnp.bfloat16), wqkv_ref[l],
                      preferred_element_type=jnp.float32) \
              + vec[VEC_BQKV:VEC_BQKV + 1, :]

        # attention; per-head context folded straight into the output projection
        # (concat(ctx_h) @ Wo  ==  sum_h ctx_h @ Wo[h])  -> no concatenate.
        attn = jnp.zeros((x.shape[0], HIDDEN), jnp.float32)
        for h in range(NUM_HEADS):
            qh = qkv[:, h * HEAD_DIM:(h + 1) * HEAD_DIM].astype(jnp.bfloat16)
            kh = qkv[:, HIDDEN + h * HEAD_DIM:
                        HIDDEN + (h + 1) * HEAD_DIM].astype(jnp.bfloat16)
            vh = qkv[:, 2 * HIDDEN + h * HEAD_DIM:
                        2 * HIDDEN + (h + 1) * HEAD_DIM].astype(jnp.bfloat16)

            s = jnp.einsum("qd,kd->qk", qh, kh,
                           preferred_element_type=jnp.float32) * scale + neg
            s = s - jnp.max(s, axis=-1, keepdims=True)            # fp32 softmax
            p = jnp.exp(s)
            p = p * pl.reciprocal(jnp.sum(p, axis=-1, keepdims=True), approx=True)

            ctx = jnp.dot(p.astype(jnp.bfloat16), vh,
                          preferred_element_type=jnp.float32)      # (P, HD)
            attn = attn + jnp.dot(ctx.astype(jnp.bfloat16), wo_ref[l, h],
                                  preferred_element_type=jnp.float32)

        attn = attn + vec[VEC_BO:VEC_BO + 1, :HIDDEN]
        x = _layer_norm(x + attn,
                        vec[VEC_LN1G:VEC_LN1G + 1, :HIDDEN],
                        vec[VEC_LN1B:VEC_LN1B + 1, :HIDDEN])

        # feed-forward
        h1 = jnp.dot(x.astype(jnp.bfloat16), w1_ref[l],
                     preferred_element_type=jnp.float32) \
             + vec[VEC_B1:VEC_B1 + 1, :FFN]
        # TODO(synk): tanh-approx GELU; HF BERT default is the exact erf GELU.
        h1 = jax.nn.gelu(h1, approximate=True)
        ffn = jnp.dot(h1.astype(jnp.bfloat16), w2_ref[l],
                      preferred_element_type=jnp.float32) \
              + vec[VEC_B2:VEC_B2 + 1, :HIDDEN]
        x = _layer_norm(x + ffn,
                        vec[VEC_LN2G:VEC_LN2G + 1, :HIDDEN],
                        vec[VEC_LN2B:VEC_LN2B + 1, :HIDDEN])

    # classifier epilogue: per-doc mean of chunk-CLS rows + Linear
    # (dropout = eval-mode identity).  sel already carries the 1/count weights.
    doc = jnp.dot(sel_ref[...], x, preferred_element_type=jnp.float32)      # (B, H)
    logits_ref[...] = jnp.dot(doc, clsw_ref[...],
                              preferred_element_type=jnp.float32) + clsb_ref[...]


def run_fused(x, neg, sel, params):
    B = sel.shape[0]
    out = pl.pallas_call(
        fused_doc_bert_kernel,
        out_shape=jax.ShapeDtypeStruct((B, LANE), jnp.float32),
    )(x, neg, sel,
      params["wqkv"], params["wo"], params["w1"], params["w2"], params["vec"],
      params["cls_w_pad"], params["cls_b_pad"])
    return out[:, :NUM_LABELS]


@jax.jit
def _embed_and_encode(params, chunk_ids, neg, sel):
    # embeddings (gather + LayerNorm) in plain JAX glue, then one fused kernel
    x = (params["word_emb"][chunk_ids]
         + params["pos_emb"][None, :, :]
         + params["type_emb"][None, :, :])
    x = _layer_norm(x, params["emb_ln_g"], params["emb_ln_b"])
    x = x.reshape(-1, HIDDEN).astype(jnp.float32)          # (P, H)
    return run_fused(x, neg, sel, params)


# ---------------------------------------------------------------------------
# Host-side glue: chunking (mirrors the PyTorch while-loop + tokenizer.pad)
# ---------------------------------------------------------------------------
def chunk_document(token_ids):
    """token_ids: list[int] without special tokens -> (ids, mask) lists of
    shape (num_chunks, MAX_LENGTH) each, matching the module's chunking."""
    body_max = MAX_LENGTH - 2
    chunks_ids, chunks_mask = [], []
    start, n = 0, len(token_ids)
    while start < n:
        end = start + body_max
        body = token_ids[start:end]
        chunk = [CLS_ID] + body + [SEP_ID]                 # build_inputs_with_special_tokens
        cmask = [1] * len(chunk)
        pad = MAX_LENGTH - len(chunk)                      # tokenizer.pad(max_length)
        chunks_ids.append(chunk + [PAD_ID] * pad)
        chunks_mask.append(cmask + [0] * pad)
        if end >= n:
            break
        start = end - OVERLAP
    if not chunks_ids:                                     # guard empty docs (avoid /0)
        chunks_ids.append([CLS_ID, SEP_ID] + [PAD_ID] * (MAX_LENGTH - 2))
        chunks_mask.append([1, 1] + [0] * (MAX_LENGTH - 2))
    return chunks_ids, chunks_mask


# ---------------------------------------------------------------------------
# Parameters (deterministic synthetic init, packed for the fused kernel)
# ---------------------------------------------------------------------------
def init_params(key):
    def dense(k, shape, scale=0.02):
        return (scale * jax.random.normal(k, shape)).astype(jnp.float32)

    keys = iter(jax.random.split(key, 8 + 8 * NUM_LAYERS))
    p = {
        "word_emb": dense(next(keys), (VOCAB, HIDDEN)),
        "pos_emb": dense(next(keys), (MAX_LENGTH, HIDDEN)),
        "type_emb": dense(next(keys), (1, HIDDEN)),
        "emb_ln_g": jnp.ones((HIDDEN,), jnp.float32),
        "emb_ln_b": jnp.zeros((HIDDEN,), jnp.float32),
    }
    cls_w = dense(next(keys), (HIDDEN, NUM_LABELS))
    p["cls_w_pad"] = jnp.zeros((HIDDEN, LANE), jnp.float32).at[:, :NUM_LABELS].set(cls_w)
    p["cls_b_pad"] = jnp.zeros((1, LANE), jnp.float32)

    wqkv_l, wo_l, w1_l, w2_l, vec_l = [], [], [], [], []
    for _ in range(NUM_LAYERS):
        wq = dense(next(keys), (HIDDEN, HIDDEN))
        wk = dense(next(keys), (HIDDEN, HIDDEN))
        wv = dense(next(keys), (HIDDEN, HIDDEN))
        wo = dense(next(keys), (HIDDEN, HIDDEN))
        w1 = dense(next(keys), (HIDDEN, FFN))
        w2 = dense(next(keys), (FFN, HIDDEN))

        wqkv = jnp.zeros((HIDDEN, LANE), jnp.float32)
        wqkv = (wqkv.at[:, 0:HIDDEN].set(wq)
                     .at[:, HIDDEN:2 * HIDDEN].set(wk)
                     .at[:, 2 * HIDDEN:3 * HIDDEN].set(wv))
        wqkv_l.append(wqkv.astype(jnp.bfloat16))
        wo_l.append(wo.reshape(NUM_HEADS, HEAD_DIM, HIDDEN).astype(jnp.bfloat16))
        w1_l.append(w1.astype(jnp.bfloat16))
        w2_l.append(w2.astype(jnp.bfloat16))

        vec = jnp.zeros((8, LANE), jnp.float32)            # biases are zero here
        vec = vec.at[VEC_LN1G, :HIDDEN].set(1.0).at[VEC_LN2G, :HIDDEN].set(1.0)
        vec_l.append(vec)

    p["wqkv"] = jnp.stack(wqkv_l)      # (L, H, 128)    bf16
    p["wo"] = jnp.stack(wo_l)          # (L, NH, HD, H) bf16
    p["w1"] = jnp.stack(w1_l)          # (L, H, FFN)    bf16
    p["w2"] = jnp.stack(w2_l)          # (L, FFN, H)    bf16
    p["vec"] = jnp.stack(vec_l)        # (L, 8, 128)    f32
    return p


# ---------------------------------------------------------------------------
# Full forward (mirrors DocumentBertClassifier.forward)
# ---------------------------------------------------------------------------
def forward(params, input_ids, attention_mask, labels=None):
    # --- chunking (host glue).  Like the original module, the per-doc
    #     attention mask is not used for BERT (tokenizer.pad regenerates it).
    B = len(input_ids)
    all_ids, all_mask, doc_of_chunk = [], [], []
    for d, ids in enumerate(input_ids):
        ids_host = [int(t) for t in np.asarray(jax.device_get(ids)).tolist()]
        ci, cm = chunk_document(ids_host)
        all_ids += ci
        all_mask += cm
        doc_of_chunk += [d] * len(ci)

    # pad chunk count to a bucket -> static kernel shapes reused across calls
    c_real = len(all_ids)
    C = ((c_real + CHUNK_BUCKET - 1) // CHUNK_BUCKET) * CHUNK_BUCKET
    for _ in range(C - c_real):
        all_ids.append([PAD_ID] * MAX_LENGTH)
        all_mask.append([0] * MAX_LENGTH)

    S = MAX_LENGTH
    P = C * S
    chunk_ids = np.asarray(all_ids, np.int32)              # (C, S)
    chunk_mask = np.asarray(all_mask, np.float32)          # (C, S)

    # block-diagonal additive attention mask, precomputed once on the host
    chunk_of_row = np.repeat(np.arange(C), S)              # (P,)
    valid = chunk_mask.reshape(P)
    allow = (chunk_of_row[:, None] == chunk_of_row[None, :]) & (valid[None, :] > 0)
    neg = np.where(allow, 0.0, -1e9).astype(np.float32)    # (P, P)

    # per-doc mean-of-chunk-CLS selection matrix (CLS of chunk c is row c*S)
    counts = np.zeros((B,), np.float64)
    for d in doc_of_chunk:
        counts[d] += 1
    sel = np.zeros((B, P), np.float32)
    for c, d in enumerate(doc_of_chunk):
        sel[d, c * S] = 1.0 / max(counts[d], 1.0)

    logits = _embed_and_encode(params, jnp.asarray(chunk_ids),
                               jnp.asarray(neg), jnp.asarray(sel))

    loss = None
    if labels is not None:
        logp = jax.nn.log_softmax(logits, axis=-1)
        loss = -jnp.mean(jnp.take_along_axis(logp, labels[:, None], axis=1))
    return {"loss": loss, "logits": logits}


# ---------------------------------------------------------------------------
if __name__ == "__main__":
    params = init_params(jax.random.PRNGKey(0))

    k1, k2 = jax.random.split(jax.random.PRNGKey(0), 2)
    # two documents of raw token ids (no special tokens), variable lengths
    doc0 = jax.random.randint(k1, (10,), 3, VOCAB, dtype=jnp.int32)
    doc1 = jax.random.randint(k2, (5,), 3, VOCAB, dtype=jnp.int32)
    input_ids = [doc0, doc1]
    attention_mask = [jnp.ones((10,), jnp.int32), jnp.ones((5,), jnp.int32)]
    labels = jnp.array([0, 1], dtype=jnp.int32)

    out = forward(params, input_ids, attention_mask, labels)
    logits = jax.block_until_ready(out["logits"])
    loss = jax.block_until_ready(out["loss"])
    assert logits.shape == (2, NUM_LABELS)
    assert bool(jnp.all(jnp.isfinite(logits))) and bool(jnp.isfinite(loss))
    print("KERNEL_OK")
</pallas_src>

<mosaic_0001>
module attributes {stable_mosaic.version = 11 : i64} {
  func.func @fused_doc_bert_kernel(%arg0: memref<32x32xf32, #tpu.memory_space<vmem>>, %arg1: memref<32x32xf32, #tpu.memory_space<vmem>>, %arg2: memref<2x32xf32, #tpu.memory_space<vmem>>, %arg3: memref<2x32x128xbf16, #tpu.memory_space<vmem>>, %arg4: memref<2x4x8x32xbf16, #tpu.memory_space<vmem>>, %arg5: memref<2x32x64xbf16, #tpu.memory_space<vmem>>, %arg6: memref<2x64x32xbf16, #tpu.memory_space<vmem>>, %arg7: memref<2x8x128xf32, #tpu.memory_space<vmem>>, %arg8: memref<32x128xf32, #tpu.memory_space<vmem>>, %arg9: memref<1x128xf32, #tpu.memory_space<vmem>>, %arg10: memref<2x128xf32, #tpu.memory_space<vmem>>) attributes {dimension_semantics = [], scalar_prefetch = 0 : i64, scratch_operands = 0 : i64, tpu.core_type = #tpu.core_type<tc>} {
    %c0 = arith.constant 0 : index
    %c0_0 = arith.constant 0 : index
    %0 = vector.load %arg0[%c0, %c0_0] : memref<32x32xf32, #tpu.memory_space<vmem>>, vector<32x32xf32>
    %c0_1 = arith.constant 0 : index
    %c0_2 = arith.constant 0 : index
    %1 = vector.load %arg1[%c0_1, %c0_2] : memref<32x32xf32, #tpu.memory_space<vmem>>, vector<32x32xf32>
    %c0_3 = arith.constant 0 : index
    %c0_4 = arith.constant 0 : index
    %c0_5 = arith.constant 0 : index
    %2 = vector.load %arg7[%c0_3, %c0_4, %c0_5] : memref<2x8x128xf32, #tpu.memory_space<vmem>>, vector<1x8x128xf32>
    %3 = vector.shape_cast %2 : vector<1x8x128xf32> to vector<8x128xf32>
    %4 = arith.truncf %0 : vector<32x32xf32> to vector<32x32xbf16>
    %c0_6 = arith.constant 0 : index
    %c0_7 = arith.constant 0 : index
    %c0_8 = arith.constant 0 : index
    %5 = vector.load %arg3[%c0_6, %c0_7, %c0_8] : memref<2x32x128xbf16, #tpu.memory_space<vmem>>, vector<1x32x128xbf16>
    %6 = vector.shape_cast %5 : vector<1x32x128xbf16> to vector<32x128xbf16>
    %cst = arith.constant dense<0.000000e+00> : vector<32x128xf32>
    %7 = tpu.matmul %4, %6, %cst {dimension_numbers = #tpu.dot_dimension_numbers<[1], [0], [0], [1], [0, 0, 1, 1], [], []>} : vector<32x32xbf16>, vector<32x128xbf16>, vector<32x128xf32> -> vector<32x128xf32>
    %8 = vector.extract_strided_slice %3 {offsets = [0, 0], sizes = [1, 128], strides = [1, 1]} : vector<8x128xf32> to vector<1x128xf32>
    %9 = vector.broadcast %8 : vector<1x128xf32> to vector<32x128xf32>
    %10 = arith.addf %7, %9 : vector<32x128xf32>
    %cst_9 = arith.constant 0.000000e+00 : f32
    %11 = vector.broadcast %cst_9 : f32 to vector<32x32xf32>
    %12 = vector.extract_strided_slice %10 {offsets = [0, 0], sizes = [32, 8], strides = [1, 1]} : vector<32x128xf32> to vector<32x8xf32>
    %13 = arith.truncf %12 : vector<32x8xf32> to vector<32x8xbf16>
    %14 = vector.extract_strided_slice %10 {offsets = [0, 32], sizes = [32, 8], strides = [1, 1]} : vector<32x128xf32> to vector<32x8xf32>
    %15 = arith.truncf %14 : vector<32x8xf32> to vector<32x8xbf16>
    %16 = vector.extract_strided_slice %10 {offsets = [0, 64], sizes = [32, 8], strides = [1, 1]} : vector<32x128xf32> to vector<32x8xf32>
    %17 = arith.truncf %16 : vector<32x8xf32> to vector<32x8xbf16>
    "tpu.trace_start"() <{level = 10 : i32, message = "qd,kd->qk"}> : () -> ()
    %cst_10 = arith.constant dense<0.000000e+00> : vector<32x32xf32>
    %18 = tpu.matmul %13, %15, %cst_10 {dimension_numbers = #tpu.dot_dimension_numbers<[1], [1], [0], [0], [0, 0, 1, 0], [], []>} : vector<32x8xbf16>, vector<32x8xbf16>, vector<32x32xf32> -> vector<32x32xf32>
    "tpu.trace_stop"() : () -> ()
    %cst_11 = arith.constant 0.353553385 : f32
    %19 = vector.broadcast %cst_11 : f32 to vector<32x32xf32>
    %20 = arith.mulf %18, %19 : vector<32x32xf32>
    %21 = arith.addf %20, %1 : vector<32x32xf32>
    %cst_12 = arith.constant dense<0xFF800000> : vector<32xf32>
    %22 = vector.multi_reduction <maximumf>, %21, %cst_12 [1] : vector<32x32xf32> to vector<32xf32>
    %23 = vector.shape_cast %22 : vector<32xf32> to vector<32x1xf32>
    %24 = vector.broadcast %23 : vector<32x1xf32> to vector<32x32xf32>
    %25 = arith.subf %21, %24 : vector<32x32xf32>
    %26 = math.exp %25 : vector<32x32xf32>
    %cst_13 = arith.constant dense<0.000000e+00> : vector<32xf32>
    %27 = vector.multi_reduction <add>, %26, %cst_13 [1] : vector<32x32xf32> to vector<32xf32>
    %28 = vector.shape_cast %27 : vector<32xf32> to vector<32x1xf32>
    %29 = tpu.reciprocal %28 {approx = true} : vector<32x1xf32> -> vector<32x1xf32>
    %30 = vector.broadcast %29 : vector<32x1xf32> to vector<32x32xf32>
    %31 = arith.mulf %26, %30 : vector<32x32xf32>
    %32 = arith.truncf %31 : vector<32x32xf32> to vector<32x32xbf16>
    %cst_14 = arith.constant dense<0.000000e+00> : vector<32x8xf32>
    %33 = tpu.matmul %32, %17, %cst_14 {dimension_numbers = #tpu.dot_dimension_numbers<[1], [0], [0], [1], [0, 0, 1, 1], [], []>} : vector<32x32xbf16>, vector<32x8xbf16>, vector<32x8xf32> -> vector<32x8xf32>
    %34 = arith.truncf %33 : vector<32x8xf32> to vector<32x8xbf16>
    %c0_15 = arith.constant 0 : index
    %c0_16 = arith.constant 0 : index
    %c0_17 = arith.constant 0 : index
    %c0_18 = arith.constant 0 : index
    %35 = vector.load %arg4[%c0_15, %c0_16, %c0_17, %c0_18] : memref<2x4x8x32xbf16, #tpu.memory_space<vmem>>, vector<1x1x8x32xbf16>
    %36 = vector.shape_cast %35 : vector<1x1x8x32xbf16> to vector<8x32xbf16>
    %cst_19 = arith.constant dense<0.000000e+00> : vector<32x32xf32>
    %37 = tpu.matmul %34, %36, %cst_19 {dimension_numbers = #tpu.dot_dimension_numbers<[1], [0], [0], [1], [0, 0, 1, 1], [], []>} : vector<32x8xbf16>, vector<8x32xbf16>, vector<32x32xf32> -> vector<32x32xf32>
    %38 = arith.addf %11, %37 : vector<32x32xf32>
    %39 = vector.extract_strided_slice %10 {offsets = [0, 8], sizes = [32, 8], strides = [1, 1]} : vector<32x128xf32> to vector<32x8xf32>
    %40 = arith.truncf %39 : vector<32x8xf32> to vector<32x8xbf16>
    %41 = vector.extract_strided_slice %10 {offsets = [0, 40], sizes = [32, 8], strides = [1, 1]} : vector<32x128xf32> to vector<32x8xf32>
    %42 = arith.truncf %41 : vector<32x8xf32> to vector<32x8xbf16>
    %43 = vector.extract_strided_slice %10 {offsets = [0, 72], sizes = [32, 8], strides = [1, 1]} : vector<32x128xf32> to vector<32x8xf32>
    %44 = arith.truncf %43 : vector<32x8xf32> to vector<32x8xbf16>
    "tpu.trace_start"() <{level = 10 : i32, message = "qd,kd->qk"}> : () -> ()
    %cst_20 = arith.constant dense<0.000000e+00> : vector<32x32xf32>
    %45 = tpu.matmul %40, %42, %cst_20 {dimension_numbers = #tpu.dot_dimension_numbers<[1], [1], [0], [0], [0, 0, 1, 0], [], []>} : vector<32x8xbf16>, vector<32x8xbf16>, vector<32x32xf32> -> vector<32x32xf32>
    "tpu.trace_stop"() : () -> ()
    %cst_21 = arith.constant 0.353553385 : f32
    %46 = vector.broadcast %cst_21 : f32 to vector<32x32xf32>
    %47 = arith.mulf %45, %46 : vector<32x32xf32>
    %48 = arith.addf %47, %1 : vector<32x32xf32>
    %cst_22 = arith.constant dense<0xFF800000> : vector<32xf32>
    %49 = vector.multi_reduction <maximumf>, %48, %cst_22 [1] : vector<32x32xf32> to vector<32xf32>
    %50 = vector.shape_cast %49 : vector<32xf32> to vector<32x1xf32>
    %51 = vector.broadcast %50 : vector<32x1xf32> to vector<32x32xf32>
    %52 = arith.subf %48, %51 : vector<32x32xf32>
    %53 = math.exp %52 : vector<32x32xf32>
    %cst_23 = arith.constant dense<0.000000e+00> : vector<32xf32>
    %54 = vector.multi_reduction <add>, %53, %cst_23 [1] : vector<32x32xf32> to vector<32xf32>
    %55 = vector.shape_cast %54 : vector<32xf32> to vector<32x1xf32>
    %56 = tpu.reciprocal %55 {approx = true} : vector<32x1xf32> -> vector<32x1xf32>
    %57 = vector.broadcast %56 : vector<32x1xf32> to vector<32x32xf32>
    %58 = arith.mulf %53, %57 : vector<32x32xf32>
    %59 = arith.truncf %58 : vector<32x32xf32> to vector<32x32xbf16>
    %cst_24 = arith.constant dense<0.000000e+00> : vector<32x8xf32>
    %60 = tpu.matmul %59, %44, %cst_24 {dimension_numbers = #tpu.dot_dimension_numbers<[1], [0], [0], [1], [0, 0, 1, 1], [], []>} : vector<32x32xbf16>, vector<32x8xbf16>, vector<32x8xf32> -> vector<32x8xf32>
    %61 = arith.truncf %60 : vector<32x8xf32> to vector<32x8xbf16>
    %c0_25 = arith.constant 0 : index
    %c1 = arith.constant 1 : index
    %c0_26 = arith.constant 0 : index
    %c0_27 = arith.constant 0 : index
    %62 = vector.load %arg4[%c0_25, %c1, %c0_26, %c0_27] : memref<2x4x8x32xbf16, #tpu.memory_space<vmem>>, vector<1x1x8x32xbf16>
    %63 = vector.shape_cast %62 : vector<1x1x8x32xbf16> to vector<8x32xbf16>
    %cst_28 = arith.constant dense<0.000000e+00> : vector<32x32xf32>
    %64 = tpu.matmul %61, %63, %cst_28 {dimension_numbers = #tpu.dot_dimension_numbers<[1], [0], [0], [1], [0, 0, 1, 1], [], []>} : vector<32x8xbf16>, vector<8x32xbf16>, vector<32x32xf32> -> vector<32x32xf32>
    %65 = arith.addf %38, %64 : vector<32x32xf32>
    %66 = vector.extract_strided_slice %10 {offsets = [0, 16], sizes = [32, 8], strides = [1, 1]} : vector<32x128xf32> to vector<32x8xf32>
    %67 = arith.truncf %66 : vector<32x8xf32> to vector<32x8xbf16>
    %68 = vector.extract_strided_slice %10 {offsets = [0, 48], sizes = [32, 8], strides = [1, 1]} : vector<32x128xf32> to vector<32x8xf32>
    %69 = arith.truncf %68 : vector<32x8xf32> to vector<32x8xbf16>
    %70 = vector.extract_strided_slice %10 {offsets = [0, 80], sizes = [32, 8], strides = [1, 1]} : vector<32x128xf32> to vector<32x8xf32>
    %71 = arith.truncf %70 : vector<32x8xf32> to vector<32x8xbf16>
    "tpu.trace_start"() <{level = 10 : i32, message = "qd,kd->qk"}> : () -> ()
    %cst_29 = arith.constant dense<0.000000e+00> : vector<32x32xf32>
    %72 = tpu.matmul %67, %69, %cst_29 {dimension_numbers = #tpu.dot_dimension_numbers<[1], [1], [0], [0], [0, 0, 1, 0], [], []>} : vector<32x8xbf16>, vector<32x8xbf16>, vector<32x32xf32> -> vector<32x32xf32>
    "tpu.trace_stop"() : () -> ()
    %cst_30 = arith.constant 0.353553385 : f32
    %73 = vector.broadcast %cst_30 : f32 to vector<32x32xf32>
    %74 = arith.mulf %72, %73 : vector<32x32xf32>
    %75 = arith.addf %74, %1 : vector<32x32xf32>
    %cst_31 = arith.constant dense<0xFF800000> : vector<32xf32>
    %76 = vector.multi_reduction <maximumf>, %75, %cst_31 [1] : vector<32x32xf32> to vector<32xf32>
    %77 = vector.shape_cast %76 : vector<32xf32> to vector<32x1xf32>
    %78 = vector.broadcast %77 : vector<32x1xf32> to vector<32x32xf32>
    %79 = arith.subf %75, %78 : vector<32x32xf32>
    %80 = math.exp %79 : vector<32x32xf32>
    %cst_32 = arith.constant dense<0.000000e+00> : vector<32xf32>
    %81 = vector.multi_reduction <add>, %80, %cst_32 [1] : vector<32x32xf32> to vector<32xf32>
    %82 = vector.shape_cast %81 : vector<32xf32> to vector<32x1xf32>
    %83 = tpu.reciprocal %82 {approx = true} : vector<32x1xf32> -> vector<32x1xf32>
    %84 = vector.broadcast %83 : vector<32x1xf32> to vector<32x32xf32>
    %85 = arith.mulf %80, %84 : vector<32x32xf32>
    %86 = arith.truncf %85 : vector<32x32xf32> to vector<32x32xbf16>
    %cst_33 = arith.constant dense<0.000000e+00> : vector<32x8xf32>
    %87 = tpu.matmul %86, %71, %cst_33 {dimension_numbers = #tpu.dot_dimension_numbers<[1], [0], [0], [1], [0, 0, 1, 1], [], []>} : vector<32x32xbf16>, vector<32x8xbf16>, vector<32x8xf32> -> vector<32x8xf32>
    %88 = arith.truncf %87 : vector<32x8xf32> to vector<32x8xbf16>
    %c0_34 = arith.constant 0 : index
    %c2 = arith.constant 2 : index
    %c0_35 = arith.constant 0 : index
    %c0_36 = arith.constant 0 : index
    %89 = vector.load %arg4[%c0_34, %c2, %c0_35, %c0_36] : memref<2x4x8x32xbf16, #tpu.memory_space<vmem>>, vector<1x1x8x32xbf16>
    %90 = vector.shape_cast %89 : vector<1x1x8x32xbf16> to vector<8x32xbf16>
    %cst_37 = arith.constant dense<0.000000e+00> : vector<32x32xf32>
    %91 = tpu.matmul %88, %90, %cst_37 {dimension_numbers = #tpu.dot_dimension_numbers<[1], [0], [0], [1], [0, 0, 1, 1], [], []>} : vector<32x8xbf16>, vector<8x32xbf16>, vector<32x32xf32> -> vector<32x32xf32>
    %92 = arith.addf %65, %91 : vector<32x32xf32>
    %93 = vector.extract_strided_slice %10 {offsets = [0, 24], sizes = [32, 8], strides = [1, 1]} : vector<32x128xf32> to vector<32x8xf32>
    %94 = arith.truncf %93 : vector<32x8xf32> to vector<32x8xbf16>
    %95 = vector.extract_strided_slice %10 {offsets = [0, 56], sizes = [32, 8], strides = [1, 1]} : vector<32x128xf32> to vector<32x8xf32>
    %96 = arith.truncf %95 : vector<32x8xf32> to vector<32x8xbf16>
    %97 = vector.extract_strided_slice %10 {offsets = [0, 88], sizes = [32, 8], strides = [1, 1]} : vector<32x128xf32> to vector<32x8xf32>
    %98 = arith.truncf %97 : vector<32x8xf32> to vector<32x8xbf16>
    "tpu.trace_start"() <{level = 10 : i32, message = "qd,kd->qk"}> : () -> ()
    %cst_38 = arith.constant dense<0.000000e+00> : vector<32x32xf32>
    %99 = tpu.matmul %94, %96, %cst_38 {dimension_numbers = #tpu.dot_dimension_numbers<[1], [1], [0], [0], [0, 0, 1, 0], [], []>} : vector<32x8xbf16>, vector<32x8xbf16>, vector<32x32xf32> -> vector<32x32xf32>
    "tpu.trace_stop"() : () -> ()
    %cst_39 = arith.constant 0.353553385 : f32
    %100 = vector.broadcast %cst_39 : f32 to vector<32x32xf32>
    %101 = arith.mulf %99, %100 : vector<32x32xf32>
    %102 = arith.addf %101, %1 : vector<32x32xf32>
    %cst_40 = arith.constant dense<0xFF800000> : vector<32xf32>
    %103 = vector.multi_reduction <maximumf>, %102, %cst_40 [1] : vector<32x32xf32> to vector<32xf32>
    %104 = vector.shape_cast %103 : vector<32xf32> to vector<32x1xf32>
    %105 = vector.broadcast %104 : vector<32x1xf32> to vector<32x32xf32>
    %106 = arith.subf %102, %105 : vector<32x32xf32>
    %107 = math.exp %106 : vector<32x32xf32>
    %cst_41 = arith.constant dense<0.000000e+00> : vector<32xf32>
    %108 = vector.multi_reduction <add>, %107, %cst_41 [1] : vector<32x32xf32> to vector<32xf32>
    %109 = vector.shape_cast %108 : vector<32xf32> to vector<32x1xf32>
    %110 = tpu.reciprocal %109 {approx = true} : vector<32x1xf32> -> vector<32x1xf32>
    %111 = vector.broadcast %110 : vector<32x1xf32> to vector<32x32xf32>
    %112 = arith.mulf %107, %111 : vector<32x32xf32>
    %113 = arith.truncf %112 : vector<32x32xf32> to vector<32x32xbf16>
    %cst_42 = arith.constant dense<0.000000e+00> : vector<32x8xf32>
    %114 = tpu.matmul %113, %98, %cst_42 {dimension_numbers = #tpu.dot_dimension_numbers<[1], [0], [0], [1], [0, 0, 1, 1], [], []>} : vector<32x32xbf16>, vector<32x8xbf16>, vector<32x8xf32> -> vector<32x8xf32>
    %115 = arith.truncf %114 : vector<32x8xf32> to vector<32x8xbf16>
    %c0_43 = arith.constant 0 : index
    %c3 = arith.constant 3 : index
    %c0_44 = arith.constant 0 : index
    %c0_45 = arith.constant 0 : index
    %116 = vector.load %arg4[%c0_43, %c3, %c0_44, %c0_45] : memref<2x4x8x32xbf16, #tpu.memory_space<vmem>>, vector<1x1x8x32xbf16>
    %117 = vector.shape_cast %116 : vector<1x1x8x32xbf16> to vector<8x32xbf16>
    %cst_46 = arith.constant dense<0.000000e+00> : vector<32x32xf32>
    %118 = tpu.matmul %115, %117, %cst_46 {dimension_numbers = #tpu.dot_dimension_numbers<[1], [0], [0], [1], [0, 0, 1, 1], [], []>} : vector<32x8xbf16>, vector<8x32xbf16>, vector<32x32xf32> -> vector<32x32xf32>
    %119 = arith.addf %92, %118 : vector<32x32xf32>
    %120 = vector.extract_strided_slice %3 {offsets = [1, 0], sizes = [1, 32], strides = [1, 1]} : vector<8x128xf32> to vector<1x32xf32>
    %121 = vector.broadcast %120 : vector<1x32xf32> to vector<32x32xf32>
    %122 = arith.addf %119, %121 : vector<32x32xf32>
    %123 = arith.addf %0, %122 : vector<32x32xf32>
    %124 = vector.extract_strided_slice %3 {offsets = [2, 0], sizes = [1, 32], strides = [1, 1]} : vector<8x128xf32> to vector<1x32xf32>
    %125 = vector.extract_strided_slice %3 {offsets = [3, 0], sizes = [1, 32], strides = [1, 1]} : vector<8x128xf32> to vector<1x32xf32>
    %cst_47 = arith.constant dense<0.000000e+00> : vector<32xf32>
    %126 = vector.multi_reduction <add>, %123, %cst_47 [1] : vector<32x32xf32> to vector<32xf32>
    %127 = vector.shape_cast %126 : vector<32xf32> to vector<32x1xf32>
    %cst_48 = arith.constant 3.200000e+01 : f32
    %128 = vector.broadcast %cst_48 : f32 to vector<32x1xf32>
    %129 = arith.divf %127, %128 : vector<32x1xf32>
    %130 = vector.broadcast %129 : vector<32x1xf32> to vector<32x32xf32>
    %131 = arith.subf %123, %130 : vector<32x32xf32>
    %132 = arith.mulf %131, %131 : vector<32x32xf32>
    %cst_49 = arith.constant dense<0.000000e+00> : vector<32xf32>
    %133 = vector.multi_reduction <add>, %132, %cst_49 [1] : vector<32x32xf32> to vector<32xf32>
    %134 = vector.shape_cast %133 : vector<32xf32> to vector<32x1xf32>
    %cst_50 = arith.constant 3.200000e+01 : f32
    %135 = vector.broadcast %cst_50 : f32 to vector<32x1xf32>
    %136 = arith.divf %134, %135 : vector<32x1xf32>
    %137 = vector.broadcast %129 : vector<32x1xf32> to vector<32x32xf32>
    %138 = arith.subf %123, %137 : vector<32x32xf32>
    %cst_51 = arith.constant 9.99999996E-13 : f32
    %139 = vector.broadcast %cst_51 : f32 to vector<32x1xf32>
    %140 = arith.addf %136, %139 : vector<32x1xf32>
    %141 = math.rsqrt %140 : vector<32x1xf32>
    %142 = vector.broadcast %141 : vector<32x1xf32> to vector<32x32xf32>
    %143 = arith.mulf %138, %142 : vector<32x32xf32>
    %144 = vector.broadcast %124 : vector<1x32xf32> to vector<32x32xf32>
    %145 = arith.mulf %143, %144 : vector<32x32xf32>
    %146 = vector.broadcast %125 : vector<1x32xf32> to vector<32x32xf32>
    %147 = arith.addf %145, %146 : vector<32x32xf32>
    %148 = arith.truncf %147 : vector<32x32xf32> to vector<32x32xbf16>
    %c0_52 = arith.constant 0 : index
    %c0_53 = arith.constant 0 : index
    %c0_54 = arith.constant 0 : index
    %149 = vector.load %arg5[%c0_52, %c0_53, %c0_54] : memref<2x32x64xbf16, #tpu.memory_space<vmem>>, vector<1x32x64xbf16>
    %150 = vector.shape_cast %149 : vector<1x32x64xbf16> to vector<32x64xbf16>
    %cst_55 = arith.constant dense<0.000000e+00> : vector<32x64xf32>
    %151 = tpu.matmul %148, %150, %cst_55 {dimension_numbers = #tpu.dot_dimension_numbers<[1], [0], [0], [1], [0, 0, 1, 1], [], []>} : vector<32x32xbf16>, vector<32x64xbf16>, vector<32x64xf32> -> vector<32x64xf32>
    %152 = vector.extract_strided_slice %3 {offsets = [4, 0], sizes = [1, 64], strides = [1, 1]} : vector<8x128xf32> to vector<1x64xf32>
    %153 = vector.broadcast %152 : vector<1x64xf32> to vector<32x64xf32>
    %154 = arith.addf %151, %153 : vector<32x64xf32>
    %155 = arith.mulf %154, %154 : vector<32x64xf32>
    %156 = arith.mulf %154, %155 : vector<32x64xf32>
    %cst_56 = arith.constant 4.471500e-02 : f32
    %157 = vector.broadcast %cst_56 : f32 to vector<32x64xf32>
    %158 = arith.mulf %157, %156 : vector<32x64xf32>
    %159 = arith.addf %154, %158 : vector<32x64xf32>
    %cst_57 = arith.constant 0.797884583 : f32
    %160 = vector.broadcast %cst_57 : f32 to vector<32x64xf32>
    %161 = arith.mulf %160, %159 : vector<32x64xf32>
    %162 = math.tanh %161 : vector<32x64xf32>
    %cst_58 = arith.constant 1.000000e+00 : f32
    %163 = vector.broadcast %cst_58 : f32 to vector<32x64xf32>
    %164 = arith.addf %163, %162 : vector<32x64xf32>
    %cst_59 = arith.constant 5.000000e-01 : f32
    %165 = vector.broadcast %cst_59 : f32 to vector<32x64xf32>
    %166 = arith.mulf %165, %164 : vector<32x64xf32>
    %167 = arith.mulf %154, %166 : vector<32x64xf32>
    %168 = arith.truncf %167 : vector<32x64xf32> to vector<32x64xbf16>
    %c0_60 = arith.constant 0 : index
    %c0_61 = arith.constant 0 : index
    %c0_62 = arith.constant 0 : index
    %169 = vector.load %arg6[%c0_60, %c0_61, %c0_62] : memref<2x64x32xbf16, #tpu.memory_space<vmem>>, vector<1x64x32xbf16>
    %170 = vector.shape_cast %169 : vector<1x64x32xbf16> to vector<64x32xbf16>
    %cst_63 = arith.constant dense<0.000000e+00> : vector<32x32xf32>
    %171 = tpu.matmul %168, %170, %cst_63 {dimension_numbers = #tpu.dot_dimension_numbers<[1], [0], [0], [1], [0, 0, 1, 1], [], []>} : vector<32x64xbf16>, vector<64x32xbf16>, vector<32x32xf32> -> vector<32x32xf32>
    %172 = vector.extract_strided_slice %3 {offsets = [5, 0], sizes = [1, 32], strides = [1, 1]} : vector<8x128xf32> to vector<1x32xf32>
    %173 = vector.broadcast %172 : vector<1x32xf32> to vector<32x32xf32>
    %174 = arith.addf %171, %173 : vector<32x32xf32>
    %175 = arith.addf %147, %174 : vector<32x32xf32>
    %176 = vector.extract_strided_slice %3 {offsets = [6, 0], sizes = [1, 32], strides = [1, 1]} : vector<8x128xf32> to vector<1x32xf32>
    %177 = vector.extract_strided_slice %3 {offsets = [7, 0], sizes = [1, 32], strides = [1, 1]} : vector<8x128xf32> to vector<1x32xf32>
    %cst_64 = arith.constant dense<0.000000e+00> : vector<32xf32>
    %178 = vector.multi_reduction <add>, %175, %cst_64 [1] : vector<32x32xf32> to vector<32xf32>
    %179 = vector.shape_cast %178 : vector<32xf32> to vector<32x1xf32>
    %cst_65 = arith.constant 3.200000e+01 : f32
    %180 = vector.broadcast %cst_65 : f32 to vector<32x1xf32>
    %181 = arith.divf %179, %180 : vector<32x1xf32>
    %182 = vector.broadcast %181 : vector<32x1xf32> to vector<32x32xf32>
    %183 = arith.subf %175, %182 : vector<32x32xf32>
    %184 = arith.mulf %183, %183 : vector<32x32xf32>
    %cst_66 = arith.constant dense<0.000000e+00> : vector<32xf32>
    %185 = vector.multi_reduction <add>, %184, %cst_66 [1] : vector<32x32xf32> to vector<32xf32>
    %186 = vector.shape_cast %185 : vector<32xf32> to vector<32x1xf32>
    %cst_67 = arith.constant 3.200000e+01 : f32
    %187 = vector.broadcast %cst_67 : f32 to vector<32x1xf32>
    %188 = arith.divf %186, %187 : vector<32x1xf32>
    %189 = vector.broadcast %181 : vector<32x1xf32> to vector<32x32xf32>
    %190 = arith.subf %175, %189 : vector<32x32xf32>
    %cst_68 = arith.constant 9.99999996E-13 : f32
    %191 = vector.broadcast %cst_68 : f32 to vector<32x1xf32>
    %192 = arith.addf %188, %191 : vector<32x1xf32>
    %193 = math.rsqrt %192 : vector<32x1xf32>
    %194 = vector.broadcast %193 : vector<32x1xf32> to vector<32x32xf32>
    %195 = arith.mulf %190, %194 : vector<32x32xf32>
    %196 = vector.broadcast %176 : vector<1x32xf32> to vector<32x32xf32>
    %197 = arith.mulf %195, %196 : vector<32x32xf32>
    %198 = vector.broadcast %177 : vector<1x32xf32> to vector<32x32xf32>
    %199 = arith.addf %197, %198 : vector<32x32xf32>
    %c1_69 = arith.constant 1 : index
    %c0_70 = arith.constant 0 : index
    %c0_71 = arith.constant 0 : index
    %200 = vector.load %arg7[%c1_69, %c0_70, %c0_71] : memref<2x8x128xf32, #tpu.memory_space<vmem>>, vector<1x8x128xf32>
    %201 = vector.shape_cast %200 : vector<1x8x128xf32> to vector<8x128xf32>
    %202 = arith.truncf %199 : vector<32x32xf32> to vector<32x32xbf16>
    %c1_72 = arith.constant 1 : index
    %c0_73 = arith.constant 0 : index
    %c0_74 = arith.constant 0 : index
    %203 = vector.load %arg3[%c1_72, %c0_73, %c0_74] : memref<2x32x128xbf16, #tpu.memory_space<vmem>>, vector<1x32x128xbf16>
    %204 = vector.shape_cast %203 : vector<1x32x128xbf16> to vector<32x128xbf16>
    %cst_75 = arith.constant dense<0.000000e+00> : vector<32x128xf32>
    %205 = tpu.matmul %202, %204, %cst_75 {dimension_numbers = #tpu.dot_dimension_numbers<[1], [0], [0], [1], [0, 0, 1, 1], [], []>} : vector<32x32xbf16>, vector<32x128xbf16>, vector<32x128xf32> -> vector<32x128xf32>
    %206 = vector.extract_strided_slice %201 {offsets = [0, 0], sizes = [1, 128], strides = [1, 1]} : vector<8x128xf32> to vector<1x128xf32>
    %207 = vector.broadcast %206 : vector<1x128xf32> to vector<32x128xf32>
    %208 = arith.addf %205, %207 : vector<32x128xf32>
    %cst_76 = arith.constant 0.000000e+00 : f32
    %209 = vector.broadcast %cst_76 : f32 to vector<32x32xf32>
    %210 = vector.extract_strided_slice %208 {offsets = [0, 0], sizes = [32, 8], strides = [1, 1]} : vector<32x128xf32> to vector<32x8xf32>
    %211 = arith.truncf %210 : vector<32x8xf32> to vector<32x8xbf16>
    %212 = vector.extract_strided_slice %208 {offsets = [0, 32], sizes = [32, 8], strides = [1, 1]} : vector<32x128xf32> to vector<32x8xf32>
    %213 = arith.truncf %212 : vector<32x8xf32> to vector<32x8xbf16>
    %214 = vector.extract_strided_slice %208 {offsets = [0, 64], sizes = [32, 8], strides = [1, 1]} : vector<32x128xf32> to vector<32x8xf32>
    %215 = arith.truncf %214 : vector<32x8xf32> to vector<32x8xbf16>
    "tpu.trace_start"() <{level = 10 : i32, message = "qd,kd->qk"}> : () -> ()
    %cst_77 = arith.constant dense<0.000000e+00> : vector<32x32xf32>
    %216 = tpu.matmul %211, %213, %cst_77 {dimension_numbers = #tpu.dot_dimension_numbers<[1], [1], [0], [0], [0, 0, 1, 0], [], []>} : vector<32x8xbf16>, vector<32x8xbf16>, vector<32x32xf32> -> vector<32x32xf32>
    "tpu.trace_stop"() : () -> ()
    %cst_78 = arith.constant 0.353553385 : f32
    %217 = vector.broadcast %cst_78 : f32 to vector<32x32xf32>
    %218 = arith.mulf %216, %217 : vector<32x32xf32>
    %219 = arith.addf %218, %1 : vector<32x32xf32>
    %cst_79 = arith.constant dense<0xFF800000> : vector<32xf32>
    %220 = vector.multi_reduction <maximumf>, %219, %cst_79 [1] : vector<32x32xf32> to vector<32xf32>
    %221 = vector.shape_cast %220 : vector<32xf32> to vector<32x1xf32>
    %222 = vector.broadcast %221 : vector<32x1xf32> to vector<32x32xf32>
    %223 = arith.subf %219, %222 : vector<32x32xf32>
    %224 = math.exp %223 : vector<32x32xf32>
    %cst_80 = arith.constant dense<0.000000e+00> : vector<32xf32>
    %225 = vector.multi_reduction <add>, %224, %cst_80 [1] : vector<32x32xf32> to vector<32xf32>
    %226 = vector.shape_cast %225 : vector<32xf32> to vector<32x1xf32>
    %227 = tpu.reciprocal %226 {approx = true} : vector<32x1xf32> -> vector<32x1xf32>
    %228 = vector.broadcast %227 : vector<32x1xf32> to vector<32x32xf32>
    %229 = arith.mulf %224, %228 : vector<32x32xf32>
    %230 = arith.truncf %229 : vector<32x32xf32> to vector<32x32xbf16>
    %cst_81 = arith.constant dense<0.000000e+00> : vector<32x8xf32>
    %231 = tpu.matmul %230, %215, %cst_81 {dimension_numbers = #tpu.dot_dimension_numbers<[1], [0], [0], [1], [0, 0, 1, 1], [], []>} : vector<32x32xbf16>, vector<32x8xbf16>, vector<32x8xf32> -> vector<32x8xf32>
    %232 = arith.truncf %231 : vector<32x8xf32> to vector<32x8xbf16>
    %c1_82 = arith.constant 1 : index
    %c0_83 = arith.constant 0 : index
    %c0_84 = arith.constant 0 : index
    %c0_85 = arith.constant 0 : index
    %233 = vector.load %arg4[%c1_82, %c0_83, %c0_84, %c0_85] : memref<2x4x8x32xbf16, #tpu.memory_space<vmem>>, vector<1x1x8x32xbf16>
    %234 = vector.shape_cast %233 : vector<1x1x8x32xbf16> to vector<8x32xbf16>
    %cst_86 = arith.constant dense<0.000000e+00> : vector<32x32xf32>
    %235 = tpu.matmul %232, %234, %cst_86 {dimension_numbers = #tpu.dot_dimension_numbers<[1], [0], [0], [1], [0, 0, 1, 1], [], []>} : vector<32x8xbf16>, vector<8x32xbf16>, vector<32x32xf32> -> vector<32x32xf32>
    %236 = arith.addf %209, %235 : vector<32x32xf32>
    %237 = vector.extract_strided_slice %208 {offsets = [0, 8], sizes = [32, 8], strides = [1, 1]} : vector<32x128xf32> to vector<32x8xf32>
    %238 = arith.truncf %237 : vector<32x8xf32> to vector<32x8xbf16>
    %239 = vector.extract_strided_slice %208 {offsets = [0, 40], sizes = [32, 8], strides = [1, 1]} : vector<32x128xf32> to vector<32x8xf32>
    %240 = arith.truncf %239 : vector<32x8xf32> to vector<32x8xbf16>
    %241 = vector.extract_strided_slice %208 {offsets = [0, 72], sizes = [32, 8], strides = [1, 1]} : vector<32x128xf32> to vector<32x8xf32>
    %242 = arith.truncf %241 : vector<32x8xf32> to vector<32x8xbf16>
    "tpu.trace_start"() <{level = 10 : i32, message = "qd,kd->qk"}> : () -> ()
    %cst_87 = arith.constant dense<0.000000e+00> : vector<32x32xf32>
    %243 = tpu.matmul %238, %240, %cst_87 {dimension_numbers = #tpu.dot_dimension_numbers<[1], [1], [0], [0], [0, 0, 1, 0], [], []>} : vector<32x8xbf16>, vector<32x8xbf16>, vector<32x32xf32> -> vector<32x32xf32>
    "tpu.trace_stop"() : () -> ()
    %cst_88 = arith.constant 0.353553385 : f32
    %244 = vector.broadcast %cst_88 : f32 to vector<32x32xf32>
    %245 = arith.mulf %243, %244 : vector<32x32xf32>
    %246 = arith.addf %245, %1 : vector<32x32xf32>
    %cst_89 = arith.constant dense<0xFF800000> : vector<32xf32>
    %247 = vector.multi_reduction <maximumf>, %246, %cst_89 [1] : vector<32x32xf32> to vector<32xf32>
    %248 = vector.shape_cast %247 : vector<32xf32> to vector<32x1xf32>
    %249 = vector.broadcast %248 : vector<32x1xf32> to vector<32x32xf32>
    %250 = arith.subf %246, %249 : vector<32x32xf32>
    %251 = math.exp %250 : vector<32x32xf32>
    %cst_90 = arith.constant dense<0.000000e+00> : vector<32xf32>
    %252 = vector.multi_reduction <add>, %251, %cst_90 [1] : vector<32x32xf32> to vector<32xf32>
    %253 = vector.shape_cast %252 : vector<32xf32> to vector<32x1xf32>
    %254 = tpu.reciprocal %253 {approx = true} : vector<32x1xf32> -> vector<32x1xf32>
    %255 = vector.broadcast %254 : vector<32x1xf32> to vector<32x32xf32>
    %256 = arith.mulf %251, %255 : vector<32x32xf32>
    %257 = arith.truncf %256 : vector<32x32xf32> to vector<32x32xbf16>
    %cst_91 = arith.constant dense<0.000000e+00> : vector<32x8xf32>
    %258 = tpu.matmul %257, %242, %cst_91 {dimension_numbers = #tpu.dot_dimension_numbers<[1], [0], [0], [1], [0, 0, 1, 1], [], []>} : vector<32x32xbf16>, vector<32x8xbf16>, vector<32x8xf32> -> vector<32x8xf32>
    %259 = arith.truncf %258 : vector<32x8xf32> to vector<32x8xbf16>
    %c1_92 = arith.constant 1 : index
    %c1_93 = arith.constant 1 : index
    %c0_94 = arith.constant 0 : index
    %c0_95 = arith.constant 0 : index
    %260 = vector.load %arg4[%c1_92, %c1_93, %c0_94, %c0_95] : memref<2x4x8x32xbf16, #tpu.memory_space<vmem>>, vector<1x1x8x32xbf16>
    %261 = vector.shape_cast %260 : vector<1x1x8x32xbf16> to vector<8x32xbf16>
    %cst_96 = arith.constant dense<0.000000e+00> : vector<32x32xf32>
    %262 = tpu.matmul %259, %261, %cst_96 {dimension_numbers = #tpu.dot_dimension_numbers<[1], [0], [0], [1], [0, 0, 1, 1], [], []>} : vector<32x8xbf16>, vector<8x32xbf16>, vector<32x32xf32> -> vector<32x32xf32>
    %263 = arith.addf %236, %262 : vector<32x32xf32>
    %264 = vector.extract_strided_slice %208 {offsets = [0, 16], sizes = [32, 8], strides = [1, 1]} : vector<32x128xf32> to vector<32x8xf32>
    %265 = arith.truncf %264 : vector<32x8xf32> to vector<32x8xbf16>
    %266 = vector.extract_strided_slice %208 {offsets = [0, 48], sizes = [32, 8], strides = [1, 1]} : vector<32x128xf32> to vector<32x8xf32>
    %267 = arith.truncf %266 : vector<32x8xf32> to vector<32x8xbf16>
    %268 = vector.extract_strided_slice %208 {offsets = [0, 80], sizes = [32, 8], strides = [1, 1]} : vector<32x128xf32> to vector<32x8xf32>
    %269 = arith.truncf %268 : vector<32x8xf32> to vector<32x8xbf16>
    "tpu.trace_start"() <{level = 10 : i32, message = "qd,kd->qk"}> : () -> ()
    %cst_97 = arith.constant dense<0.000000e+00> : vector<32x32xf32>
    %270 = tpu.matmul %265, %267, %cst_97 {dimension_numbers = #tpu.dot_dimension_numbers<[1], [1], [0], [0], [0, 0, 1, 0], [], []>} : vector<32x8xbf16>, vector<32x8xbf16>, vector<32x32xf32> -> vector<32x32xf32>
    "tpu.trace_stop"() : () -> ()
    %cst_98 = arith.constant 0.353553385 : f32
    %271 = vector.broadcast %cst_98 : f32 to vector<32x32xf32>
    %272 = arith.mulf %270, %271 : vector<32x32xf32>
    %273 = arith.addf %272, %1 : vector<32x32xf32>
    %cst_99 = arith.constant dense<0xFF800000> : vector<32xf32>
    %274 = vector.multi_reduction <maximumf>, %273, %cst_99 [1] : vector<32x32xf32> to vector<32xf32>
    %275 = vector.shape_cast %274 : vector<32xf32> to vector<32x1xf32>
    %276 = vector.broadcast %275 : vector<32x1xf32> to vector<32x32xf32>
    %277 = arith.subf %273, %276 : vector<32x32xf32>
    %278 = math.exp %277 : vector<32x32xf32>
    %cst_100 = arith.constant dense<0.000000e+00> : vector<32xf32>
    %279 = vector.multi_reduction <add>, %278, %cst_100 [1] : vector<32x32xf32> to vector<32xf32>
    %280 = vector.shape_cast %279 : vector<32xf32> to vector<32x1xf32>
    %281 = tpu.reciprocal %280 {approx = true} : vector<32x1xf32> -> vector<32x1xf32>
    %282 = vector.broadcast %281 : vector<32x1xf32> to vector<32x32xf32>
    %283 = arith.mulf %278, %282 : vector<32x32xf32>
    %284 = arith.truncf %283 : vector<32x32xf32> to vector<32x32xbf16>
    %cst_101 = arith.constant dense<0.000000e+00> : vector<32x8xf32>
    %285 = tpu.matmul %284, %269, %cst_101 {dimension_numbers = #tpu.dot_dimension_numbers<[1], [0], [0], [1], [0, 0, 1, 1], [], []>} : vector<32x32xbf16>, vector<32x8xbf16>, vector<32x8xf32> -> vector<32x8xf32>
    %286 = arith.truncf %285 : vector<32x8xf32> to vector<32x8xbf16>
    %c1_102 = arith.constant 1 : index
    %c2_103 = arith.constant 2 : index
    %c0_104 = arith.constant 0 : index
    %c0_105 = arith.constant 0 : index
    %287 = vector.load %arg4[%c1_102, %c2_103, %c0_104, %c0_105] : memref<2x4x8x32xbf16, #tpu.memory_space<vmem>>, vector<1x1x8x32xbf16>
    %288 = vector.shape_cast %287 : vector<1x1x8x32xbf16> to vector<8x32xbf16>
    %cst_106 = arith.constant dense<0.000000e+00> : vector<32x32xf32>
    %289 = tpu.matmul %286, %288, %cst_106 {dimension_numbers = #tpu.dot_dimension_numbers<[1], [0], [0], [1], [0, 0, 1, 1], [], []>} : vector<32x8xbf16>, vector<8x32xbf16>, vector<32x32xf32> -> vector<32x32xf32>
    %290 = arith.addf %263, %289 : vector<32x32xf32>
    %291 = vector.extract_strided_slice %208 {offsets = [0, 24], sizes = [32, 8], strides = [1, 1]} : vector<32x128xf32> to vector<32x8xf32>
    %292 = arith.truncf %291 : vector<32x8xf32> to vector<32x8xbf16>
    %293 = vector.extract_strided_slice %208 {offsets = [0, 56], sizes = [32, 8], strides = [1, 1]} : vector<32x128xf32> to vector<32x8xf32>
    %294 = arith.truncf %293 : vector<32x8xf32> to vector<32x8xbf16>
    %295 = vector.extract_strided_slice %208 {offsets = [0, 88], sizes = [32, 8], strides = [1, 1]} : vector<32x128xf32> to vector<32x8xf32>
    %296 = arith.truncf %295 : vector<32x8xf32> to vector<32x8xbf16>
    "tpu.trace_start"() <{level = 10 : i32, message = "qd,kd->qk"}> : () -> ()
    %cst_107 = arith.constant dense<0.000000e+00> : vector<32x32xf32>
    %297 = tpu.matmul %292, %294, %cst_107 {dimension_numbers = #tpu.dot_dimension_numbers<[1], [1], [0], [0], [0, 0, 1, 0], [], []>} : vector<32x8xbf16>, vector<32x8xbf16>, vector<32x32xf32> -> vector<32x32xf32>
    "tpu.trace_stop"() : () -> ()
    %cst_108 = arith.constant 0.353553385 : f32
    %298 = vector.broadcast %cst_108 : f32 to vector<32x32xf32>
    %299 = arith.mulf %297, %298 : vector<32x32xf32>
    %300 = arith.addf %299, %1 : vector<32x32xf32>
    %cst_109 = arith.constant dense<0xFF800000> : vector<32xf32>
    %301 = vector.multi_reduction <maximumf>, %300, %cst_109 [1] : vector<32x32xf32> to vector<32xf32>
    %302 = vector.shape_cast %301 : vector<32xf32> to vector<32x1xf32>
    %303 = vector.broadcast %302 : vector<32x1xf32> to vector<32x32xf32>
    %304 = arith.subf %300, %303 : vector<32x32xf32>
    %305 = math.exp %304 : vector<32x32xf32>
    %cst_110 = arith.constant dense<0.000000e+00> : vector<32xf32>
    %306 = vector.multi_reduction <add>, %305, %cst_110 [1] : vector<32x32xf32> to vector<32xf32>
    %307 = vector.shape_cast %306 : vector<32xf32> to vector<32x1xf32>
    %308 = tpu.reciprocal %307 {approx = true} : vector<32x1xf32> -> vector<32x1xf32>
    %309 = vector.broadcast %308 : vector<32x1xf32> to vector<32x32xf32>
    %310 = arith.mulf %305, %309 : vector<32x32xf32>
    %311 = arith.truncf %310 : vector<32x32xf32> to vector<32x32xbf16>
    %cst_111 = arith.constant dense<0.000000e+00> : vector<32x8xf32>
    %312 = tpu.matmul %311, %296, %cst_111 {dimension_numbers = #tpu.dot_dimension_numbers<[1], [0], [0], [1], [0, 0, 1, 1], [], []>} : vector<32x32xbf16>, vector<32x8xbf16>, vector<32x8xf32> -> vector<32x8xf32>
    %313 = arith.truncf %312 : vector<32x8xf32> to vector<32x8xbf16>
    %c1_112 = arith.constant 1 : index
    %c3_113 = arith.constant 3 : index
    %c0_114 = arith.constant 0 : index
    %c0_115 = arith.constant 0 : index
    %314 = vector.load %arg4[%c1_112, %c3_113, %c0_114, %c0_115] : memref<2x4x8x32xbf16, #tpu.memory_space<vmem>>, vector<1x1x8x32xbf16>
    %315 = vector.shape_cast %314 : vector<1x1x8x32xbf16> to vector<8x32xbf16>
    %cst_116 = arith.constant dense<0.000000e+00> : vector<32x32xf32>
    %316 = tpu.matmul %313, %315, %cst_116 {dimension_numbers = #tpu.dot_dimension_numbers<[1], [0], [0], [1], [0, 0, 1, 1], [], []>} : vector<32x8xbf16>, vector<8x32xbf16>, vector<32x32xf32> -> vector<32x32xf32>
    %317 = arith.addf %290, %316 : vector<32x32xf32>
    %318 = vector.extract_strided_slice %201 {offsets = [1, 0], sizes = [1, 32], strides = [1, 1]} : vector<8x128xf32> to vector<1x32xf32>
    %319 = vector.broadcast %318 : vector<1x32xf32> to vector<32x32xf32>
    %320 = arith.addf %317, %319 : vector<32x32xf32>
    %321 = arith.addf %199, %320 : vector<32x32xf32>
    %322 = vector.extract_strided_slice %201 {offsets = [2, 0], sizes = [1, 32], strides = [1, 1]} : vector<8x128xf32> to vector<1x32xf32>
    %323 = vector.extract_strided_slice %201 {offsets = [3, 0], sizes = [1, 32], strides = [1, 1]} : vector<8x128xf32> to vector<1x32xf32>
    %cst_117 = arith.constant dense<0.000000e+00> : vector<32xf32>
    %324 = vector.multi_reduction <add>, %321, %cst_117 [1] : vector<32x32xf32> to vector<32xf32>
    %325 = vector.shape_cast %324 : vector<32xf32> to vector<32x1xf32>
    %cst_118 = arith.constant 3.200000e+01 : f32
    %326 = vector.broadcast %cst_118 : f32 to vector<32x1xf32>
    %327 = arith.divf %325, %326 : vector<32x1xf32>
    %328 = vector.broadcast %327 : vector<32x1xf32> to vector<32x32xf32>
    %329 = arith.subf %321, %328 : vector<32x32xf32>
    %330 = arith.mulf %329, %329 : vector<32x32xf32>
    %cst_119 = arith.constant dense<0.000000e+00> : vector<32xf32>
    %331 = vector.multi_reduction <add>, %330, %cst_119 [1] : vector<32x32xf32> to vector<32xf32>
    %332 = vector.shape_cast %331 : vector<32xf32> to vector<32x1xf32>
    %cst_120 = arith.constant 3.200000e+01 : f32
    %333 = vector.broadcast %cst_120 : f32 to vector<32x1xf32>
    %334 = arith.divf %332, %333 : vector<32x1xf32>
    %335 = vector.broadcast %327 : vector<32x1xf32> to vector<32x32xf32>
    %336 = arith.subf %321, %335 : vector<32x32xf32>
    %cst_121 = arith.constant 9.99999996E-13 : f32
    %337 = vector.broadcast %cst_121 : f32 to vector<32x1xf32>
    %338 = arith.addf %334, %337 : vector<32x1xf32>
    %339 = math.rsqrt %338 : vector<32x1xf32>
    %340 = vector.broadcast %339 : vector<32x1xf32> to vector<32x32xf32>
    %341 = arith.mulf %336, %340 : vector<32x32xf32>
    %342 = vector.broadcast %322 : vector<1x32xf32> to vector<32x32xf32>
    %343 = arith.mulf %341, %342 : vector<32x32xf32>
    %344 = vector.broadcast %323 : vector<1x32xf32> to vector<32x32xf32>
    %345 = arith.addf %343, %344 : vector<32x32xf32>
    %346 = arith.truncf %345 : vector<32x32xf32> to vector<32x32xbf16>
    %c1_122 = arith.constant 1 : index
    %c0_123 = arith.constant 0 : index
    %c0_124 = arith.constant 0 : index
    %347 = vector.load %arg5[%c1_122, %c0_123, %c0_124] : memref<2x32x64xbf16, #tpu.memory_space<vmem>>, vector<1x32x64xbf16>
    %348 = vector.shape_cast %347 : vector<1x32x64xbf16> to vector<32x64xbf16>
    %cst_125 = arith.constant dense<0.000000e+00> : vector<32x64xf32>
    %349 = tpu.matmul %346, %348, %cst_125 {dimension_numbers = #tpu.dot_dimension_numbers<[1], [0], [0], [1], [0, 0, 1, 1], [], []>} : vector<32x32xbf16>, vector<32x64xbf16>, vector<32x64xf32> -> vector<32x64xf32>
    %350 = vector.extract_strided_slice %201 {offsets = [4, 0], sizes = [1, 64], strides = [1, 1]} : vector<8x128xf32> to vector<1x64xf32>
    %351 = vector.broadcast %350 : vector<1x64xf32> to vector<32x64xf32>
    %352 = arith.addf %349, %351 : vector<32x64xf32>
    %353 = arith.mulf %352, %352 : vector<32x64xf32>
    %354 = arith.mulf %352, %353 : vector<32x64xf32>
    %cst_126 = arith.constant 4.471500e-02 : f32
    %355 = vector.broadcast %cst_126 : f32 to vector<32x64xf32>
    %356 = arith.mulf %355, %354 : vector<32x64xf32>
    %357 = arith.addf %352, %356 : vector<32x64xf32>
    %cst_127 = arith.constant 0.797884583 : f32
    %358 = vector.broadcast %cst_127 : f32 to vector<32x64xf32>
    %359 = arith.mulf %358, %357 : vector<32x64xf32>
    %360 = math.tanh %359 : vector<32x64xf32>
    %cst_128 = arith.constant 1.000000e+00 : f32
    %361 = vector.broadcast %cst_128 : f32 to vector<32x64xf32>
    %362 = arith.addf %361, %360 : vector<32x64xf32>
    %cst_129 = arith.constant 5.000000e-01 : f32
    %363 = vector.broadcast %cst_129 : f32 to vector<32x64xf32>
    %364 = arith.mulf %363, %362 : vector<32x64xf32>
    %365 = arith.mulf %352, %364 : vector<32x64xf32>
    %366 = arith.truncf %365 : vector<32x64xf32> to vector<32x64xbf16>
    %c1_130 = arith.constant 1 : index
    %c0_131 = arith.constant 0 : index
    %c0_132 = arith.constant 0 : index
    %367 = vector.load %arg6[%c1_130, %c0_131, %c0_132] : memref<2x64x32xbf16, #tpu.memory_space<vmem>>, vector<1x64x32xbf16>
    %368 = vector.shape_cast %367 : vector<1x64x32xbf16> to vector<64x32xbf16>
    %cst_133 = arith.constant dense<0.000000e+00> : vector<32x32xf32>
    %369 = tpu.matmul %366, %368, %cst_133 {dimension_numbers = #tpu.dot_dimension_numbers<[1], [0], [0], [1], [0, 0, 1, 1], [], []>} : vector<32x64xbf16>, vector<64x32xbf16>, vector<32x32xf32> -> vector<32x32xf32>
    %370 = vector.extract_strided_slice %201 {offsets = [5, 0], sizes = [1, 32], strides = [1, 1]} : vector<8x128xf32> to vector<1x32xf32>
    %371 = vector.broadcast %370 : vector<1x32xf32> to vector<32x32xf32>
    %372 = arith.addf %369, %371 : vector<32x32xf32>
    %373 = arith.addf %345, %372 : vector<32x32xf32>
    %374 = vector.extract_strided_slice %201 {offsets = [6, 0], sizes = [1, 32], strides = [1, 1]} : vector<8x128xf32> to vector<1x32xf32>
    %375 = vector.extract_strided_slice %201 {offsets = [7, 0], sizes = [1, 32], strides = [1, 1]} : vector<8x128xf32> to vector<1x32xf32>
    %cst_134 = arith.constant dense<0.000000e+00> : vector<32xf32>
    %376 = vector.multi_reduction <add>, %373, %cst_134 [1] : vector<32x32xf32> to vector<32xf32>
    %377 = vector.shape_cast %376 : vector<32xf32> to vector<32x1xf32>
    %cst_135 = arith.constant 3.200000e+01 : f32
    %378 = vector.broadcast %cst_135 : f32 to vector<32x1xf32>
    %379 = arith.divf %377, %378 : vector<32x1xf32>
    %380 = vector.broadcast %379 : vector<32x1xf32> to vector<32x32xf32>
    %381 = arith.subf %373, %380 : vector<32x32xf32>
    %382 = arith.mulf %381, %381 : vector<32x32xf32>
    %cst_136 = arith.constant dense<0.000000e+00> : vector<32xf32>
    %383 = vector.multi_reduction <add>, %382, %cst_136 [1] : vector<32x32xf32> to vector<32xf32>
    %384 = vector.shape_cast %383 : vector<32xf32> to vector<32x1xf32>
    %cst_137 = arith.constant 3.200000e+01 : f32
    %385 = vector.broadcast %cst_137 : f32 to vector<32x1xf32>
    %386 = arith.divf %384, %385 : vector<32x1xf32>
    %387 = vector.broadcast %379 : vector<32x1xf32> to vector<32x32xf32>
    %388 = arith.subf %373, %387 : vector<32x32xf32>
    %cst_138 = arith.constant 9.99999996E-13 : f32
    %389 = vector.broadcast %cst_138 : f32 to vector<32x1xf32>
    %390 = arith.addf %386, %389 : vector<32x1xf32>
    %391 = math.rsqrt %390 : vector<32x1xf32>
    %392 = vector.broadcast %391 : vector<32x1xf32> to vector<32x32xf32>
    %393 = arith.mulf %388, %392 : vector<32x32xf32>
    %394 = vector.broadcast %374 : vector<1x32xf32> to vector<32x32xf32>
    %395 = arith.mulf %393, %394 : vector<32x32xf32>
    %396 = vector.broadcast %375 : vector<1x32xf32> to vector<32x32xf32>
    %397 = arith.addf %395, %396 : vector<32x32xf32>
    %c0_139 = arith.constant 0 : index
    %c0_140 = arith.constant 0 : index
    %398 = vector.load %arg2[%c0_139, %c0_140] : memref<2x32xf32, #tpu.memory_space<vmem>>, vector<2x32xf32>
    %cst_141 = arith.constant dense<0.000000e+00> : vector<2x32xf32>
    %399 = tpu.matmul %398, %397, %cst_141 {dimension_numbers = #tpu.dot_dimension_numbers<[1], [0], [0], [1], [0, 0, 1, 1], [], []>} : vector<2x32xf32>, vector<32x32xf32>, vector<2x32xf32> -> vector<2x32xf32>
    %c0_142 = arith.constant 0 : index
    %c0_143 = arith.constant 0 : index
    %400 = vector.load %arg8[%c0_142, %c0_143] : memref<32x128xf32, #tpu.memory_space<vmem>>, vector<32x128xf32>
    %cst_144 = arith.constant dense<0.000000e+00> : vector<2x128xf32>
    %401 = tpu.matmul %399, %400, %cst_144 {dimension_numbers = #tpu.dot_dimension_numbers<[1], [0], [0], [1], [0, 0, 1, 1], [], []>} : vector<2x32xf32>, vector<32x128xf32>, vector<2x128xf32> -> vector<2x128xf32>
    %c0_145 = arith.constant 0 : index
    %c0_146 = arith.constant 0 : index
    %402 = vector.load %arg9[%c0_145, %c0_146] : memref<1x128xf32, #tpu.memory_space<vmem>>, vector<1x128xf32>
    %403 = vector.broadcast %402 : vector<1x128xf32> to vector<2x128xf32>
    %404 = arith.addf %401, %403 : vector<2x128xf32>
    %c0_147 = arith.constant 0 : index
    %c0_148 = arith.constant 0 : index
    %405 = vector.load %arg10[%c0_147, %c0_148] : memref<2x128xf32, #tpu.memory_space<vmem>>, vector<2x128xf32>
    tpu.vector_store %arg10[%c0_147, %c0_148], %404 {strides = array<i32>} : memref<2x128xf32, #tpu.memory_space<vmem>>, vector<2x128xf32>,
    return
  }
}

</mosaic_0001>

<llo_original>
// kernel: _embed_and_encode.1
$region0: #{_embed_and_encode.1}
  #allocation0 [shape = 'u32[]', space=smem, size = 0x4, offset = 0x4, fixed_abs, tag = 'smem constant byte address 0x4 - core index']
  #allocation1 [shape = 'u32[144,128]{1,0:T(1,128)}', space=vmem, size = 0x12000, scoped, tag = 'internal scratch']
  %s0 = inlined_call_operand.vmem [shape: f32[32,32], index: 0, kind: input, shape index: {}]
  %s1 = inlined_call_operand.vmem [shape: f32[32,32], index: 1, kind: input, shape index: {}]
  %s2 = inlined_call_operand.vmem [shape: f32[2,32], index: 2, kind: input, shape index: {}]
  %s3 = inlined_call_operand.vmem [shape: bf16[2,32,128], index: 3, kind: input, shape index: {}]
  %s4 = inlined_call_operand.vmem [shape: bf16[2,4,8,32], index: 4, kind: input, shape index: {}]
  %s5 = inlined_call_operand.vmem [shape: bf16[2,32,64], index: 5, kind: input, shape index: {}]
  %s6 = inlined_call_operand.vmem [shape: bf16[2,64,32], index: 6, kind: input, shape index: {}]
  %s7 = inlined_call_operand.vmem [shape: f32[2,8,128], index: 7, kind: input, shape index: {}]
  %s8 = inlined_call_operand.vmem [shape: f32[32,128], index: 8, kind: input, shape index: {}]
  %s9 = inlined_call_operand.vmem [shape: f32[1,128], index: 9, kind: input, shape index: {}]
  %s10 = inlined_call_operand.hbm [shape: f32[2,128], index: 10, kind: output, shape index: {}]
  %s11 = sld [smem:[#allocation0]]
  $region50: #{_embed_and_encode.1} parent=0
    _
  %s13 = ssub.s32 1, %s11
  %s14 = scalar_select 0, %s13, %s11
  $region1: #{_embed_and_encode.1} parent=0
    #allocation2 [shape = 'u8[1024]{0}', space=vmem, size = 0x400, scoped, tag = 'output window, operand 0, single buffered']
    #allocation3 [shape = 's32[1]{0}', space=sflag, size = 0x4, scoped, tag = 'scoped memory for _embed_and_encode.1']
    %15 = vsyncpa [#allocation3], 0
    // Predicated region
    $region2: #{_embed_and_encode.1} parent=1 // pred_check
      _
    $region3: #{_embed_and_encode.1} parent=1 // pred_check_branch
      %17 = sbr.rel (0) target = $region5
    $region4: #{_embed_and_encode.1} parent=1 // pred_region
      _
    $region5: #{_embed_and_encode.1} parent=1 // pred_fallthru
      _
    // Predicated region
    $region6: #{_embed_and_encode.1} parent=1 // pred_check
      _
    $region7: #{_embed_and_encode.1} parent=1 // pred_check_branch
      %19 = sbr.rel (0) target = $region9
    $region8: #{_embed_and_encode.1} parent=1 // pred_region
      _
    $region9: #{_embed_and_encode.1} parent=1 // pred_fallthru
      _
    // Predicated region
    $region10: #{_embed_and_encode.1} parent=1 // pred_check
      _
    $region11: #{_embed_and_encode.1} parent=1 // pred_check_branch
      %21 = sbr.rel (0) target = $region13
    $region12: #{_embed_and_encode.1} parent=1 // pred_region
      _
    $region13: #{_embed_and_encode.1} parent=1 // pred_fallthru
      _
    // Predicated region
    $region14: #{_embed_and_encode.1} parent=1 // pred_check
      _
    $region15: #{_embed_and_encode.1} parent=1 // pred_check_branch
      %23 = sbr.rel (0) target = $region17
    $region16: #{_embed_and_encode.1} parent=1 // pred_region
      _
    $region17: #{_embed_and_encode.1} parent=1 // pred_fallthru
      _
    // Predicated region
    $region18: #{_embed_and_encode.1} parent=1 // pred_check
      _
    $region19: #{_embed_and_encode.1} parent=1 // pred_check_branch
      %25 = sbr.rel (0) target = $region21
    $region20: #{_embed_and_encode.1} parent=1 // pred_region
      _
    $region21: #{_embed_and_encode.1} parent=1 // pred_fallthru
      _
    // Predicated region
    $region22: #{_embed_and_encode.1} parent=1 // pred_check
      _
    $region23: #{_embed_and_encode.1} parent=1 // pred_check_branch
      %27 = sbr.rel (0) target = $region25
    $region24: #{_embed_and_encode.1} parent=1 // pred_region
      _
    $region25: #{_embed_and_encode.1} parent=1 // pred_fallthru
      _
    // Predicated region
    $region26: #{_embed_and_encode.1} parent=1 // pred_check
      _
    $region27: #{_embed_and_encode.1} parent=1 // pred_check_branch
      %29 = sbr.rel (0) target = $region29
    $region28: #{_embed_and_encode.1} parent=1 // pred_region
      _
    $region29: #{_embed_and_encode.1} parent=1 // pred_fallthru
      _
    // Predicated region
    $region30: #{_embed_and_encode.1} parent=1 // pred_check
      _
    $region31: #{_embed_and_encode.1} parent=1 // pred_check_branch
      %31 = sbr.rel (0) target = $region33
    $region32: #{_embed_and_encode.1} parent=1 // pred_region
      _
    $region33: #{_embed_and_encode.1} parent=1 // pred_fallthru
      _
    // Predicated region
    $region34: #{_embed_and_encode.1} parent=1 // pred_check
      _
    $region35: #{_embed_and_encode.1} parent=1 // pred_check_branch
      %33 = sbr.rel (0) target = $region37
    $region36: #{_embed_and_encode.1} parent=1 // pred_region
      _
    $region37: #{_embed_and_encode.1} parent=1 // pred_fallthru
      _
    // Predicated region
    $region38: #{_embed_and_encode.1} parent=1 // pred_check
      _
    $region39: #{_embed_and_encode.1} parent=1 // pred_check_branch
      %35 = sbr.rel (0) target = $region41
    $region40: #{_embed_and_encode.1} parent=1 // pred_region
      _
    $region41: #{_embed_and_encode.1} parent=1 // pred_fallthru
      _
    %v37 = vld [vmem:[%s0] sm:$0xff]
    %v38 = vld [vmem:[%s0 + $0x8] sm:$0xff]
    %v39 = vld [vmem:[%s0 + $0x10] sm:$0xff]
    %v40 = vld [vmem:[%s0 + $0x18] sm:$0xff]
    %v41 = vld [vmem:[%s1] sm:$0xff]
    %v42 = vld [vmem:[%s1 + $0x8] sm:$0xff]
    %v43 = vld [vmem:[%s1 + $0x10] sm:$0xff]
    %v44 = vld [vmem:[%s1 + $0x18] sm:$0xff]
    %v45 = vld [vmem:[%s7] sm:$0xff]
    %v46 = vpack.c.bf16 %v38, %v37
    %v47 = vpack.c.bf16 %v40, %v39
    %v48 = vld [vmem:[%s3] sm:$0xf]
    %v49 = vld [vmem:[%s3 + $0x4] sm:$0xf]
    %v50 = vld [vmem:[%s3 + $0x8] sm:$0xf]
    %v51 = vld [vmem:[%s3 + $0xc] sm:$0xf]
    %v52 = vlaneseq
    %v53 = vshrl.u32 %v52, 7
    %v54 = vsub.s32 0, %v53
    %v55 = vrot.slane %v45, %v54
    %v60 = vunpack.c.l.b16 %v48
    %v61 = vunpack.c.l.b16 %v49
    %v62 = vunpack.c.l.b16 %v50
    %v63 = vunpack.c.l.b16 %v51
    %v64 = vpack.c.b16 %v61, %v60
    %v65 = vpack.c.b16 %v63, %v62
    %vm68 = vcmask 261120
    %v70 = vsel %vm68, %v46, 0
    %v73 = vsel %vm68, %v47, 0
    %75 = vmatprep.subr.bf16.mxu0 0
    %76 = vmatpush1.bf16.msra.mxu0 0
    %77 = vmatprep.subr.bf16.mxu0 0
    %78 = vmatpush1.bf16.msra.mxu0 0
    %79 = vmatprep.subr.bf16.mxu0 0
    %80 = vmatpush1.bf16.msra.mxu0 0
    %81 = vmatprep.subr.bf16.mxu0 0
    %82 = vmatpush1.bf16.msra.mxu0 0
    %83 = vmatprep.subr.bf16.mxu0 0
    %84 = vmatpush1.bf16.msra.mxu0 0
    %85 = vmatprep.subr.bf16.mxu0 0
    %86 = vmatpush1.bf16.msra.mxu0 0
    %87 = vmatprep.subr.bf16.mxu0 0
    %88 = vmatpush1.bf16.msra.mxu0 %v65
    %89 = vmatprep.subr.bf16.mxu0 0
    %90 = vmatpush1.bf16.msra.mxu0 %v64
    %91 = vmatprep.subr.bf16.mxu0 0
    %92 = vmatpush2.bf16.msra.mxu0 0
    %93 = vmatprep.subr.bf16.mxu0 0
    %94 = vmatpush2.bf16.msra.mxu0 0
    %95 = vmatprep.subr.bf16.mxu0 0
    %96 = vmatpush2.bf16.msra.mxu0 0
    %97 = vmatprep.subr.bf16.mxu0 0
    %98 = vmatpush2.bf16.msra.mxu0 0
    %99 = vmatprep.subr.bf16.mxu0 0
    %100 = vmatpush2.bf16.msra.mxu0 0
    %101 = vmatprep.subr.bf16.mxu0 0
    %102 = vmatpush2.bf16.msra.mxu0 0
    %103 = vmatprep.subr.bf16.mxu0 0
    %104 = vmatpush2.bf16.msra.mxu0 0
    %105 = vmatprep.subr.bf16.mxu0 0
    %106 = vmatpush2.bf16.msra.mxu0 0
    %107 = vmatprep.mubr.bf16.mxu0 0
    %108 = vmatmul.mubr.bf16.gmra.mxu0 %v70
    %v109 = vpop.f32.mrf.mxu0
    %v110 = vadd.f32 %v55, %v109
    %v111 = vpop.f32.mrf.mxu0
    %v112 = vpop.f32.mrf.mxu0
    %v113 = vadd.f32 %v55, %v112
    %v114 = vpop.f32.mrf.mxu0
    %115 = vmatprep.mubr.bf16.mxu0 0
    %116 = vmatmul.mubr.bf16.gmra.mxu0 %v73
    %v117 = vpop.f32.mrf.mxu0
    %v118 = vadd.f32 %v55, %v117
    %v119 = vpop.f32.mrf.mxu0
    %v120 = vpop.f32.mrf.mxu0
    %v121 = vadd.f32 %v55, %v120
    %v122 = vpop.f32.mrf.mxu0
    %123 = vdwg.mxu0
    %v124 = vpack.c.bf16 %v113, %v110
    %v125 = vpack.c.bf16 %v121, %v118
    %128 = vrot.lane.b32.xlu0 %v124, 96
    %v129 = vpop.permute.xlu0 %128
    %130 = vrot.lane.b32.xlu0 %v125, 96
    %v131 = vpop.permute.xlu0 %130
    %vm132 = vcmask 64512
    %v134 = vsel %vm132, %v124, 0
    %v137 = vsel %vm132, %v125, 0
    %v140 = vsel %vm132, %v129, 0
    %v143 = vsel %vm132, %v131, 0
    %145 = vmatprep.subr.bf16.mxu0 0
    %146 = vmatpush1.bf16.xpose.msra.mxu0 0
    %147 = vmatprep.subr.bf16.mxu0 0
    %148 = vmatpush1.bf16.xpose.msra.mxu0 0
    %149 = vmatprep.subr.bf16.mxu0 0
    %150 = vmatpush1.bf16.xpose.msra.mxu0 0
    %151 = vmatprep.subr.bf16.mxu0 0
    %152 = vmatpush1.bf16.xpose.msra.mxu0 0
    %153 = vmatprep.subr.bf16.mxu0 0
    %154 = vmatpush1.bf16.xpose.msra.mxu0 0
    %155 = vmatprep.subr.bf16.mxu0 0
    %156 = vmatpush1.bf16.xpose.msra.mxu0 0
    %157 = vmatprep.subr.bf16.mxu0 0
    %158 = vmatpush1.bf16.xpose.msra.mxu0 %v143
    %159 = vmatprep.subr.bf16.mxu0 0
    %160 = vmatpush1.bf16.xpose.msra.mxu0 %v140
    %161 = vmatprep.subr.bf16.mxu0 0
    %162 = vmatpush2.bf16.xpose.msra.mxu0 0
    %163 = vmatprep.subr.bf16.mxu0 0
    %164 = vmatpush2.bf16.xpose.msra.mxu0 0
    %165 = vmatprep.subr.bf16.mxu0 0
    %166 = vmatpush2.bf16.xpose.msra.mxu0 0
    %167 = vmatprep.subr.bf16.mxu0 0
    %168 = vmatpush2.bf16.xpose.msra.mxu0 0
    %169 = vmatprep.subr.bf16.mxu0 0
    %170 = vmatpush2.bf16.xpose.msra.mxu0 0
    %171 = vmatprep.subr.bf16.mxu0 0
    %172 = vmatpush2.bf16.xpose.msra.mxu0 0
    %173 = vmatprep.subr.bf16.mxu0 0
    %174 = vmatpush2.bf16.xpose.msra.mxu0 0
    %175 = vmatprep.subr.bf16.mxu0 0
    %176 = vmatpush2.bf16.xpose.msra.mxu0 0
    %177 = vmatprep.mubr.bf16.mxu0 0
    %178 = vmatmul.mubr.bf16.gmra.mxu0 %v134
    %v179 = vpop.f32.mrf.mxu0
    %v180 = vadd.f32 0.0, %v179
    %v181 = vpop.f32.mrf.mxu0
    %v182 = vpop.f32.mrf.mxu0
    %v183 = vadd.f32 0.0, %v182
    %v184 = vpop.f32.mrf.mxu0
    %185 = vmatprep.mubr.bf16.mxu0 0
    %186 = vmatmul.mubr.bf16.gmra.mxu0 %v137
    %v187 = vpop.f32.mrf.mxu0
    %v188 = vadd.f32 0.0, %v187
    %v189 = vpop.f32.mrf.mxu0
    %v190 = vpop.f32.mrf.mxu0
    %v191 = vadd.f32 0.0, %v190
    %v192 = vpop.f32.mrf.mxu0
    %193 = vdwg.mxu0
    %v194 = vmul.f32 %v180, 0.35355338
    %v195 = vmul.f32 %v183, 0.35355338
    %v196 = vmul.f32 %v188, 0.35355338
    %v197 = vmul.f32 %v191, 0.35355338
    %v198 = vadd.f32 %v194, %v41
    %v199 = vadd.f32 %v195, %v42
    %v200 = vadd.f32 %v196, %v43
    %v201 = vadd.f32 %v197, %v44
    %v202 = vsel %vm68, %v198, -inf
    %203 = vmax.xlane.f32.xlu0 %v202
    %v204 = vpop.xlane.xlu0 %203
    %v205 = vsel %vm68, %v199, -inf
    %206 = vmax.xlane.f32.xlu0 %v205
    %v207 = vpop.xlane.xlu0 %206
    %v208 = vsel %vm68, %v200, -inf
    %209 = vmax.xlane.f32.xlu0 %v208
    %v210 = vpop.xlane.xlu0 %209
    %v211 = vsel %vm68, %v201, -inf
    %212 = vmax.xlane.f32.xlu0 %v211
    %v213 = vpop.xlane.xlu0 %212
    %v214 = vsub.f32 %v198, %v204
    %v215 = vsub.f32 %v199, %v207
    %v216 = vsub.f32 %v200, %v210
    %v217 = vsub.f32 %v201, %v213
    %v218 = vmul.f32 %v214, 1.442695
    %v219 = vpow.pop %v218
    %v220 = vmul.f32 %v215, 1.442695
    %v221 = vpow.pop %v220
    %v222 = vmul.f32 %v216, 1.442695
    %v223 = vpow.pop %v222
    %v224 = vmul.f32 %v217, 1.442695
    %v225 = vpow.pop %v224
    %v226 = vsel %vm68, %v219, 0.0
    %227 = vadd.xlane.f32.xlu0 %v226
    %v228 = vpop.xlane.xlu0 %227
    %v229 = vsel %vm68, %v221, 0.0
    %230 = vadd.xlane.f32.xlu0 %v229
    %v231 = vpop.xlane.xlu0 %230
    %v232 = vsel %vm68, %v223, 0.0
    %233 = vadd.xlane.f32.xlu0 %v232
    %v234 = vpop.xlane.xlu0 %233
    %v235 = vsel %vm68, %v225, 0.0
    %236 = vadd.xlane.f32.xlu0 %v235
    %v237 = vpop.xlane.xlu0 %236
    %v238 = vrcp.pop %v228
    %v239 = vrcp.pop %v231
    %v240 = vrcp.pop %v234
    %v241 = vrcp.pop %v237
    %v242 = vmul.f32 %v219, %v238
    %v243 = vmul.f32 %v221, %v239
    %v244 = vmul.f32 %v223, %v240
    %v245 = vmul.f32 %v225, %v241
    %v246 = vpack.c.bf16 %v243, %v242
    %v247 = vpack.c.bf16 %v245, %v244
    %248 = vrot.lane.b32.xlu0 %v124, 64
    %v249 = vpop.permute.xlu0 %248
    %250 = vrot.lane.b32.xlu0 %v125, 64
    %v251 = vpop.permute.xlu0 %250
    %v255 = vsel %vm68, %v246, 0
    %v258 = vsel %vm68, %v247, 0
    %260 = vmatprep.subr.bf16.mxu0 0
    %261 = vmatpush1.bf16.msra.mxu0 0
    %262 = vmatprep.subr.bf16.mxu0 0
    %263 = vmatpush1.bf16.msra.mxu0 0
    %264 = vmatprep.subr.bf16.mxu0 0
    %265 = vmatpush1.bf16.msra.mxu0 0
    %266 = vmatprep.subr.bf16.mxu0 0
    %267 = vmatpush1.bf16.msra.mxu0 0
    %268 = vmatprep.subr.bf16.mxu0 0
    %269 = vmatpush1.bf16.msra.mxu0 0
    %270 = vmatprep.subr.bf16.mxu0 0
    %271 = vmatpush1.bf16.msra.mxu0 0
    %272 = vmatprep.subr.bf16.mxu0 0
    %273 = vmatpush1.bf16.msra.mxu0 %v251
    %274 = vmatprep.subr.bf16.mxu0 0
    %275 = vmatpush1.bf16.msra.mxu0 %v249
    %276 = vmatprep.subr.bf16.mxu0 0
    %277 = vmatpush2.bf16.msra.mxu0 0
    %278 = vmatprep.subr.bf16.mxu0 0
    %279 = vmatpush2.bf16.msra.mxu0 0
    %280 = vmatprep.subr.bf16.mxu0 0
    %281 = vmatpush2.bf16.msra.mxu0 0
    %282 = vmatprep.subr.bf16.mxu0 0
    %283 = vmatpush2.bf16.msra.mxu0 0
    %284 = vmatprep.subr.bf16.mxu0 0
    %285 = vmatpush2.bf16.msra.mxu0 0
    %286 = vmatprep.subr.bf16.mxu0 0
    %287 = vmatpush2.bf16.msra.mxu0 0
    %288 = vmatprep.subr.bf16.mxu0 0
    %289 = vmatpush2.bf16.msra.mxu0 0
    %290 = vmatprep.subr.bf16.mxu0 0
    %291 = vmatpush2.bf16.msra.mxu0 0
    %292 = vmatprep.mubr.bf16.mxu0 0
    %293 = vmatmul.mubr.bf16.gmra.mxu0 %v255
    %v294 = vpop.f32.mrf.mxu0
    %v295 = vadd.f32 0.0, %v294
    %v296 = vpop.f32.mrf.mxu0
    %v297 = vpop.f32.mrf.mxu0
    %v298 = vadd.f32 0.0, %v297
    %v299 = vpop.f32.mrf.mxu0
    %300 = vmatprep.mubr.bf16.mxu0 0
    %301 = vmatmul.mubr.bf16.gmra.mxu0 %v258
    %v302 = vpop.f32.mrf.mxu0
    %v303 = vadd.f32 0.0, %v302
    %v304 = vpop.f32.mrf.mxu0
    %v305 = vpop.f32.mrf.mxu0
    %v306 = vadd.f32 0.0, %v305
    %v307 = vpop.f32.mrf.mxu0
    %308 = vdwg.mxu0
    %v309 = vpack.c.bf16 %v298, %v295
    %v310 = vpack.c.bf16 %v306, %v303
    %v311 = vld [vmem:[%s4] sm:$0xf]
    %312 = vrot.lane.b32.xlu0 %v124, 120
    %v313 = vpop.permute.xlu0 %312
    %314 = vrot.lane.b32.xlu0 %v125, 120
    %v315 = vpop.permute.xlu0 %314
    %316 = vrot.lane.b32.xlu0 %v124, 88
    %v317 = vpop.permute.xlu0 %316
    %318 = vrot.lane.b32.xlu0 %v125, 88
    %v319 = vpop.permute.xlu0 %318
    %v321 = vsel %vm132, %v313, 0
    %v324 = vsel %vm132, %v315, 0
    %v327 = vsel %vm132, %v317, 0
    %v330 = vsel %vm132, %v319, 0
    %332 = vmatprep.subr.bf16.mxu0 0
    %333 = vmatpush1.bf16.xpose.msra.mxu0 0
    %334 = vmatprep.subr.bf16.mxu0 0
    %335 = vmatpush1.bf16.xpose.msra.mxu0 0
    %336 = vmatprep.subr.bf16.mxu0 0
    %337 = vmatpush1.bf16.xpose.msra.mxu0 0
    %338 = vmatprep.subr.bf16.mxu0 0
    %339 = vmatpush1.bf16.xpose.msra.mxu0 0
    %340 = vmatprep.subr.bf16.mxu0 0
    %341 = vmatpush1.bf16.xpose.msra.mxu0 0
    %342 = vmatprep.subr.bf16.mxu0 0
    %343 = vmatpush1.bf16.xpose.msra.mxu0 0
    %344 = vmatprep.subr.bf16.mxu0 0
    %345 = vmatpush1.bf16.xpose.msra.mxu0 %v330
    %346 = vmatprep.subr.bf16.mxu0 0
    %347 = vmatpush1.bf16.xpose.msra.mxu0 %v327
    %348 = vmatprep.subr.bf16.mxu0 0
    %349 = vmatpush2.bf16.xpose.msra.mxu0 0
    %350 = vmatprep.subr.bf16.mxu0 0
    %351 = vmatpush2.bf16.xpose.msra.mxu0 0
    %352 = vmatprep.subr.bf16.mxu0 0
    %353 = vmatpush2.bf16.xpose.msra.mxu0 0
    %354 = vmatprep.subr.bf16.mxu0 0
    %355 = vmatpush2.bf16.xpose.msra.mxu0 0
    %356 = vmatprep.subr.bf16.mxu0 0
    %357 = vmatpush2.bf16.xpose.msra.mxu0 0
    %358 = vmatprep.subr.bf16.mxu0 0
    %359 = vmatpush2.bf16.xpose.msra.mxu0 0
    %360 = vmatprep.subr.bf16.mxu0 0
    %361 = vmatpush2.bf16.xpose.msra.mxu0 0
    %362 = vmatprep.subr.bf16.mxu0 0
    %363 = vmatpush2.bf16.xpose.msra.mxu0 0
    %364 = vmatprep.mubr.bf16.mxu0 0
    %365 = vmatmul.mubr.bf16.gmra.mxu0 %v321
    %v366 = vpop.f32.mrf.mxu0
    %v367 = vadd.f32 0.0, %v366
    %v368 = vpop.f32.mrf.mxu0
    %v369 = vpop.f32.mrf.mxu0
    %v370 = vadd.f32 0.0, %v369
    %v371 = vpop.f32.mrf.mxu0
    %372 = vmatprep.mubr.bf16.mxu0 0
    %373 = vmatmul.mubr.bf16.gmra.mxu0 %v324
    %v374 = vpop.f32.mrf.mxu0
    %v375 = vadd.f32 0.0, %v374
    %v376 = vpop.f32.mrf.mxu0
    %v377 = vpop.f32.mrf.mxu0
    %v378 = vadd.f32 0.0, %v377
    %v379 = vpop.f32.mrf.mxu0
    %380 = vdwg.mxu0
    %v381 = vmul.f32 %v367, 0.35355338
    %v382 = vmul.f32 %v370, 0.35355338
    %v383 = vmul.f32 %v375, 0.35355338
    %v384 = vmul.f32 %v378, 0.35355338
    %v385 = vadd.f32 %v381, %v41
    %v386 = vadd.f32 %v382, %v42
    %v387 = vadd.f32 %v383, %v43
    %v388 = vadd.f32 %v384, %v44
    %v389 = vsel %vm68, %v385, -inf
    %390 = vmax.xlane.f32.xlu0 %v389
    %v391 = vpop.xlane.xlu0 %390
    %v392 = vsel %vm68, %v386, -inf
    %393 = vmax.xlane.f32.xlu0 %v392
    %v394 = vpop.xlane.xlu0 %393
    %v395 = vsel %vm68, %v387, -inf
    %396 = vmax.xlane.f32.xlu0 %v395
    %v397 = vpop.xlane.xlu0 %396
    %v398 = vsel %vm68, %v388, -inf
    %399 = vmax.xlane.f32.xlu0 %v398
    %v400 = vpop.xlane.xlu0 %399
    %v401 = vsub.f32 %v385, %v391
    %v402 = vsub.f32 %v386, %v394
    %v403 = vsub.f32 %v387, %v397
    %v404 = vsub.f32 %v388, %v400
    %v405 = vmul.f32 %v401, 1.442695
    %v406 = vpow.pop %v405
    %v407 = vmul.f32 %v402, 1.442695
    %v408 = vpow.pop %v407
    %v409 = vmul.f32 %v403, 1.442695
    %v410 = vpow.pop %v409
    %v411 = vmul.f32 %v404, 1.442695
    %v412 = vpow.pop %v411
    %v413 = vsel %vm68, %v406, 0.0
    %414 = vadd.xlane.f32.xlu0 %v413
    %v415 = vpop.xlane.xlu0 %414
    %v416 = vsel %vm68, %v408, 0.0
    %417 = vadd.xlane.f32.xlu0 %v416
    %v418 = vpop.xlane.xlu0 %417
    %v419 = vsel %vm68, %v410, 0.0
    %420 = vadd.xlane.f32.xlu0 %v419
    %v421 = vpop.xlane.xlu0 %420
    %v422 = vsel %vm68, %v412, 0.0
    %423 = vadd.xlane.f32.xlu0 %v422
    %v424 = vpop.xlane.xlu0 %423
    %v425 = vrcp.pop %v415
    %v426 = vrcp.pop %v418
    %v427 = vrcp.pop %v421
    %v428 = vrcp.pop %v424
    %v429 = vmul.f32 %v406, %v425
    %v430 = vmul.f32 %v408, %v426
    %v431 = vmul.f32 %v410, %v427
    %v432 = vmul.f32 %v412, %v428
    %v433 = vpack.c.bf16 %v430, %v429
    %v434 = vpack.c.bf16 %v432, %v431
    %435 = vrot.lane.b32.xlu0 %v124, 56
    %v436 = vpop.permute.xlu0 %435
    %437 = vrot.lane.b32.xlu0 %v125, 56
    %v438 = vpop.permute.xlu0 %437
    %v442 = vsel %vm68, %v433, 0
    %v445 = vsel %vm68, %v434, 0
    %447 = vmatprep.subr.bf16.mxu0 0
    %448 = vmatpush1.bf16.msra.mxu0 0
    %449 = vmatprep.subr.bf16.mxu0 0
    %450 = vmatpush1.bf16.msra.mxu0 0
    %451 = vmatprep.subr.bf16.mxu0 0
    %452 = vmatpush1.bf16.msra.mxu0 0
    %453 = vmatprep.subr.bf16.mxu0 0
    %454 = vmatpush1.bf16.msra.mxu0 0
    %455 = vmatprep.subr.bf16.mxu0 0
    %456 = vmatpush1.bf16.msra.mxu0 0
    %457 = vmatprep.subr.bf16.mxu0 0
    %458 = vmatpush1.bf16.msra.mxu0 0
    %459 = vmatprep.subr.bf16.mxu0 0
    %460 = vmatpush1.bf16.msra.mxu0 %v438
    %461 = vmatprep.subr.bf16.mxu0 0
    %462 = vmatpush1.bf16.msra.mxu0 %v436
    %463 = vmatprep.subr.bf16.mxu0 0
    %464 = vmatpush2.bf16.msra.mxu0 0
    %465 = vmatprep.subr.bf16.mxu0 0
    %466 = vmatpush2.bf16.msra.mxu0 0
    %467 = vmatprep.subr.bf16.mxu0 0
    %468 = vmatpush2.bf16.msra.mxu0 0
    %469 = vmatprep.subr.bf16.mxu0 0
    %470 = vmatpush2.bf16.msra.mxu0 0
    %471 = vmatprep.subr.bf16.mxu0 0
    %472 = vmatpush2.bf16.msra.mxu0 0
    %473 = vmatprep.subr.bf16.mxu0 0
    %474 = vmatpush2.bf16.msra.mxu0 0
    %475 = vmatprep.subr.bf16.mxu0 0
    %476 = vmatpush2.bf16.msra.mxu0 0
    %477 = vmatprep.subr.bf16.mxu0 0
    %478 = vmatpush2.bf16.msra.mxu0 0
    %479 = vmatprep.mubr.bf16.mxu0 0
    %480 = vmatmul.mubr.bf16.gmra.mxu0 %v442
    %v481 = vpop.f32.mrf.mxu0
    %v482 = vadd.f32 0.0, %v481
    %v483 = vpop.f32.mrf.mxu0
    %v484 = vpop.f32.mrf.mxu0
    %v485 = vadd.f32 0.0, %v484
    %v486 = vpop.f32.mrf.mxu0
    %487 = vmatprep.mubr.bf16.mxu0 0
    %488 = vmatmul.mubr.bf16.gmra.mxu0 %v445
    %v489 = vpop.f32.mrf.mxu0
    %v490 = vadd.f32 0.0, %v489
    %v491 = vpop.f32.mrf.mxu0
    %v492 = vpop.f32.mrf.mxu0
    %v493 = vadd.f32 0.0, %v492
    %v494 = vpop.f32.mrf.mxu0
    %495 = vdwg.mxu0
    %v496 = vpack.c.bf16 %v485, %v482
    %v497 = vpack.c.bf16 %v493, %v490
    %s498 = scalar_lea.vmem %s4, 4
    %v499 = vld [vmem:[%s498] sm:$0xf]
    %v501 = vsel %vm132, %v496, 0
    %v504 = vsel %vm132, %v497, 0
    %vm506 = vcmask 1043456
    %v508 = vsel %vm506, %v499, 0
    %510 = vmatprep.subr.bf16.mxu0 0
    %511 = vmatpush1.bf16.msra.mxu0 0
    %512 = vmatprep.subr.bf16.mxu0 0
    %513 = vmatpush1.bf16.msra.mxu0 0
    %514 = vmatprep.subr.bf16.mxu0 0
    %515 = vmatpush1.bf16.msra.mxu0 0
    %516 = vmatprep.subr.bf16.mxu0 0
    %517 = vmatpush1.bf16.msra.mxu0 0
    %518 = vmatprep.subr.bf16.mxu0 0
    %519 = vmatpush1.bf16.msra.mxu0 0
    %520 = vmatprep.subr.bf16.mxu0 0
    %521 = vmatpush1.bf16.msra.mxu0 0
    %522 = vmatprep.subr.bf16.mxu0 0
    %523 = vmatpush1.bf16.msra.mxu0 0
    %524 = vmatprep.subr.bf16.mxu0 0
    %525 = vmatpush1.bf16.msra.mxu0 %v508
    %526 = vmatprep.subr.bf16.mxu0 0
    %527 = vmatpush2.bf16.msra.mxu0 0
    %528 = vmatprep.subr.bf16.mxu0 0
    %529 = vmatpush2.bf16.msra.mxu0 0
    %530 = vmatprep.subr.bf16.mxu0 0
    %531 = vmatpush2.bf16.msra.mxu0 0
    %532 = vmatprep.subr.bf16.mxu0 0
    %533 = vmatpush2.bf16.msra.mxu0 0
    %534 = vmatprep.subr.bf16.mxu0 0
    %535 = vmatpush2.bf16.msra.mxu0 0
    %536 = vmatprep.subr.bf16.mxu0 0
    %537 = vmatpush2.bf16.msra.mxu0 0
    %538 = vmatprep.subr.bf16.mxu0 0
    %539 = vmatpush2.bf16.msra.mxu0 0
    %540 = vmatprep.subr.bf16.mxu0 0
    %541 = vmatpush2.bf16.msra.mxu0 0
    %542 = vmatprep.mubr.bf16.mxu0 0
    %543 = vmatmul.mubr.bf16.gmra.mxu0 %v501
    %v544 = vpop.f32.mrf.mxu0
    %v545 = vadd.f32 0.0, %v544
    %v546 = vpop.f32.mrf.mxu0
    %v547 = vpop.f32.mrf.mxu0
    %v548 = vadd.f32 0.0, %v547
    %v549 = vpop.f32.mrf.mxu0
    %550 = vmatprep.mubr.bf16.mxu0 0
    %551 = vmatmul.mubr.bf16.gmra.mxu0 %v504
    %v552 = vpop.f32.mrf.mxu0
    %v553 = vadd.f32 0.0, %v552
    %v554 = vpop.f32.mrf.mxu0
    %v555 = vpop.f32.mrf.mxu0
    %v556 = vadd.f32 0.0, %v555
    %v557 = vpop.f32.mrf.mxu0
    %558 = vdwg.mxu0
    %v560 = vsel %vm132, %v309, 0
    %v563 = vsel %vm132, %v310, 0
    %v566 = vsel %vm506, %v311, 0
    %568 = vmatprep.subr.bf16.mxu0 0
    %569 = vmatpush1.bf16.msra.mxu0 0
    %570 = vmatprep.subr.bf16.mxu0 0
    %571 = vmatpush1.bf16.msra.mxu0 0
    %572 = vmatprep.subr.bf16.mxu0 0
    %573 = vmatpush1.bf16.msra.mxu0 0
    %574 = vmatprep.subr.bf16.mxu0 0
    %575 = vmatpush1.bf16.msra.mxu0 0
    %576 = vmatprep.subr.bf16.mxu0 0
    %577 = vmatpush1.bf16.msra.mxu0 0
    %578 = vmatprep.subr.bf16.mxu0 0
    %579 = vmatpush1.bf16.msra.mxu0 0
    %580 = vmatprep.subr.bf16.mxu0 0
    %581 = vmatpush1.bf16.msra.mxu0 0
    %582 = vmatprep.subr.bf16.mxu0 0
    %583 = vmatpush1.bf16.msra.mxu0 %v566
    %584 = vmatprep.subr.bf16.mxu0 0
    %585 = vmatpush2.bf16.msra.mxu0 0
    %586 = vmatprep.subr.bf16.mxu0 0
    %587 = vmatpush2.bf16.msra.mxu0 0
    %588 = vmatprep.subr.bf16.mxu0 0
    %589 = vmatpush2.bf16.msra.mxu0 0
    %590 = vmatprep.subr.bf16.mxu0 0
    %591 = vmatpush2.bf16.msra.mxu0 0
    %592 = vmatprep.subr.bf16.mxu0 0
    %593 = vmatpush2.bf16.msra.mxu0 0
    %594 = vmatprep.subr.bf16.mxu0 0
    %595 = vmatpush2.bf16.msra.mxu0 0
    %596 = vmatprep.subr.bf16.mxu0 0
    %597 = vmatpush2.bf16.msra.mxu0 0
    %598 = vmatprep.subr.bf16.mxu0 0
    %599 = vmatpush2.bf16.msra.mxu0 0
    %600 = vmatprep.mubr.bf16.mxu0 0
    %601 = vmatmul.mubr.bf16.gmra.mxu0 %v560
    %v602 = vpop.f32.mrf.mxu0
    %v603 = vadd.f32 %v545, %v602
    %v604 = vpop.f32.mrf.mxu0
    %v605 = vpop.f32.mrf.mxu0
    %v606 = vadd.f32 %v548, %v605
    %v607 = vpop.f32.mrf.mxu0
    %608 = vmatprep.mubr.bf16.mxu0 0
    %609 = vmatmul.mubr.bf16.gmra.mxu0 %v563
    %v610 = vpop.f32.mrf.mxu0
    %v611 = vadd.f32 %v553, %v610
    %v612 = vpop.f32.mrf.mxu0
    %v613 = vpop.f32.mrf.mxu0
    %v614 = vadd.f32 %v556, %v613
    %v615 = vpop.f32.mrf.mxu0
    %616 = vdwg.mxu0
    %617 = vrot.lane.b32.xlu0 %v124, 112
    %v618 = vpop.permute.xlu0 %617
    %619 = vrot.lane.b32.xlu0 %v125, 112
    %v620 = vpop.permute.xlu0 %619
    %621 = vrot.lane.b32.xlu0 %v124, 80
    %v622 = vpop.permute.xlu0 %621
    %623 = vrot.lane.b32.xlu0 %v125, 80
    %v624 = vpop.permute.xlu0 %623
    %v626 = vsel %vm132, %v618, 0
    %v629 = vsel %vm132, %v620, 0
    %v632 = vsel %vm132, %v622, 0
    %v635 = vsel %vm132, %v624, 0
    %637 = vmatprep.subr.bf16.mxu0 0
    %638 = vmatpush1.bf16.xpose.msra.mxu0 0
    %639 = vmatprep.subr.bf16.mxu0 0
    %640 = vmatpush1.bf16.xpose.msra.mxu0 0
    %641 = vmatprep.subr.bf16.mxu0 0
    %642 = vmatpush1.bf16.xpose.msra.mxu0 0
    %643 = vmatprep.subr.bf16.mxu0 0
    %644 = vmatpush1.bf16.xpose.msra.mxu0 0
    %645 = vmatprep.subr.bf16.mxu0 0
    %646 = vmatpush1.bf16.xpose.msra.mxu0 0
    %647 = vmatprep.subr.bf16.mxu0 0
    %648 = vmatpush1.bf16.xpose.msra.mxu0 0
    %649 = vmatprep.subr.bf16.mxu0 0
    %650 = vmatpush1.bf16.xpose.msra.mxu0 %v635
    %651 = vmatprep.subr.bf16.mxu0 0
    %652 = vmatpush1.bf16.xpose.msra.mxu0 %v632
    %653 = vmatprep.subr.bf16.mxu0 0
    %654 = vmatpush2.bf16.xpose.msra.mxu0 0
    %655 = vmatprep.subr.bf16.mxu0 0
    %656 = vmatpush2.bf16.xpose.msra.mxu0 0
    %657 = vmatprep.subr.bf16.mxu0 0
    %658 = vmatpush2.bf16.xpose.msra.mxu0 0
    %659 = vmatprep.subr.bf16.mxu0 0
    %660 = vmatpush2.bf16.xpose.msra.mxu0 0
    %661 = vmatprep.subr.bf16.mxu0 0
    %662 = vmatpush2.bf16.xpose.msra.mxu0 0
    %663 = vmatprep.subr.bf16.mxu0 0
    %664 = vmatpush2.bf16.xpose.msra.mxu0 0
    %665 = vmatprep.subr.bf16.mxu0 0
    %666 = vmatpush2.bf16.xpose.msra.mxu0 0
    %667 = vmatprep.subr.bf16.mxu0 0
    %668 = vmatpush2.bf16.xpose.msra.mxu0 0
    %669 = vmatprep.mubr.bf16.mxu0 0
    %670 = vmatmul.mubr.bf16.gmra.mxu0 %v626
    %v671 = vpop.f32.mrf.mxu0
    %v672 = vadd.f32 0.0, %v671
    %v673 = vpop.f32.mrf.mxu0
    %v674 = vpop.f32.mrf.mxu0
    %v675 = vadd.f32 0.0, %v674
    %v676 = vpop.f32.mrf.mxu0
    %677 = vmatprep.mubr.bf16.mxu0 0
    %678 = vmatmul.mubr.bf16.gmra.mxu0 %v629
    %v679 = vpop.f32.mrf.mxu0
    %v680 = vadd.f32 0.0, %v679
    %v681 = vpop.f32.mrf.mxu0
    %v682 = vpop.f32.mrf.mxu0
    %v683 = vadd.f32 0.0, %v682
    %v684 = vpop.f32.mrf.mxu0
    %685 = vdwg.mxu0
    %v686 = vmul.f32 %v672, 0.35355338
    %v687 = vmul.f32 %v675, 0.35355338
    %v688 = vmul.f32 %v680, 0.35355338
    %v689 = vmul.f32 %v683, 0.35355338
    %v690 = vadd.f32 %v686, %v41
    %v691 = vadd.f32 %v687, %v42
    %v692 = vadd.f32 %v688, %v43
    %v693 = vadd.f32 %v689, %v44
    %v694 = vsel %vm68, %v690, -inf
    %695 = vmax.xlane.f32.xlu0 %v694
    %v696 = vpop.xlane.xlu0 %695
    %v697 = vsel %vm68, %v691, -inf
    %698 = vmax.xlane.f32.xlu0 %v697
    %v699 = vpop.xlane.xlu0 %698
    %v700 = vsel %vm68, %v692, -inf
    %701 = vmax.xlane.f32.xlu0 %v700
    %v702 = vpop.xlane.xlu0 %701
    %v703 = vsel %vm68, %v693, -inf
    %704 = vmax.xlane.f32.xlu0 %v703
    %v705 = vpop.xlane.xlu0 %704
    %v706 = vsub.f32 %v690, %v696
    %v707 = vsub.f32 %v691, %v699
    %v708 = vsub.f32 %v692, %v702
    %v709 = vsub.f32 %v693, %v705
    %v710 = vmul.f32 %v706, 1.442695
    %v711 = vpow.pop %v710
    %v712 = vmul.f32 %v707, 1.442695
    %v713 = vpow.pop %v712
    %v714 = vmul.f32 %v708, 1.442695
    %v715 = vpow.pop %v714
    %v716 = vmul.f32 %v709, 1.442695
    %v717 = vpow.pop %v716
    %v718 = vsel %vm68, %v711, 0.0
    %719 = vadd.xlane.f32.xlu0 %v718
    %v720 = vpop.xlane.xlu0 %719
    %v721 = vsel %vm68, %v713, 0.0
    %722 = vadd.xlane.f32.xlu0 %v721
    %v723 = vpop.xlane.xlu0 %722
    %v724 = vsel %vm68, %v715, 0.0
    %725 = vadd.xlane.f32.xlu0 %v724
    %v726 = vpop.xlane.xlu0 %725
    %v727 = vsel %vm68, %v717, 0.0
    %728 = vadd.xlane.f32.xlu0 %v727
    %v729 = vpop.xlane.xlu0 %728
    %v730 = vrcp.pop %v720
    %v731 = vrcp.pop %v723
    %v732 = vrcp.pop %v726
    %v733 = vrcp.pop %v729
    %v734 = vmul.f32 %v711, %v730
    %v735 = vmul.f32 %v713, %v731
    %v736 = vmul.f32 %v715, %v732
    %v737 = vmul.f32 %v717, %v733
    %v738 = vpack.c.bf16 %v735, %v734
    %v739 = vpack.c.bf16 %v737, %v736
    %740 = vrot.lane.b32.xlu0 %v124, 48
    %v741 = vpop.permute.xlu0 %740
    %742 = vrot.lane.b32.xlu0 %v125, 48
    %v743 = vpop.permute.xlu0 %742
    %v747 = vsel %vm68, %v738, 0
    %v750 = vsel %vm68, %v739, 0
    %752 = vmatprep.subr.bf16.mxu0 0
    %753 = vmatpush1.bf16.msra.mxu0 0
    %754 = vmatprep.subr.bf16.mxu0 0
    %755 = vmatpush1.bf16.msra.mxu0 0
    %756 = vmatprep.subr.bf16.mxu0 0
    %757 = vmatpush1.bf16.msra.mxu0 0
    %758 = vmatprep.subr.bf16.mxu0 0
    %759 = vmatpush1.bf16.msra.mxu0 0
    %760 = vmatprep.subr.bf16.mxu0 0
    %761 = vmatpush1.bf16.msra.mxu0 0
    %762 = vmatprep.subr.bf16.mxu0 0
    %763 = vmatpush1.bf16.msra.mxu0 0
    %764 = vmatprep.subr.bf16.mxu0 0
    %765 = vmatpush1.bf16.msra.mxu0 %v743
    %766 = vmatprep.subr.bf16.mxu0 0
    %767 = vmatpush1.bf16.msra.mxu0 %v741
    %768 = vmatprep.subr.bf16.mxu0 0
    %769 = vmatpush2.bf16.msra.mxu0 0
    %770 = vmatprep.subr.bf16.mxu0 0
    %771 = vmatpush2.bf16.msra.mxu0 0
    %772 = vmatprep.subr.bf16.mxu0 0
    %773 = vmatpush2.bf16.msra.mxu0 0
    %774 = vmatprep.subr.bf16.mxu0 0
    %775 = vmatpush2.bf16.msra.mxu0 0
    %776 = vmatprep.subr.bf16.mxu0 0
    %777 = vmatpush2.bf16.msra.mxu0 0
    %778 = vmatprep.subr.bf16.mxu0 0
    %779 = vmatpush2.bf16.msra.mxu0 0
    %780 = vmatprep.subr.bf16.mxu0 0
    %781 = vmatpush2.bf16.msra.mxu0 0
    %782 = vmatprep.subr.bf16.mxu0 0
    %783 = vmatpush2.bf16.msra.mxu0 0
    %784 = vmatprep.mubr.bf16.mxu0 0
    %785 = vmatmul.mubr.bf16.gmra.mxu0 %v747
    %v786 = vpop.f32.mrf.mxu0
    %v787 = vadd.f32 0.0, %v786
    %v788 = vpop.f32.mrf.mxu0
    %v789 = vpop.f32.mrf.mxu0
    %v790 = vadd.f32 0.0, %v789
    %v791 = vpop.f32.mrf.mxu0
    %792 = vmatprep.mubr.bf16.mxu0 0
    %793 = vmatmul.mubr.bf16.gmra.mxu0 %v750
    %v794 = vpop.f32.mrf.mxu0
    %v795 = vadd.f32 0.0, %v794
    %v796 = vpop.f32.mrf.mxu0
    %v797 = vpop.f32.mrf.mxu0
    %v798 = vadd.f32 0.0, %v797
    %v799 = vpop.f32.mrf.mxu0
    %800 = vdwg.mxu0
    %v801 = vpack.c.bf16 %v790, %v787
    %v802 = vpack.c.bf16 %v798, %v795
    %s803 = scalar_lea.vmem %s4, 8
    %v804 = vld [vmem:[%s803] sm:$0xf]
    %v806 = vsel %vm132, %v801, 0
    %v809 = vsel %vm132, %v802, 0
    %v812 = vsel %vm506, %v804, 0
    %814 = vmatprep.subr.bf16.mxu0 0
    %815 = vmatpush1.bf16.msra.mxu0 0
    %816 = vmatprep.subr.bf16.mxu0 0
    %817 = vmatpush1.bf16.msra.mxu0 0
    %818 = vmatprep.subr.bf16.mxu0 0
    %819 = vmatpush1.bf16.msra.mxu0 0
    %820 = vmatprep.subr.bf16.mxu0 0
    %821 = vmatpush1.bf16.msra.mxu0 0
    %822 = vmatprep.subr.bf16.mxu0 0
    %823 = vmatpush1.bf16.msra.mxu0 0
    %824 = vmatprep.subr.bf16.mxu0 0
    %825 = vmatpush1.bf16.msra.mxu0 0
    %826 = vmatprep.subr.bf16.mxu0 0
    %827 = vmatpush1.bf16.msra.mxu0 0
    %828 = vmatprep.subr.bf16.mxu0 0
    %829 = vmatpush1.bf16.msra.mxu0 %v812
    %830 = vmatprep.subr.bf16.mxu0 0
    %831 = vmatpush2.bf16.msra.mxu0 0
    %832 = vmatprep.subr.bf16.mxu0 0
    %833 = vmatpush2.bf16.msra.mxu0 0
    %834 = vmatprep.subr.bf16.mxu0 0
    %835 = vmatpush2.bf16.msra.mxu0 0
    %836 = vmatprep.subr.bf16.mxu0 0
    %837 = vmatpush2.bf16.msra.mxu0 0
    %838 = vmatprep.subr.bf16.mxu0 0
    %839 = vmatpush2.bf16.msra.mxu0 0
    %840 = vmatprep.subr.bf16.mxu0 0
    %841 = vmatpush2.bf16.msra.mxu0 0
    %842 = vmatprep.subr.bf16.mxu0 0
    %843 = vmatpush2.bf16.msra.mxu0 0
    %844 = vmatprep.subr.bf16.mxu0 0
    %845 = vmatpush2.bf16.msra.mxu0 0
    %846 = vmatprep.mubr.bf16.mxu0 0
    %847 = vmatmul.mubr.bf16.gmra.mxu0 %v806
    %v848 = vpop.f32.mrf.mxu0
    %v849 = vadd.f32 0.0, %v848
    %v850 = vpop.f32.mrf.mxu0
    %v851 = vpop.f32.mrf.mxu0
    %v852 = vadd.f32 0.0, %v851
    %v853 = vpop.f32.mrf.mxu0
    %854 = vmatprep.mubr.bf16.mxu0 0
    %855 = vmatmul.mubr.bf16.gmra.mxu0 %v809
    %v856 = vpop.f32.mrf.mxu0
    %v857 = vadd.f32 0.0, %v856
    %v858 = vpop.f32.mrf.mxu0
    %v859 = vpop.f32.mrf.mxu0
    %v860 = vadd.f32 0.0, %v859
    %v861 = vpop.f32.mrf.mxu0
    %862 = vdwg.mxu0
    %v863 = vadd.f32 %v603, %v849
    %v864 = vadd.f32 %v606, %v852
    %v865 = vadd.f32 %v611, %v857
    %v866 = vadd.f32 %v614, %v860
    %867 = vrot.lane.b32.xlu0 %v124, 104
    %v868 = vpop.permute.xlu0 %867
    %869 = vrot.lane.b32.xlu0 %v125, 104
    %v870 = vpop.permute.xlu0 %869
    %871 = vrot.lane.b32.xlu0 %v124, 72
    %v872 = vpop.permute.xlu0 %871
    %873 = vrot.lane.b32.xlu0 %v125, 72
    %v874 = vpop.permute.xlu0 %873
    %v876 = vsel %vm132, %v868, 0
    %v879 = vsel %vm132, %v870, 0
    %v882 = vsel %vm132, %v872, 0
    %v885 = vsel %vm132, %v874, 0
    %887 = vmatprep.subr.bf16.mxu0 0
    %888 = vmatpush1.bf16.xpose.msra.mxu0 0
    %889 = vmatprep.subr.bf16.mxu0 0
    %890 = vmatpush1.bf16.xpose.msra.mxu0 0
    %891 = vmatprep.subr.bf16.mxu0 0
    %892 = vmatpush1.bf16.xpose.msra.mxu0 0
    %893 = vmatprep.subr.bf16.mxu0 0
    %894 = vmatpush1.bf16.xpose.msra.mxu0 0
    %895 = vmatprep.subr.bf16.mxu0 0
    %896 = vmatpush1.bf16.xpose.msra.mxu0 0
    %897 = vmatprep.subr.bf16.mxu0 0
    %898 = vmatpush1.bf16.xpose.msra.mxu0 0
    %899 = vmatprep.subr.bf16.mxu0 0
    %900 = vmatpush1.bf16.xpose.msra.mxu0 %v885
    %901 = vmatprep.subr.bf16.mxu0 0
    %902 = vmatpush1.bf16.xpose.msra.mxu0 %v882
    %903 = vmatprep.subr.bf16.mxu0 0
    %904 = vmatpush2.bf16.xpose.msra.mxu0 0
    %905 = vmatprep.subr.bf16.mxu0 0
    %906 = vmatpush2.bf16.xpose.msra.mxu0 0
    %907 = vmatprep.subr.bf16.mxu0 0
    %908 = vmatpush2.bf16.xpose.msra.mxu0 0
    %909 = vmatprep.subr.bf16.mxu0 0
    %910 = vmatpush2.bf16.xpose.msra.mxu0 0
    %911 = vmatprep.subr.bf16.mxu0 0
    %912 = vmatpush2.bf16.xpose.msra.mxu0 0
    %913 = vmatprep.subr.bf16.mxu0 0
    %914 = vmatpush2.bf16.xpose.msra.mxu0 0
    %915 = vmatprep.subr.bf16.mxu0 0
    %916 = vmatpush2.bf16.xpose.msra.mxu0 0
    %917 = vmatprep.subr.bf16.mxu0 0
    %918 = vmatpush2.bf16.xpose.msra.mxu0 0
    %919 = vmatprep.mubr.bf16.mxu0 0
    %920 = vmatmul.mubr.bf16.gmra.mxu0 %v876
    %v921 = vpop.f32.mrf.mxu0
    %v922 = vadd.f32 0.0, %v921
    %v923 = vpop.f32.mrf.mxu0
    %v924 = vpop.f32.mrf.mxu0
    %v925 = vadd.f32 0.0, %v924
    %v926 = vpop.f32.mrf.mxu0
    %927 = vmatprep.mubr.bf16.mxu0 0
    %928 = vmatmul.mubr.bf16.gmra.mxu0 %v879
    %v929 = vpop.f32.mrf.mxu0
    %v930 = vadd.f32 0.0, %v929
    %v931 = vpop.f32.mrf.mxu0
    %v932 = vpop.f32.mrf.mxu0
    %v933 = vadd.f32 0.0, %v932
    %v934 = vpop.f32.mrf.mxu0
    %935 = vdwg.mxu0
    %v936 = vmul.f32 %v922, 0.35355338
    %v937 = vmul.f32 %v925, 0.35355338
    %v938 = vmul.f32 %v930, 0.35355338
    %v939 = vmul.f32 %v933, 0.35355338
    %v940 = vadd.f32 %v936, %v41
    %v941 = vadd.f32 %v937, %v42
    %v942 = vadd.f32 %v938, %v43
    %v943 = vadd.f32 %v939, %v44
    %v944 = vsel %vm68, %v940, -inf
    %945 = vmax.xlane.f32.xlu0 %v944
    %v946 = vpop.xlane.xlu0 %945
    %v947 = vsel %vm68, %v941, -inf
    %948 = vmax.xlane.f32.xlu0 %v947
    %v949 = vpop.xlane.xlu0 %948
    %v950 = vsel %vm68, %v942, -inf
    %951 = vmax.xlane.f32.xlu0 %v950
    %v952 = vpop.xlane.xlu0 %951
    %v953 = vsel %vm68, %v943, -inf
    %954 = vmax.xlane.f32.xlu0 %v953
    %v955 = vpop.xlane.xlu0 %954
    %v956 = vsub.f32 %v940, %v946
    %v957 = vsub.f32 %v941, %v949
    %v958 = vsub.f32 %v942, %v952
    %v959 = vsub.f32 %v943, %v955
    %v960 = vmul.f32 %v956, 1.442695
    %v961 = vpow.pop %v960
    %v962 = vmul.f32 %v957, 1.442695
    %v963 = vpow.pop %v962
    %v964 = vmul.f32 %v958, 1.442695
    %v965 = vpow.pop %v964
    %v966 = vmul.f32 %v959, 1.442695
    %v967 = vpow.pop %v966
    %v968 = vsel %vm68, %v961, 0.0
    %969 = vadd.xlane.f32.xlu0 %v968
    %v970 = vpop.xlane.xlu0 %969
    %v971 = vsel %vm68, %v963, 0.0
    %972 = vadd.xlane.f32.xlu0 %v971
    %v973 = vpop.xlane.xlu0 %972
    %v974 = vsel %vm68, %v965, 0.0
    %975 = vadd.xlane.f32.xlu0 %v974
    %v976 = vpop.xlane.xlu0 %975
    %v977 = vsel %vm68, %v967, 0.0
    %978 = vadd.xlane.f32.xlu0 %v977
    %v979 = vpop.xlane.xlu0 %978
    %v980 = vrcp.pop %v970
    %v981 = vrcp.pop %v973
    %v982 = vrcp.pop %v976
    %v983 = vrcp.pop %v979
    %v984 = vmul.f32 %v961, %v980
    %v985 = vmul.f32 %v963, %v981
    %v986 = vmul.f32 %v965, %v982
    %v987 = vmul.f32 %v967, %v983
    %v988 = vpack.c.bf16 %v985, %v984
    %v989 = vpack.c.bf16 %v987, %v986
    %990 = vrot.lane.b32.xlu0 %v124, 40
    %v991 = vpop.permute.xlu0 %990
    %992 = vrot.lane.b32.xlu0 %v125, 40
    %v993 = vpop.permute.xlu0 %992
    %v997 = vsel %vm68, %v988, 0
    %v1000 = vsel %vm68, %v989, 0
    %1002 = vmatprep.subr.bf16.mxu0 0
    %1003 = vmatpush1.bf16.msra.mxu0 0
    %1004 = vmatprep.subr.bf16.mxu0 0
    %1005 = vmatpush1.bf16.msra.mxu0 0
    %1006 = vmatprep.subr.bf16.mxu0 0
    %1007 = vmatpush1.bf16.msra.mxu0 0
    %1008 = vmatprep.subr.bf16.mxu0 0
    %1009 = vmatpush1.bf16.msra.mxu0 0
    %1010 = vmatprep.subr.bf16.mxu0 0
    %1011 = vmatpush1.bf16.msra.mxu0 0
    %1012 = vmatprep.subr.bf16.mxu0 0
    %1013 = vmatpush1.bf16.msra.mxu0 0
    %1014 = vmatprep.subr.bf16.mxu0 0
    %1015 = vmatpush1.bf16.msra.mxu0 %v993
    %1016 = vmatprep.subr.bf16.mxu0 0
    %1017 = vmatpush1.bf16.msra.mxu0 %v991
    %1018 = vmatprep.subr.bf16.mxu0 0
    %1019 = vmatpush2.bf16.msra.mxu0 0
    %1020 = vmatprep.subr.bf16.mxu0 0
    %1021 = vmatpush2.bf16.msra.mxu0 0
    %1022 = vmatprep.subr.bf16.mxu0 0
    %1023 = vmatpush2.bf16.msra.mxu0 0
    %1024 = vmatprep.subr.bf16.mxu0 0
    %1025 = vmatpush2.bf16.msra.mxu0 0
    %1026 = vmatprep.subr.bf16.mxu0 0
    %1027 = vmatpush2.bf16.msra.mxu0 0
    %1028 = vmatprep.subr.bf16.mxu0 0
    %1029 = vmatpush2.bf16.msra.mxu0 0
    %1030 = vmatprep.subr.bf16.mxu0 0
    %1031 = vmatpush2.bf16.msra.mxu0 0
    %1032 = vmatprep.subr.bf16.mxu0 0
    %1033 = vmatpush2.bf16.msra.mxu0 0
    %1034 = vmatprep.mubr.bf16.mxu0 0
    %1035 = vmatmul.mubr.bf16.gmra.mxu0 %v997
    %v1036 = vpop.f32.mrf.mxu0
    %v1037 = vadd.f32 0.0, %v1036
    %v1038 = vpop.f32.mrf.mxu0
    %v1039 = vpop.f32.mrf.mxu0
    %v1040 = vadd.f32 0.0, %v1039
    %v1041 = vpop.f32.mrf.mxu0
    %1042 = vmatprep.mubr.bf16.mxu0 0
    %1043 = vmatmul.mubr.bf16.gmra.mxu0 %v1000
    %v1044 = vpop.f32.mrf.mxu0
    %v1045 = vadd.f32 0.0, %v1044
    %v1046 = vpop.f32.mrf.mxu0
    %v1047 = vpop.f32.mrf.mxu0
    %v1048 = vadd.f32 0.0, %v1047
    %v1049 = vpop.f32.mrf.mxu0
    %1050 = vdwg.mxu0
    %v1051 = vpack.c.bf16 %v1040, %v1037
    %v1052 = vpack.c.bf16 %v1048, %v1045
    %s1053 = scalar_lea.vmem %s4, 12
    %v1054 = vld [vmem:[%s1053] sm:$0xf]
    %v1056 = vsel %vm132, %v1051, 0
    %v1059 = vsel %vm132, %v1052, 0
    %v1062 = vsel %vm506, %v1054, 0
    %1064 = vmatprep.subr.bf16.mxu0 0
    %1065 = vmatpush1.bf16.msra.mxu0 0
    %1066 = vmatprep.subr.bf16.mxu0 0
    %1067 = vmatpush1.bf16.msra.mxu0 0
    %1068 = vmatprep.subr.bf16.mxu0 0
    %1069 = vmatpush1.bf16.msra.mxu0 0
    %1070 = vmatprep.subr.bf16.mxu0 0
    %1071 = vmatpush1.bf16.msra.mxu0 0
    %1072 = vmatprep.subr.bf16.mxu0 0
    %1073 = vmatpush1.bf16.msra.mxu0 0
    %1074 = vmatprep.subr.bf16.mxu0 0
    %1075 = vmatpush1.bf16.msra.mxu0 0
    %1076 = vmatprep.subr.bf16.mxu0 0
    %1077 = vmatpush1.bf16.msra.mxu0 0
    %1078 = vmatprep.subr.bf16.mxu0 0
    %1079 = vmatpush1.bf16.msra.mxu0 %v1062
    %1080 = vmatprep.subr.bf16.mxu0 0
    %1081 = vmatpush2.bf16.msra.mxu0 0
    %1082 = vmatprep.subr.bf16.mxu0 0
    %1083 = vmatpush2.bf16.msra.mxu0 0
    %1084 = vmatprep.subr.bf16.mxu0 0
    %1085 = vmatpush2.bf16.msra.mxu0 0
    %1086 = vmatprep.subr.bf16.mxu0 0
    %1087 = vmatpush2.bf16.msra.mxu0 0
    %1088 = vmatprep.subr.bf16.mxu0 0
    %1089 = vmatpush2.bf16.msra.mxu0 0
    %1090 = vmatprep.subr.bf16.mxu0 0
    %1091 = vmatpush2.bf16.msra.mxu0 0
    %1092 = vmatprep.subr.bf16.mxu0 0
    %1093 = vmatpush2.bf16.msra.mxu0 0
    %1094 = vmatprep.subr.bf16.mxu0 0
    %1095 = vmatpush2.bf16.msra.mxu0 0
    %1096 = vmatprep.mubr.bf16.mxu0 0
    %1097 = vmatmul.mubr.bf16.gmra.mxu0 %v1056
    %v1098 = vpop.f32.mrf.mxu0
    %v1099 = vadd.f32 0.0, %v1098
    %v1100 = vpop.f32.mrf.mxu0
    %v1101 = vpop.f32.mrf.mxu0
    %v1102 = vadd.f32 0.0, %v1101
    %v1103 = vpop.f32.mrf.mxu0
    %1104 = vmatprep.mubr.bf16.mxu0 0
    %1105 = vmatmul.mubr.bf16.gmra.mxu0 %v1059
    %v1106 = vpop.f32.mrf.mxu0
    %v1107 = vadd.f32 0.0, %v1106
    %v1108 = vpop.f32.mrf.mxu0
    %v1109 = vpop.f32.mrf.mxu0
    %v1110 = vadd.f32 0.0, %v1109
    %v1111 = vpop.f32.mrf.mxu0
    %1112 = vdwg.mxu0
    %v1113 = vadd.f32 %v863, %v1099
    %v1114 = vadd.f32 %v864, %v1102
    %v1115 = vadd.f32 %v865, %v1107
    %v1116 = vadd.f32 %v866, %v1110
    %v1117 = vlaneseq
    %v1118 = vshrl.u32 %v1117, 7
    %v1119 = vsub.s32 1, %v1118
    %v1120 = vrot.slane %v45, %v1119
    %v1121 = vadd.f32 %v1113, %v1120
    %v1122 = vadd.f32 %v1114, %v1120
    %v1123 = vadd.f32 %v1115, %v1120
    %v1124 = vadd.f32 %v1116, %v1120
    %v1125 = vadd.f32 %v37, %v1121
    %v1126 = vadd.f32 %v38, %v1122
    %v1127 = vadd.f32 %v39, %v1123
    %v1128 = vadd.f32 %v40, %v1124
    %v1129 = vsel %vm68, %v1125, 0.0
    %1130 = vadd.xlane.f32.xlu0 %v1129
    %v1131 = vpop.xlane.xlu0 %1130
    %v1132 = vsel %vm68, %v1126, 0.0
    %1133 = vadd.xlane.f32.xlu0 %v1132
    %v1134 = vpop.xlane.xlu0 %1133
    %v1135 = vsel %vm68, %v1127, 0.0
    %1136 = vadd.xlane.f32.xlu0 %v1135
    %v1137 = vpop.xlane.xlu0 %1136
    %v1138 = vsel %vm68, %v1128, 0.0
    %1139 = vadd.xlane.f32.xlu0 %v1138
    %v1140 = vpop.xlane.xlu0 %1139
    %v1141 = vrcp.pop 32.0
    %v1142 = vmul.f32 %v1131, %v1141
    %v1143 = vmul.f32 %v1134, %v1141
    %v1144 = vmul.f32 %v1137, %v1141
    %v1145 = vmul.f32 %v1140, %v1141
    %v1146 = vsub.f32 %v1125, %v1142
    %v1147 = vsub.f32 %v1126, %v1143
    %v1148 = vsub.f32 %v1127, %v1144
    %v1149 = vsub.f32 %v1128, %v1145
    %v1150 = vmul.f32 %v1146, %v1146
    %v1151 = vmul.f32 %v1147, %v1147
    %v1152 = vmul.f32 %v1148, %v1148
    %v1153 = vmul.f32 %v1149, %v1149
    %v1154 = vsel %vm68, %v1150, 0.0
    %1155 = vadd.xlane.f32.xlu0 %v1154
    %v1156 = vpop.xlane.xlu0 %1155
    %v1157 = vsel %vm68, %v1151, 0.0
    %1158 = vadd.xlane.f32.xlu0 %v1157
    %v1159 = vpop.xlane.xlu0 %1158
    %v1160 = vsel %vm68, %v1152, 0.0
    %1161 = vadd.xlane.f32.xlu0 %v1160
    %v1162 = vpop.xlane.xlu0 %1161
    %v1163 = vsel %vm68, %v1153, 0.0
    %1164 = vadd.xlane.f32.xlu0 %v1163
    %v1165 = vpop.xlane.xlu0 %1164
    %v1166 = vmul.f32 %v1156, %v1141
    %v1167 = vmul.f32 %v1159, %v1141
    %v1168 = vmul.f32 %v1162, %v1141
    %v1169 = vmul.f32 %v1165, %v1141
    %v1170 = vadd.f32 %v1166, 1e-12
    %v1171 = vadd.f32 %v1167, 1e-12
    %v1172 = vadd.f32 %v1168, 1e-12
    %v1173 = vadd.f32 %v1169, 1e-12
    %v1174 = vrsqrt.pop %v1170
    %v1175 = vrsqrt.pop %v1171
    %v1176 = vrsqrt.pop %v1172
    %v1177 = vrsqrt.pop %v1173
    %v1178 = vmul.f32 %v1146, %v1174
    %v1179 = vmul.f32 %v1147, %v1175
    %v1180 = vmul.f32 %v1148, %v1176
    %v1181 = vmul.f32 %v1149, %v1177
    %v1182 = vlaneseq
    %v1183 = vshrl.u32 %v1182, 7
    %v1184 = vsub.s32 2, %v1183
    %v1185 = vrot.slane %v45, %v1184
    %v1186 = vmul.f32 %v1178, %v1185
    %v1187 = vmul.f32 %v1179, %v1185
    %v1188 = vmul.f32 %v1180, %v1185
    %v1189 = vmul.f32 %v1181, %v1185
    %v1190 = vlaneseq
    %v1191 = vshrl.u32 %v1190, 7
    %v1192 = vsub.s32 3, %v1191
    %v1193 = vrot.slane %v45, %v1192
    %v1194 = vadd.f32 %v1186, %v1193
    %v1195 = vadd.f32 %v1187, %v1193
    %v1196 = vadd.f32 %v1188, %v1193
    %v1197 = vadd.f32 %v1189, %v1193
    %v1198 = vpack.c.bf16 %v1195, %v1194
    %v1199 = vpack.c.bf16 %v1197, %v1196
    %v1200 = vld [vmem:[%s5] sm:$0xf]
    %v1201 = vld [vmem:[%s5 + $0x4] sm:$0xf]
    %v1202 = vld [vmem:[%s5 + $0x8] sm:$0xf]
    %v1203 = vld [vmem:[%s5 + $0xc] sm:$0xf]
    %v1204 = vlaneseq
    %v1205 = vshrl.u32 %v1204, 7
    %v1206 = vsub.s32 4, %v1205
    %v1207 = vrot.slane %v45, %v1206
    %v1212 = vunpack.c.l.b16 %v1200
    %v1213 = vunpack.c.l.b16 %v1201
    %v1214 = vunpack.c.l.b16 %v1202
    %v1215 = vunpack.c.l.b16 %v1203
    %v1216 = vpack.c.b16 %v1213, %v1212
    %v1217 = vpack.c.b16 %v1215, %v1214
    %v1221 = vsel %vm68, %v1198, 0
    %v1224 = vsel %vm68, %v1199, 0
    %1226 = vmatprep.subr.bf16.mxu0 0
    %1227 = vmatpush1.bf16.msra.mxu0 0
    %1228 = vmatprep.subr.bf16.mxu0 0
    %1229 = vmatpush1.bf16.msra.mxu0 0
    %1230 = vmatprep.subr.bf16.mxu0 0
    %1231 = vmatpush1.bf16.msra.mxu0 0
    %1232 = vmatprep.subr.bf16.mxu0 0
    %1233 = vmatpush1.bf16.msra.mxu0 0
    %1234 = vmatprep.subr.bf16.mxu0 0
    %1235 = vmatpush1.bf16.msra.mxu0 0
    %1236 = vmatprep.subr.bf16.mxu0 0
    %1237 = vmatpush1.bf16.msra.mxu0 0
    %1238 = vmatprep.subr.bf16.mxu0 0
    %1239 = vmatpush1.bf16.msra.mxu0 %v1217
    %1240 = vmatprep.subr.bf16.mxu0 0
    %1241 = vmatpush1.bf16.msra.mxu0 %v1216
    %1242 = vmatprep.subr.bf16.mxu0 0
    %1243 = vmatpush2.bf16.msra.mxu0 0
    %1244 = vmatprep.subr.bf16.mxu0 0
    %1245 = vmatpush2.bf16.msra.mxu0 0
    %1246 = vmatprep.subr.bf16.mxu0 0
    %1247 = vmatpush2.bf16.msra.mxu0 0
    %1248 = vmatprep.subr.bf16.mxu0 0
    %1249 = vmatpush2.bf16.msra.mxu0 0
    %1250 = vmatprep.subr.bf16.mxu0 0
    %1251 = vmatpush2.bf16.msra.mxu0 0
    %1252 = vmatprep.subr.bf16.mxu0 0
    %1253 = vmatpush2.bf16.msra.mxu0 0
    %1254 = vmatprep.subr.bf16.mxu0 0
    %1255 = vmatpush2.bf16.msra.mxu0 0
    %1256 = vmatprep.subr.bf16.mxu0 0
    %1257 = vmatpush2.bf16.msra.mxu0 0
    %1258 = vmatprep.mubr.bf16.mxu0 0
    %1259 = vmatmul.mubr.bf16.gmra.mxu0 %v1221
    %v1260 = vpop.f32.mrf.mxu0
    %v1261 = vadd.f32 %v1207, %v1260
    %v1262 = vpop.f32.mrf.mxu0
    %v1263 = vpop.f32.mrf.mxu0
    %v1264 = vadd.f32 %v1207, %v1263
    %v1265 = vpop.f32.mrf.mxu0
    %1266 = vmatprep.mubr.bf16.mxu0 0
    %1267 = vmatmul.mubr.bf16.gmra.mxu0 %v1224
    %v1268 = vpop.f32.mrf.mxu0
    %v1269 = vadd.f32 %v1207, %v1268
    %v1270 = vpop.f32.mrf.mxu0
    %v1271 = vpop.f32.mrf.mxu0
    %v1272 = vadd.f32 %v1207, %v1271
    %v1273 = vpop.f32.mrf.mxu0
    %1274 = vdwg.mxu0
    %v1275 = vmul.f32 %v1261, %v1261
    %v1276 = vmul.f32 %v1264, %v1264
    %v1277 = vmul.f32 %v1269, %v1269
    %v1278 = vmul.f32 %v1272, %v1272
    %v1279 = vmul.f32 %v1261, %v1275
    %v1280 = vmul.f32 %v1264, %v1276
    %v1281 = vmul.f32 %v1269, %v1277
    %v1282 = vmul.f32 %v1272, %v1278
    %v1283 = vmul.f32 %v1279, 0.044715
    %v1284 = vmul.f32 %v1280, 0.044715
    %v1285 = vmul.f32 %v1281, 0.044715
    %v1286 = vmul.f32 %v1282, 0.044715
    %v1287 = vadd.f32 %v1261, %v1283
    %v1288 = vadd.f32 %v1264, %v1284
    %v1289 = vadd.f32 %v1269, %v1285
    %v1290 = vadd.f32 %v1272, %v1286
    %v1291 = vmul.f32 %v1287, 0.7978846
    %v1292 = vmul.f32 %v1288, 0.7978846
    %v1293 = vmul.f32 %v1289, 0.7978846
    %v1294 = vmul.f32 %v1290, 0.7978846
    %v1295 = vtanh.pop %v1291
    %v1296 = vtanh.pop %v1292
    %v1297 = vtanh.pop %v1293
    %v1298 = vtanh.pop %v1294
    %v1299 = vadd.f32 %v1295, 1.0
    %v1300 = vadd.f32 %v1296, 1.0
    %v1301 = vadd.f32 %v1297, 1.0
    %v1302 = vadd.f32 %v1298, 1.0
    %v1303 = vmul.f32 %v1299, 0.5
    %v1304 = vmul.f32 %v1300, 0.5
    %v1305 = vmul.f32 %v1301, 0.5
    %v1306 = vmul.f32 %v1302, 0.5
    %v1307 = vmul.f32 %v1261, %v1303
    %v1308 = vmul.f32 %v1264, %v1304
    %v1309 = vmul.f32 %v1269, %v1305
    %v1310 = vmul.f32 %v1272, %v1306
    %v1311 = vpack.c.bf16 %v1308, %v1307
    %v1312 = vpack.c.bf16 %v1310, %v1309
    %v1313 = vld [vmem:[%s6] sm:$0xf]
    %v1314 = vld [vmem:[%s6 + $0x4] sm:$0xf]
    %v1315 = vld [vmem:[%s6 + $0x8] sm:$0xf]
    %v1316 = vld [vmem:[%s6 + $0xc] sm:$0xf]
    %v1317 = vld [vmem:[%s6 + $0x10] sm:$0xf]
    %v1318 = vld [vmem:[%s6 + $0x14] sm:$0xf]
    %v1319 = vld [vmem:[%s6 + $0x18] sm:$0xf]
    %v1320 = vld [vmem:[%s6 + $0x1c] sm:$0xf]
    %v1321 = vlaneseq
    %v1322 = vshrl.u32 %v1321, 7
    %v1323 = vsub.s32 5, %v1322
    %v1324 = vrot.slane %v45, %v1323
    %v1333 = vunpack.c.l.b16 %v1313
    %v1334 = vunpack.c.l.b16 %v1314
    %v1335 = vunpack.c.l.b16 %v1315
    %v1336 = vunpack.c.l.b16 %v1316
    %v1337 = vunpack.c.l.b16 %v1317
    %v1338 = vunpack.c.l.b16 %v1318
    %v1339 = vunpack.c.l.b16 %v1319
    %v1340 = vunpack.c.l.b16 %v1320
    %v1341 = vpack.c.b16 %v1334, %v1333
    %v1342 = vpack.c.b16 %v1336, %v1335
    %v1343 = vpack.c.b16 %v1338, %v1337
    %v1344 = vpack.c.b16 %v1340, %v1339
    %vm1349 = vcmask 523264
    %v1351 = vsel %vm1349, %v1311, 0
    %v1354 = vsel %vm1349, %v1312, 0
    %1356 = vmatprep.subr.bf16.mxu0 0
    %1357 = vmatpush1.bf16.msra.mxu0 0
    %1358 = vmatprep.subr.bf16.mxu0 0
    %1359 = vmatpush1.bf16.msra.mxu0 0
    %1360 = vmatprep.subr.bf16.mxu0 0
    %1361 = vmatpush1.bf16.msra.mxu0 0
    %1362 = vmatprep.subr.bf16.mxu0 0
    %1363 = vmatpush1.bf16.msra.mxu0 0
    %1364 = vmatprep.subr.bf16.mxu0 0
    %1365 = vmatpush1.bf16.msra.mxu0 %v1344
    %1366 = vmatprep.subr.bf16.mxu0 0
    %1367 = vmatpush1.bf16.msra.mxu0 %v1343
    %1368 = vmatprep.subr.bf16.mxu0 0
    %1369 = vmatpush1.bf16.msra.mxu0 %v1342
    %1370 = vmatprep.subr.bf16.mxu0 0
    %1371 = vmatpush1.bf16.msra.mxu0 %v1341
    %1372 = vmatprep.subr.bf16.mxu0 0
    %1373 = vmatpush2.bf16.msra.mxu0 0
    %1374 = vmatprep.subr.bf16.mxu0 0
    %1375 = vmatpush2.bf16.msra.mxu0 0
    %1376 = vmatprep.subr.bf16.mxu0 0
    %1377 = vmatpush2.bf16.msra.mxu0 0
    %1378 = vmatprep.subr.bf16.mxu0 0
    %1379 = vmatpush2.bf16.msra.mxu0 0
    %1380 = vmatprep.subr.bf16.mxu0 0
    %1381 = vmatpush2.bf16.msra.mxu0 0
    %1382 = vmatprep.subr.bf16.mxu0 0
    %1383 = vmatpush2.bf16.msra.mxu0 0
    %1384 = vmatprep.subr.bf16.mxu0 0
    %1385 = vmatpush2.bf16.msra.mxu0 0
    %1386 = vmatprep.subr.bf16.mxu0 0
    %1387 = vmatpush2.bf16.msra.mxu0 0
    %1388 = vmatprep.mubr.bf16.mxu0 0
    %1389 = vmatmul.mubr.bf16.gmra.mxu0 %v1351
    %v1390 = vpop.f32.mrf.mxu0
    %v1391 = vadd.f32 %v1324, %v1390
    %v1392 = vpop.f32.mrf.mxu0
    %v1393 = vpop.f32.mrf.mxu0
    %v1394 = vadd.f32 %v1324, %v1393
    %v1395 = vpop.f32.mrf.mxu0
    %1396 = vmatprep.mubr.bf16.mxu0 0
    %1397 = vmatmul.mubr.bf16.gmra.mxu0 %v1354
    %v1398 = vpop.f32.mrf.mxu0
    %v1399 = vadd.f32 %v1324, %v1398
    %v1400 = vpop.f32.mrf.mxu0
    %v1401 = vpop.f32.mrf.mxu0
    %v1402 = vadd.f32 %v1324, %v1401
    %v1403 = vpop.f32.mrf.mxu0
    %1404 = vdwg.mxu0
    %v1405 = vadd.f32 %v1194, %v1391
    %v1406 = vadd.f32 %v1195, %v1394
    %v1407 = vadd.f32 %v1196, %v1399
    %v1408 = vadd.f32 %v1197, %v1402
    %v1409 = vsel %vm68, %v1405, 0.0
    %1410 = vadd.xlane.f32.xlu0 %v1409
    %v1411 = vpop.xlane.xlu0 %1410
    %v1412 = vsel %vm68, %v1406, 0.0
    %1413 = vadd.xlane.f32.xlu0 %v1412
    %v1414 = vpop.xlane.xlu0 %1413
    %v1415 = vsel %vm68, %v1407, 0.0
    %1416 = vadd.xlane.f32.xlu0 %v1415
    %v1417 = vpop.xlane.xlu0 %1416
    %v1418 = vsel %vm68, %v1408, 0.0
    %1419 = vadd.xlane.f32.xlu0 %v1418
    %v1420 = vpop.xlane.xlu0 %1419
    %v1421 = vmul.f32 %v1411, %v1141
    %v1422 = vmul.f32 %v1414, %v1141
    %v1423 = vmul.f32 %v1417, %v1141
    %v1424 = vmul.f32 %v1420, %v1141
    %v1425 = vsub.f32 %v1405, %v1421
    %v1426 = vsub.f32 %v1406, %v1422
    %v1427 = vsub.f32 %v1407, %v1423
    %v1428 = vsub.f32 %v1408, %v1424
    %v1429 = vmul.f32 %v1425, %v1425
    %v1430 = vmul.f32 %v1426, %v1426
    %v1431 = vmul.f32 %v1427, %v1427
    %v1432 = vmul.f32 %v1428, %v1428
    %v1433 = vsel %vm68, %v1429, 0.0
    %1434 = vadd.xlane.f32.xlu0 %v1433
    %v1435 = vpop.xlane.xlu0 %1434
    %v1436 = vsel %vm68, %v1430, 0.0
    %1437 = vadd.xlane.f32.xlu0 %v1436
    %v1438 = vpop.xlane.xlu0 %1437
    %v1439 = vsel %vm68, %v1431, 0.0
    %1440 = vadd.xlane.f32.xlu0 %v1439
    %v1441 = vpop.xlane.xlu0 %1440
    %v1442 = vsel %vm68, %v1432, 0.0
    %1443 = vadd.xlane.f32.xlu0 %v1442
    %v1444 = vpop.xlane.xlu0 %1443
    %v1445 = vmul.f32 %v1435, %v1141
    %v1446 = vmul.f32 %v1438, %v1141
    %v1447 = vmul.f32 %v1441, %v1141
    %v1448 = vmul.f32 %v1444, %v1141
    %v1449 = vadd.f32 %v1445, 1e-12
    %v1450 = vadd.f32 %v1446, 1e-12
    %v1451 = vadd.f32 %v1447, 1e-12
    %v1452 = vadd.f32 %v1448, 1e-12
    %v1453 = vrsqrt.pop %v1449
    %v1454 = vrsqrt.pop %v1450
    %v1455 = vrsqrt.pop %v1451
    %v1456 = vrsqrt.pop %v1452
    %v1457 = vmul.f32 %v1425, %v1453
    %v1458 = vmul.f32 %v1426, %v1454
    %v1459 = vmul.f32 %v1427, %v1455
    %v1460 = vmul.f32 %v1428, %v1456
    %v1461 = vlaneseq
    %v1462 = vshrl.u32 %v1461, 7
    %v1463 = vsub.s32 6, %v1462
    %v1464 = vrot.slane %v45, %v1463
    %v1465 = vmul.f32 %v1457, %v1464
    %v1466 = vmul.f32 %v1458, %v1464
    %v1467 = vmul.f32 %v1459, %v1464
    %v1468 = vmul.f32 %v1460, %v1464
    %v1469 = vlaneseq
    %v1470 = vshrl.u32 %v1469, 7
    %v1471 = vsub.s32 7, %v1470
    %v1472 = vrot.slane %v45, %v1471
    %v1473 = vadd.f32 %v1465, %v1472
    %v1474 = vadd.f32 %v1466, %v1472
    %v1475 = vadd.f32 %v1467, %v1472
    %v1476 = vadd.f32 %v1468, %v1472
    %s1477 = scalar_lea.vmem %s7, 8
    %v1478 = vld [vmem:[%s1477] sm:$0xff]
    %v1479 = vpack.c.bf16 %v1474, %v1473
    %v1480 = vpack.c.bf16 %v1476, %v1475
    %s1481 = scalar_lea.vmem %s3, 16
    %v1482 = vld [vmem:[%s1481] sm:$0xf]
    %v1483 = vld [vmem:[%s1481 + $0x4] sm:$0xf]
    %v1484 = vld [vmem:[%s1481 + $0x8] sm:$0xf]
    %v1485 = vld [vmem:[%s1481 + $0xc] sm:$0xf]
    %v1486 = vlaneseq
    %v1487 = vshrl.u32 %v1486, 7
    %v1488 = vsub.s32 0, %v1487
    %v1489 = vrot.slane %v1478, %v1488
    %v1494 = vunpack.c.l.b16 %v1482
    %v1495 = vunpack.c.l.b16 %v1483
    %v1496 = vunpack.c.l.b16 %v1484
    %v1497 = vunpack.c.l.b16 %v1485
    %v1498 = vpack.c.b16 %v1495, %v1494
    %v1499 = vpack.c.b16 %v1497, %v1496
    %v1503 = vsel %vm68, %v1479, 0
    %v1506 = vsel %vm68, %v1480, 0
    %1508 = vmatprep.subr.bf16.mxu0 0
    %1509 = vmatpush1.bf16.msra.mxu0 0
    %1510 = vmatprep.subr.bf16.mxu0 0
    %1511 = vmatpush1.bf16.msra.mxu0 0
    %1512 = vmatprep.subr.bf16.mxu0 0
    %1513 = vmatpush1.bf16.msra.mxu0 0
    %1514 = vmatprep.subr.bf16.mxu0 0
    %1515 = vmatpush1.bf16.msra.mxu0 0
    %1516 = vmatprep.subr.bf16.mxu0 0
    %1517 = vmatpush1.bf16.msra.mxu0 0
    %1518 = vmatprep.subr.bf16.mxu0 0
    %1519 = vmatpush1.bf16.msra.mxu0 0
    %1520 = vmatprep.subr.bf16.mxu0 0
    %1521 = vmatpush1.bf16.msra.mxu0 %v1499
    %1522 = vmatprep.subr.bf16.mxu0 0
    %1523 = vmatpush1.bf16.msra.mxu0 %v1498
    %1524 = vmatprep.subr.bf16.mxu0 0
    %1525 = vmatpush2.bf16.msra.mxu0 0
    %1526 = vmatprep.subr.bf16.mxu0 0
    %1527 = vmatpush2.bf16.msra.mxu0 0
    %1528 = vmatprep.subr.bf16.mxu0 0
    %1529 = vmatpush2.bf16.msra.mxu0 0
    %1530 = vmatprep.subr.bf16.mxu0 0
    %1531 = vmatpush2.bf16.msra.mxu0 0
    %1532 = vmatprep.subr.bf16.mxu0 0
    %1533 = vmatpush2.bf16.msra.mxu0 0
    %1534 = vmatprep.subr.bf16.mxu0 0
    %1535 = vmatpush2.bf16.msra.mxu0 0
    %1536 = vmatprep.subr.bf16.mxu0 0
    %1537 = vmatpush2.bf16.msra.mxu0 0
    %1538 = vmatprep.subr.bf16.mxu0 0
    %1539 = vmatpush2.bf16.msra.mxu0 0
    %1540 = vmatprep.mubr.bf16.mxu0 0
    %1541 = vmatmul.mubr.bf16.gmra.mxu0 %v1503
    %v1542 = vpop.f32.mrf.mxu0
    %v1543 = vadd.f32 %v1489, %v1542
    %v1544 = vpop.f32.mrf.mxu0
    %v1545 = vpop.f32.mrf.mxu0
    %v1546 = vadd.f32 %v1489, %v1545
    %v1547 = vpop.f32.mrf.mxu0
    %1548 = vmatprep.mubr.bf16.mxu0 0
    %1549 = vmatmul.mubr.bf16.gmra.mxu0 %v1506
    %v1550 = vpop.f32.mrf.mxu0
    %v1551 = vadd.f32 %v1489, %v1550
    %v1552 = vpop.f32.mrf.mxu0
    %v1553 = vpop.f32.mrf.mxu0
    %v1554 = vadd.f32 %v1489, %v1553
    %v1555 = vpop.f32.mrf.mxu0
    %1556 = vdwg.mxu0
    %v1557 = vpack.c.bf16 %v1546, %v1543
    %v1558 = vpack.c.bf16 %v1554, %v1551
    %1561 = vrot.lane.b32.xlu0 %v1557, 96
    %v1562 = vpop.permute.xlu0 %1561
    %1563 = vrot.lane.b32.xlu0 %v1558, 96
    %v1564 = vpop.permute.xlu0 %1563
    %v1566 = vsel %vm132, %v1557, 0
    %v1569 = vsel %vm132, %v1558, 0
    %v1572 = vsel %vm132, %v1562, 0
    %v1575 = vsel %vm132, %v1564, 0
    %1577 = vmatprep.subr.bf16.mxu0 0
    %1578 = vmatpush1.bf16.xpose.msra.mxu0 0
    %1579 = vmatprep.subr.bf16.mxu0 0
    %1580 = vmatpush1.bf16.xpose.msra.mxu0 0
    %1581 = vmatprep.subr.bf16.mxu0 0
    %1582 = vmatpush1.bf16.xpose.msra.mxu0 0
    %1583 = vmatprep.subr.bf16.mxu0 0
    %1584 = vmatpush1.bf16.xpose.msra.mxu0 0
    %1585 = vmatprep.subr.bf16.mxu0 0
    %1586 = vmatpush1.bf16.xpose.msra.mxu0 0
    %1587 = vmatprep.subr.bf16.mxu0 0
    %1588 = vmatpush1.bf16.xpose.msra.mxu0 0
    %1589 = vmatprep.subr.bf16.mxu0 0
    %1590 = vmatpush1.bf16.xpose.msra.mxu0 %v1575
    %1591 = vmatprep.subr.bf16.mxu0 0
    %1592 = vmatpush1.bf16.xpose.msra.mxu0 %v1572
    %1593 = vmatprep.subr.bf16.mxu0 0
    %1594 = vmatpush2.bf16.xpose.msra.mxu0 0
    %1595 = vmatprep.subr.bf16.mxu0 0
    %1596 = vmatpush2.bf16.xpose.msra.mxu0 0
    %1597 = vmatprep.subr.bf16.mxu0 0
    %1598 = vmatpush2.bf16.xpose.msra.mxu0 0
    %1599 = vmatprep.subr.bf16.mxu0 0
    %1600 = vmatpush2.bf16.xpose.msra.mxu0 0
    %1601 = vmatprep.subr.bf16.mxu0 0
    %1602 = vmatpush2.bf16.xpose.msra.mxu0 0
    %1603 = vmatprep.subr.bf16.mxu0 0
    %1604 = vmatpush2.bf16.xpose.msra.mxu0 0
    %1605 = vmatprep.subr.bf16.mxu0 0
    %1606 = vmatpush2.bf16.xpose.msra.mxu0 0
    %1607 = vmatprep.subr.bf16.mxu0 0
    %1608 = vmatpush2.bf16.xpose.msra.mxu0 0
    %1609 = vmatprep.mubr.bf16.mxu0 0
    %1610 = vmatmul.mubr.bf16.gmra.mxu0 %v1566
    %v1611 = vpop.f32.mrf.mxu0
    %v1612 = vadd.f32 0.0, %v1611
    %v1613 = vpop.f32.mrf.mxu0
    %v1614 = vpop.f32.mrf.mxu0
    %v1615 = vadd.f32 0.0, %v1614
    %v1616 = vpop.f32.mrf.mxu0
    %1617 = vmatprep.mubr.bf16.mxu0 0
    %1618 = vmatmul.mubr.bf16.gmra.mxu0 %v1569
    %v1619 = vpop.f32.mrf.mxu0
    %v1620 = vadd.f32 0.0, %v1619
    %v1621 = vpop.f32.mrf.mxu0
    %v1622 = vpop.f32.mrf.mxu0
    %v1623 = vadd.f32 0.0, %v1622
    %v1624 = vpop.f32.mrf.mxu0
    %1625 = vdwg.mxu0
    %v1626 = vmul.f32 %v1612, 0.35355338
    %v1627 = vmul.f32 %v1615, 0.35355338
    %v1628 = vmul.f32 %v1620, 0.35355338
    %v1629 = vmul.f32 %v1623, 0.35355338
    %v1630 = vadd.f32 %v1626, %v41
    %v1631 = vadd.f32 %v1627, %v42
    %v1632 = vadd.f32 %v1628, %v43
    %v1633 = vadd.f32 %v1629, %v44
    %v1634 = vsel %vm68, %v1630, -inf
    %1635 = vmax.xlane.f32.xlu0 %v1634
    %v1636 = vpop.xlane.xlu0 %1635
    %v1637 = vsel %vm68, %v1631, -inf
    %1638 = vmax.xlane.f32.xlu0 %v1637
    %v1639 = vpop.xlane.xlu0 %1638
    %v1640 = vsel %vm68, %v1632, -inf
    %1641 = vmax.xlane.f32.xlu0 %v1640
    %v1642 = vpop.xlane.xlu0 %1641
    %v1643 = vsel %vm68, %v1633, -inf
    %1644 = vmax.xlane.f32.xlu0 %v1643
    %v1645 = vpop.xlane.xlu0 %1644
    %v1646 = vsub.f32 %v1630, %v1636
    %v1647 = vsub.f32 %v1631, %v1639
    %v1648 = vsub.f32 %v1632, %v1642
    %v1649 = vsub.f32 %v1633, %v1645
    %v1650 = vmul.f32 %v1646, 1.442695
    %v1651 = vpow.pop %v1650
    %v1652 = vmul.f32 %v1647, 1.442695
    %v1653 = vpow.pop %v1652
    %v1654 = vmul.f32 %v1648, 1.442695
    %v1655 = vpow.pop %v1654
    %v1656 = vmul.f32 %v1649, 1.442695
    %v1657 = vpow.pop %v1656
    %v1658 = vsel %vm68, %v1651, 0.0
    %1659 = vadd.xlane.f32.xlu0 %v1658
    %v1660 = vpop.xlane.xlu0 %1659
    %v1661 = vsel %vm68, %v1653, 0.0
    %1662 = vadd.xlane.f32.xlu0 %v1661
    %v1663 = vpop.xlane.xlu0 %1662
    %v1664 = vsel %vm68, %v1655, 0.0
    %1665 = vadd.xlane.f32.xlu0 %v1664
    %v1666 = vpop.xlane.xlu0 %1665
    %v1667 = vsel %vm68, %v1657, 0.0
    %1668 = vadd.xlane.f32.xlu0 %v1667
    %v1669 = vpop.xlane.xlu0 %1668
    %v1670 = vrcp.pop %v1660
    %v1671 = vrcp.pop %v1663
    %v1672 = vrcp.pop %v1666
    %v1673 = vrcp.pop %v1669
    %v1674 = vmul.f32 %v1651, %v1670
    %v1675 = vmul.f32 %v1653, %v1671
    %v1676 = vmul.f32 %v1655, %v1672
    %v1677 = vmul.f32 %v1657, %v1673
    %v1678 = vpack.c.bf16 %v1675, %v1674
    %v1679 = vpack.c.bf16 %v1677, %v1676
    %1680 = vrot.lane.b32.xlu0 %v1557, 64
    %v1681 = vpop.permute.xlu0 %1680
    %1682 = vrot.lane.b32.xlu0 %v1558, 64
    %v1683 = vpop.permute.xlu0 %1682
    %v1687 = vsel %vm68, %v1678, 0
    %v1690 = vsel %vm68, %v1679, 0
    %1692 = vmatprep.subr.bf16.mxu0 0
    %1693 = vmatpush1.bf16.msra.mxu0 0
    %1694 = vmatprep.subr.bf16.mxu0 0
    %1695 = vmatpush1.bf16.msra.mxu0 0
    %1696 = vmatprep.subr.bf16.mxu0 0
    %1697 = vmatpush1.bf16.msra.mxu0 0
    %1698 = vmatprep.subr.bf16.mxu0 0
    %1699 = vmatpush1.bf16.msra.mxu0 0
    %1700 = vmatprep.subr.bf16.mxu0 0
    %1701 = vmatpush1.bf16.msra.mxu0 0
    %1702 = vmatprep.subr.bf16.mxu0 0
    %1703 = vmatpush1.bf16.msra.mxu0 0
    %1704 = vmatprep.subr.bf16.mxu0 0
    %1705 = vmatpush1.bf16.msra.mxu0 %v1683
    %1706 = vmatprep.subr.bf16.mxu0 0
    %1707 = vmatpush1.bf16.msra.mxu0 %v1681
    %1708 = vmatprep.subr.bf16.mxu0 0
    %1709 = vmatpush2.bf16.msra.mxu0 0
    %1710 = vmatprep.subr.bf16.mxu0 0
    %1711 = vmatpush2.bf16.msra.mxu0 0
    %1712 = vmatprep.subr.bf16.mxu0 0
    %1713 = vmatpush2.bf16.msra.mxu0 0
    %1714 = vmatprep.subr.bf16.mxu0 0
    %1715 = vmatpush2.bf16.msra.mxu0 0
    %1716 = vmatprep.subr.bf16.mxu0 0
    %1717 = vmatpush2.bf16.msra.mxu0 0
    %1718 = vmatprep.subr.bf16.mxu0 0
    %1719 = vmatpush2.bf16.msra.mxu0 0
    %1720 = vmatprep.subr.bf16.mxu0 0
    %1721 = vmatpush2.bf16.msra.mxu0 0
    %1722 = vmatprep.subr.bf16.mxu0 0
    %1723 = vmatpush2.bf16.msra.mxu0 0
    %1724 = vmatprep.mubr.bf16.mxu0 0
    %1725 = vmatmul.mubr.bf16.gmra.mxu0 %v1687
    %v1726 = vpop.f32.mrf.mxu0
    %v1727 = vadd.f32 0.0, %v1726
    %v1728 = vpop.f32.mrf.mxu0
    %v1729 = vpop.f32.mrf.mxu0
    %v1730 = vadd.f32 0.0, %v1729
    %v1731 = vpop.f32.mrf.mxu0
    %1732 = vmatprep.mubr.bf16.mxu0 0
    %1733 = vmatmul.mubr.bf16.gmra.mxu0 %v1690
    %v1734 = vpop.f32.mrf.mxu0
    %v1735 = vadd.f32 0.0, %v1734
    %v1736 = vpop.f32.mrf.mxu0
    %v1737 = vpop.f32.mrf.mxu0
    %v1738 = vadd.f32 0.0, %v1737
    %v1739 = vpop.f32.mrf.mxu0
    %1740 = vdwg.mxu0
    %v1741 = vpack.c.bf16 %v1730, %v1727
    %v1742 = vpack.c.bf16 %v1738, %v1735
    %s1743 = scalar_lea.vmem %s4, 16
    %v1744 = vld [vmem:[%s1743] sm:$0xf]
    %1745 = vrot.lane.b32.xlu0 %v1557, 120
    %v1746 = vpop.permute.xlu0 %1745
    %1747 = vrot.lane.b32.xlu0 %v1558, 120
    %v1748 = vpop.permute.xlu0 %1747
    %1749 = vrot.lane.b32.xlu0 %v1557, 88
    %v1750 = vpop.permute.xlu0 %1749
    %1751 = vrot.lane.b32.xlu0 %v1558, 88
    %v1752 = vpop.permute.xlu0 %1751
    %v1754 = vsel %vm132, %v1746, 0
    %v1757 = vsel %vm132, %v1748, 0
    %v1760 = vsel %vm132, %v1750, 0
    %v1763 = vsel %vm132, %v1752, 0
    %1765 = vmatprep.subr.bf16.mxu0 0
    %1766 = vmatpush1.bf16.xpose.msra.mxu0 0
    %1767 = vmatprep.subr.bf16.mxu0 0
    %1768 = vmatpush1.bf16.xpose.msra.mxu0 0
    %1769 = vmatprep.subr.bf16.mxu0 0
    %1770 = vmatpush1.bf16.xpose.msra.mxu0 0
    %1771 = vmatprep.subr.bf16.mxu0 0
    %1772 = vmatpush1.bf16.xpose.msra.mxu0 0
    %1773 = vmatprep.subr.bf16.mxu0 0
    %1774 = vmatpush1.bf16.xpose.msra.mxu0 0
    %1775 = vmatprep.subr.bf16.mxu0 0
    %1776 = vmatpush1.bf16.xpose.msra.mxu0 0
    %1777 = vmatprep.subr.bf16.mxu0 0
    %1778 = vmatpush1.bf16.xpose.msra.mxu0 %v1763
    %1779 = vmatprep.subr.bf16.mxu0 0
    %1780 = vmatpush1.bf16.xpose.msra.mxu0 %v1760
    %1781 = vmatprep.subr.bf16.mxu0 0
    %1782 = vmatpush2.bf16.xpose.msra.mxu0 0
    %1783 = vmatprep.subr.bf16.mxu0 0
    %1784 = vmatpush2.bf16.xpose.msra.mxu0 0
    %1785 = vmatprep.subr.bf16.mxu0 0
    %1786 = vmatpush2.bf16.xpose.msra.mxu0 0
    %1787 = vmatprep.subr.bf16.mxu0 0
    %1788 = vmatpush2.bf16.xpose.msra.mxu0 0
    %1789 = vmatprep.subr.bf16.mxu0 0
    %1790 = vmatpush2.bf16.xpose.msra.mxu0 0
    %1791 = vmatprep.subr.bf16.mxu0 0
    %1792 = vmatpush2.bf16.xpose.msra.mxu0 0
    %1793 = vmatprep.subr.bf16.mxu0 0
    %1794 = vmatpush2.bf16.xpose.msra.mxu0 0
    %1795 = vmatprep.subr.bf16.mxu0 0
    %1796 = vmatpush2.bf16.xpose.msra.mxu0 0
    %1797 = vmatprep.mubr.bf16.mxu0 0
    %1798 = vmatmul.mubr.bf16.gmra.mxu0 %v1754
    %v1799 = vpop.f32.mrf.mxu0
    %v1800 = vadd.f32 0.0, %v1799
    %v1801 = vpop.f32.mrf.mxu0
    %v1802 = vpop.f32.mrf.mxu0
    %v1803 = vadd.f32 0.0, %v1802
    %v1804 = vpop.f32.mrf.mxu0
    %1805 = vmatprep.mubr.bf16.mxu0 0
    %1806 = vmatmul.mubr.bf16.gmra.mxu0 %v1757
    %v1807 = vpop.f32.mrf.mxu0
    %v1808 = vadd.f32 0.0, %v1807
    %v1809 = vpop.f32.mrf.mxu0
    %v1810 = vpop.f32.mrf.mxu0
    %v1811 = vadd.f32 0.0, %v1810
    %v1812 = vpop.f32.mrf.mxu0
    %1813 = vdwg.mxu0
    %v1814 = vmul.f32 %v1800, 0.35355338
    %v1815 = vmul.f32 %v1803, 0.35355338
    %v1816 = vmul.f32 %v1808, 0.35355338
    %v1817 = vmul.f32 %v1811, 0.35355338
    %v1818 = vadd.f32 %v1814, %v41
    %v1819 = vadd.f32 %v1815, %v42
    %v1820 = vadd.f32 %v1816, %v43
    %v1821 = vadd.f32 %v1817, %v44
    %v1822 = vsel %vm68, %v1818, -inf
    %1823 = vmax.xlane.f32.xlu0 %v1822
    %v1824 = vpop.xlane.xlu0 %1823
    %v1825 = vsel %vm68, %v1819, -inf
    %1826 = vmax.xlane.f32.xlu0 %v1825
    %v1827 = vpop.xlane.xlu0 %1826
    %v1828 = vsel %vm68, %v1820, -inf
    %1829 = vmax.xlane.f32.xlu0 %v1828
    %v1830 = vpop.xlane.xlu0 %1829
    %v1831 = vsel %vm68, %v1821, -inf
    %1832 = vmax.xlane.f32.xlu0 %v1831
    %v1833 = vpop.xlane.xlu0 %1832
    %v1834 = vsub.f32 %v1818, %v1824
    %v1835 = vsub.f32 %v1819, %v1827
    %v1836 = vsub.f32 %v1820, %v1830
    %v1837 = vsub.f32 %v1821, %v1833
    %v1838 = vmul.f32 %v1834, 1.442695
    %v1839 = vpow.pop %v1838
    %v1840 = vmul.f32 %v1835, 1.442695
    %v1841 = vpow.pop %v1840
    %v1842 = vmul.f32 %v1836, 1.442695
    %v1843 = vpow.pop %v1842
    %v1844 = vmul.f32 %v1837, 1.442695
    %v1845 = vpow.pop %v1844
    %v1846 = vsel %vm68, %v1839, 0.0
    %1847 = vadd.xlane.f32.xlu0 %v1846
    %v1848 = vpop.xlane.xlu0 %1847
    %v1849 = vsel %vm68, %v1841, 0.0
    %1850 = vadd.xlane.f32.xlu0 %v1849
    %v1851 = vpop.xlane.xlu0 %1850
    %v1852 = vsel %vm68, %v1843, 0.0
    %1853 = vadd.xlane.f32.xlu0 %v1852
    %v1854 = vpop.xlane.xlu0 %1853
    %v1855 = vsel %vm68, %v1845, 0.0
    %1856 = vadd.xlane.f32.xlu0 %v1855
    %v1857 = vpop.xlane.xlu0 %1856
    %v1858 = vrcp.pop %v1848
    %v1859 = vrcp.pop %v1851
    %v1860 = vrcp.pop %v1854
    %v1861 = vrcp.pop %v1857
    %v1862 = vmul.f32 %v1839, %v1858
    %v1863 = vmul.f32 %v1841, %v1859
    %v1864 = vmul.f32 %v1843, %v1860
    %v1865 = vmul.f32 %v1845, %v1861
    %v1866 = vpack.c.bf16 %v1863, %v1862
    %v1867 = vpack.c.bf16 %v1865, %v1864
    %1868 = vrot.lane.b32.xlu0 %v1557, 56
    %v1869 = vpop.permute.xlu0 %1868
    %1870 = vrot.lane.b32.xlu0 %v1558, 56
    %v1871 = vpop.permute.xlu0 %1870
    %v1875 = vsel %vm68, %v1866, 0
    %v1878 = vsel %vm68, %v1867, 0
    %1880 = vmatprep.subr.bf16.mxu0 0
    %1881 = vmatpush1.bf16.msra.mxu0 0
    %1882 = vmatprep.subr.bf16.mxu0 0
    %1883 = vmatpush1.bf16.msra.mxu0 0
    %1884 = vmatprep.subr.bf16.mxu0 0
    %1885 = vmatpush1.bf16.msra.mxu0 0
    %1886 = vmatprep.subr.bf16.mxu0 0
    %1887 = vmatpush1.bf16.msra.mxu0 0
    %1888 = vmatprep.subr.bf16.mxu0 0
    %1889 = vmatpush1.bf16.msra.mxu0 0
    %1890 = vmatprep.subr.bf16.mxu0 0
    %1891 = vmatpush1.bf16.msra.mxu0 0
    %1892 = vmatprep.subr.bf16.mxu0 0
    %1893 = vmatpush1.bf16.msra.mxu0 %v1871
    %1894 = vmatprep.subr.bf16.mxu0 0
    %1895 = vmatpush1.bf16.msra.mxu0 %v1869
    %1896 = vmatprep.subr.bf16.mxu0 0
    %1897 = vmatpush2.bf16.msra.mxu0 0
    %1898 = vmatprep.subr.bf16.mxu0 0
    %1899 = vmatpush2.bf16.msra.mxu0 0
    %1900 = vmatprep.subr.bf16.mxu0 0
    %1901 = vmatpush2.bf16.msra.mxu0 0
    %1902 = vmatprep.subr.bf16.mxu0 0
    %1903 = vmatpush2.bf16.msra.mxu0 0
    %1904 = vmatprep.subr.bf16.mxu0 0
    %1905 = vmatpush2.bf16.msra.mxu0 0
    %1906 = vmatprep.subr.bf16.mxu0 0
    %1907 = vmatpush2.bf16.msra.mxu0 0
    %1908 = vmatprep.subr.bf16.mxu0 0
    %1909 = vmatpush2.bf16.msra.mxu0 0
    %1910 = vmatprep.subr.bf16.mxu0 0
    %1911 = vmatpush2.bf16.msra.mxu0 0
    %1912 = vmatprep.mubr.bf16.mxu0 0
    %1913 = vmatmul.mubr.bf16.gmra.mxu0 %v1875
    %v1914 = vpop.f32.mrf.mxu0
    %v1915 = vadd.f32 0.0, %v1914
    %v1916 = vpop.f32.mrf.mxu0
    %v1917 = vpop.f32.mrf.mxu0
    %v1918 = vadd.f32 0.0, %v1917
    %v1919 = vpop.f32.mrf.mxu0
    %1920 = vmatprep.mubr.bf16.mxu0 0
    %1921 = vmatmul.mubr.bf16.gmra.mxu0 %v1878
    %v1922 = vpop.f32.mrf.mxu0
    %v1923 = vadd.f32 0.0, %v1922
    %v1924 = vpop.f32.mrf.mxu0
    %v1925 = vpop.f32.mrf.mxu0
    %v1926 = vadd.f32 0.0, %v1925
    %v1927 = vpop.f32.mrf.mxu0
    %1928 = vdwg.mxu0
    %v1929 = vpack.c.bf16 %v1918, %v1915
    %v1930 = vpack.c.bf16 %v1926, %v1923
    %s1931 = scalar_lea.vmem %s4, 20
    %v1932 = vld [vmem:[%s1931] sm:$0xf]
    %v1934 = vsel %vm132, %v1929, 0
    %v1937 = vsel %vm132, %v1930, 0
    %v1940 = vsel %vm506, %v1932, 0
    %1942 = vmatprep.subr.bf16.mxu0 0
    %1943 = vmatpush1.bf16.msra.mxu0 0
    %1944 = vmatprep.subr.bf16.mxu0 0
    %1945 = vmatpush1.bf16.msra.mxu0 0
    %1946 = vmatprep.subr.bf16.mxu0 0
    %1947 = vmatpush1.bf16.msra.mxu0 0
    %1948 = vmatprep.subr.bf16.mxu0 0
    %1949 = vmatpush1.bf16.msra.mxu0 0
    %1950 = vmatprep.subr.bf16.mxu0 0
    %1951 = vmatpush1.bf16.msra.mxu0 0
    %1952 = vmatprep.subr.bf16.mxu0 0
    %1953 = vmatpush1.bf16.msra.mxu0 0
    %1954 = vmatprep.subr.bf16.mxu0 0
    %1955 = vmatpush1.bf16.msra.mxu0 0
    %1956 = vmatprep.subr.bf16.mxu0 0
    %1957 = vmatpush1.bf16.msra.mxu0 %v1940
    %1958 = vmatprep.subr.bf16.mxu0 0
    %1959 = vmatpush2.bf16.msra.mxu0 0
    %1960 = vmatprep.subr.bf16.mxu0 0
    %1961 = vmatpush2.bf16.msra.mxu0 0
    %1962 = vmatprep.subr.bf16.mxu0 0
    %1963 = vmatpush2.bf16.msra.mxu0 0
    %1964 = vmatprep.subr.bf16.mxu0 0
    %1965 = vmatpush2.bf16.msra.mxu0 0
    %1966 = vmatprep.subr.bf16.mxu0 0
    %1967 = vmatpush2.bf16.msra.mxu0 0
    %1968 = vmatprep.subr.bf16.mxu0 0
    %1969 = vmatpush2.bf16.msra.mxu0 0
    %1970 = vmatprep.subr.bf16.mxu0 0
    %1971 = vmatpush2.bf16.msra.mxu0 0
    %1972 = vmatprep.subr.bf16.mxu0 0
    %1973 = vmatpush2.bf16.msra.mxu0 0
    %1974 = vmatprep.mubr.bf16.mxu0 0
    %1975 = vmatmul.mubr.bf16.gmra.mxu0 %v1934
    %v1976 = vpop.f32.mrf.mxu0
    %v1977 = vadd.f32 0.0, %v1976
    %v1978 = vpop.f32.mrf.mxu0
    %v1979 = vpop.f32.mrf.mxu0
    %v1980 = vadd.f32 0.0, %v1979
    %v1981 = vpop.f32.mrf.mxu0
    %1982 = vmatprep.mubr.bf16.mxu0 0
    %1983 = vmatmul.mubr.bf16.gmra.mxu0 %v1937
    %v1984 = vpop.f32.mrf.mxu0
    %v1985 = vadd.f32 0.0, %v1984
    %v1986 = vpop.f32.mrf.mxu0
    %v1987 = vpop.f32.mrf.mxu0
    %v1988 = vadd.f32 0.0, %v1987
    %v1989 = vpop.f32.mrf.mxu0
    %1990 = vdwg.mxu0
    %v1992 = vsel %vm132, %v1741, 0
    %v1995 = vsel %vm132, %v1742, 0
    %v1998 = vsel %vm506, %v1744, 0
    %2000 = vmatprep.subr.bf16.mxu0 0
    %2001 = vmatpush1.bf16.msra.mxu0 0
    %2002 = vmatprep.subr.bf16.mxu0 0
    %2003 = vmatpush1.bf16.msra.mxu0 0
    %2004 = vmatprep.subr.bf16.mxu0 0
    %2005 = vmatpush1.bf16.msra.mxu0 0
    %2006 = vmatprep.subr.bf16.mxu0 0
    %2007 = vmatpush1.bf16.msra.mxu0 0
    %2008 = vmatprep.subr.bf16.mxu0 0
    %2009 = vmatpush1.bf16.msra.mxu0 0
    %2010 = vmatprep.subr.bf16.mxu0 0
    %2011 = vmatpush1.bf16.msra.mxu0 0
    %2012 = vmatprep.subr.bf16.mxu0 0
    %2013 = vmatpush1.bf16.msra.mxu0 0
    %2014 = vmatprep.subr.bf16.mxu0 0
    %2015 = vmatpush1.bf16.msra.mxu0 %v1998
    %2016 = vmatprep.subr.bf16.mxu0 0
    %2017 = vmatpush2.bf16.msra.mxu0 0
    %2018 = vmatprep.subr.bf16.mxu0 0
    %2019 = vmatpush2.bf16.msra.mxu0 0
    %2020 = vmatprep.subr.bf16.mxu0 0
    %2021 = vmatpush2.bf16.msra.mxu0 0
    %2022 = vmatprep.subr.bf16.mxu0 0
    %2023 = vmatpush2.bf16.msra.mxu0 0
    %2024 = vmatprep.subr.bf16.mxu0 0
    %2025 = vmatpush2.bf16.msra.mxu0 0
    %2026 = vmatprep.subr.bf16.mxu0 0
    %2027 = vmatpush2.bf16.msra.mxu0 0
    %2028 = vmatprep.subr.bf16.mxu0 0
    %2029 = vmatpush2.bf16.msra.mxu0 0
    %2030 = vmatprep.subr.bf16.mxu0 0
    %2031 = vmatpush2.bf16.msra.mxu0 0
    %2032 = vmatprep.mubr.bf16.mxu0 0
    %2033 = vmatmul.mubr.bf16.gmra.mxu0 %v1992
    %v2034 = vpop.f32.mrf.mxu0
    %v2035 = vadd.f32 %v1977, %v2034
    %v2036 = vpop.f32.mrf.mxu0
    %v2037 = vpop.f32.mrf.mxu0
    %v2038 = vadd.f32 %v1980, %v2037
    %v2039 = vpop.f32.mrf.mxu0
    %2040 = vmatprep.mubr.bf16.mxu0 0
    %2041 = vmatmul.mubr.bf16.gmra.mxu0 %v1995
    %v2042 = vpop.f32.mrf.mxu0
    %v2043 = vadd.f32 %v1985, %v2042
    %v2044 = vpop.f32.mrf.mxu0
    %v2045 = vpop.f32.mrf.mxu0
    %v2046 = vadd.f32 %v1988, %v2045
    %v2047 = vpop.f32.mrf.mxu0
    %2048 = vdwg.mxu0
    %2049 = vrot.lane.b32.xlu0 %v1557, 112
    %v2050 = vpop.permute.xlu0 %2049
    %2051 = vrot.lane.b32.xlu0 %v1558, 112
    %v2052 = vpop.permute.xlu0 %2051
    %2053 = vrot.lane.b32.xlu0 %v1557, 80
    %v2054 = vpop.permute.xlu0 %2053
    %2055 = vrot.lane.b32.xlu0 %v1558, 80
    %v2056 = vpop.permute.xlu0 %2055
    %v2058 = vsel %vm132, %v2050, 0
    %v2061 = vsel %vm132, %v2052, 0
    %v2064 = vsel %vm132, %v2054, 0
    %v2067 = vsel %vm132, %v2056, 0
    %2069 = vmatprep.subr.bf16.mxu0 0
    %2070 = vmatpush1.bf16.xpose.msra.mxu0 0
    %2071 = vmatprep.subr.bf16.mxu0 0
    %2072 = vmatpush1.bf16.xpose.msra.mxu0 0
    %2073 = vmatprep.subr.bf16.mxu0 0
    %2074 = vmatpush1.bf16.xpose.msra.mxu0 0
    %2075 = vmatprep.subr.bf16.mxu0 0
    %2076 = vmatpush1.bf16.xpose.msra.mxu0 0
    %2077 = vmatprep.subr.bf16.mxu0 0
    %2078 = vmatpush1.bf16.xpose.msra.mxu0 0
    %2079 = vmatprep.subr.bf16.mxu0 0
    %2080 = vmatpush1.bf16.xpose.msra.mxu0 0
    %2081 = vmatprep.subr.bf16.mxu0 0
    %2082 = vmatpush1.bf16.xpose.msra.mxu0 %v2067
    %2083 = vmatprep.subr.bf16.mxu0 0
    %2084 = vmatpush1.bf16.xpose.msra.mxu0 %v2064
    %2085 = vmatprep.subr.bf16.mxu0 0
    %2086 = vmatpush2.bf16.xpose.msra.mxu0 0
    %2087 = vmatprep.subr.bf16.mxu0 0
    %2088 = vmatpush2.bf16.xpose.msra.mxu0 0
    %2089 = vmatprep.subr.bf16.mxu0 0
    %2090 = vmatpush2.bf16.xpose.msra.mxu0 0
    %2091 = vmatprep.subr.bf16.mxu0 0
    %2092 = vmatpush2.bf16.xpose.msra.mxu0 0
    %2093 = vmatprep.subr.bf16.mxu0 0
    %2094 = vmatpush2.bf16.xpose.msra.mxu0 0
    %2095 = vmatprep.subr.bf16.mxu0 0
    %2096 = vmatpush2.bf16.xpose.msra.mxu0 0
    %2097 = vmatprep.subr.bf16.mxu0 0
    %2098 = vmatpush2.bf16.xpose.msra.mxu0 0
    %2099 = vmatprep.subr.bf16.mxu0 0
    %2100 = vmatpush2.bf16.xpose.msra.mxu0 0
    %2101 = vmatprep.mubr.bf16.mxu0 0
    %2102 = vmatmul.mubr.bf16.gmra.mxu0 %v2058
    %v2103 = vpop.f32.mrf.mxu0
    %v2104 = vadd.f32 0.0, %v2103
    %v2105 = vpop.f32.mrf.mxu0
    %v2106 = vpop.f32.mrf.mxu0
    %v2107 = vadd.f32 0.0, %v2106
    %v2108 = vpop.f32.mrf.mxu0
    %2109 = vmatprep.mubr.bf16.mxu0 0
    %2110 = vmatmul.mubr.bf16.gmra.mxu0 %v2061
    %v2111 = vpop.f32.mrf.mxu0
    %v2112 = vadd.f32 0.0, %v2111
    %v2113 = vpop.f32.mrf.mxu0
    %v2114 = vpop.f32.mrf.mxu0
    %v2115 = vadd.f32 0.0, %v2114
    %v2116 = vpop.f32.mrf.mxu0
    %2117 = vdwg.mxu0
    %v2118 = vmul.f32 %v2104, 0.35355338
    %v2119 = vmul.f32 %v2107, 0.35355338
    %v2120 = vmul.f32 %v2112, 0.35355338
    %v2121 = vmul.f32 %v2115, 0.35355338
    %v2122 = vadd.f32 %v2118, %v41
    %v2123 = vadd.f32 %v2119, %v42
    %v2124 = vadd.f32 %v2120, %v43
    %v2125 = vadd.f32 %v2121, %v44
    %v2126 = vsel %vm68, %v2122, -inf
    %2127 = vmax.xlane.f32.xlu0 %v2126
    %v2128 = vpop.xlane.xlu0 %2127
    %v2129 = vsel %vm68, %v2123, -inf
    %2130 = vmax.xlane.f32.xlu0 %v2129
    %v2131 = vpop.xlane.xlu0 %2130
    %v2132 = vsel %vm68, %v2124, -inf
    %2133 = vmax.xlane.f32.xlu0 %v2132
    %v2134 = vpop.xlane.xlu0 %2133
    %v2135 = vsel %vm68, %v2125, -inf
    %2136 = vmax.xlane.f32.xlu0 %v2135
    %v2137 = vpop.xlane.xlu0 %2136
    %v2138 = vsub.f32 %v2122, %v2128
    %v2139 = vsub.f32 %v2123, %v2131
    %v2140 = vsub.f32 %v2124, %v2134
    %v2141 = vsub.f32 %v2125, %v2137
    %v2142 = vmul.f32 %v2138, 1.442695
    %v2143 = vpow.pop %v2142
    %v2144 = vmul.f32 %v2139, 1.442695
    %v2145 = vpow.pop %v2144
    %v2146 = vmul.f32 %v2140, 1.442695
    %v2147 = vpow.pop %v2146
    %v2148 = vmul.f32 %v2141, 1.442695
    %v2149 = vpow.pop %v2148
    %v2150 = vsel %vm68, %v2143, 0.0
    %2151 = vadd.xlane.f32.xlu0 %v2150
    %v2152 = vpop.xlane.xlu0 %2151
    %v2153 = vsel %vm68, %v2145, 0.0
    %2154 = vadd.xlane.f32.xlu0 %v2153
    %v2155 = vpop.xlane.xlu0 %2154
    %v2156 = vsel %vm68, %v2147, 0.0
    %2157 = vadd.xlane.f32.xlu0 %v2156
    %v2158 = vpop.xlane.xlu0 %2157
    %v2159 = vsel %vm68, %v2149, 0.0
    %2160 = vadd.xlane.f32.xlu0 %v2159
    %v2161 = vpop.xlane.xlu0 %2160
    %v2162 = vrcp.pop %v2152
    %v2163 = vrcp.pop %v2155
    %v2164 = vrcp.pop %v2158
    %v2165 = vrcp.pop %v2161
    %v2166 = vmul.f32 %v2143, %v2162
    %v2167 = vmul.f32 %v2145, %v2163
    %v2168 = vmul.f32 %v2147, %v2164
    %v2169 = vmul.f32 %v2149, %v2165
    %v2170 = vpack.c.bf16 %v2167, %v2166
    %v2171 = vpack.c.bf16 %v2169, %v2168
    %2172 = vrot.lane.b32.xlu0 %v1557, 48
    %v2173 = vpop.permute.xlu0 %2172
    %2174 = vrot.lane.b32.xlu0 %v1558, 48
    %v2175 = vpop.permute.xlu0 %2174
    %v2179 = vsel %vm68, %v2170, 0
    %v2182 = vsel %vm68, %v2171, 0
    %2184 = vmatprep.subr.bf16.mxu0 0
    %2185 = vmatpush1.bf16.msra.mxu0 0
    %2186 = vmatprep.subr.bf16.mxu0 0
    %2187 = vmatpush1.bf16.msra.mxu0 0
    %2188 = vmatprep.subr.bf16.mxu0 0
    %2189 = vmatpush1.bf16.msra.mxu0 0
    %2190 = vmatprep.subr.bf16.mxu0 0
    %2191 = vmatpush1.bf16.msra.mxu0 0
    %2192 = vmatprep.subr.bf16.mxu0 0
    %2193 = vmatpush1.bf16.msra.mxu0 0
    %2194 = vmatprep.subr.bf16.mxu0 0
    %2195 = vmatpush1.bf16.msra.mxu0 0
    %2196 = vmatprep.subr.bf16.mxu0 0
    %2197 = vmatpush1.bf16.msra.mxu0 %v2175
    %2198 = vmatprep.subr.bf16.mxu0 0
    %2199 = vmatpush1.bf16.msra.mxu0 %v2173
    %2200 = vmatprep.subr.bf16.mxu0 0
    %2201 = vmatpush2.bf16.msra.mxu0 0
    %2202 = vmatprep.subr.bf16.mxu0 0
    %2203 = vmatpush2.bf16.msra.mxu0 0
    %2204 = vmatprep.subr.bf16.mxu0 0
    %2205 = vmatpush2.bf16.msra.mxu0 0
    %2206 = vmatprep.subr.bf16.mxu0 0
    %2207 = vmatpush2.bf16.msra.mxu0 0
    %2208 = vmatprep.subr.bf16.mxu0 0
    %2209 = vmatpush2.bf16.msra.mxu0 0
    %2210 = vmatprep.subr.bf16.mxu0 0
    %2211 = vmatpush2.bf16.msra.mxu0 0
    %2212 = vmatprep.subr.bf16.mxu0 0
    %2213 = vmatpush2.bf16.msra.mxu0 0
    %2214 = vmatprep.subr.bf16.mxu0 0
    %2215 = vmatpush2.bf16.msra.mxu0 0
    %2216 = vmatprep.mubr.bf16.mxu0 0
    %2217 = vmatmul.mubr.bf16.gmra.mxu0 %v2179
    %v2218 = vpop.f32.mrf.mxu0
    %v2219 = vadd.f32 0.0, %v2218
    %v2220 = vpop.f32.mrf.mxu0
    %v2221 = vpop.f32.mrf.mxu0
    %v2222 = vadd.f32 0.0, %v2221
    %v2223 = vpop.f32.mrf.mxu0
    %2224 = vmatprep.mubr.bf16.mxu0 0
    %2225 = vmatmul.mubr.bf16.gmra.mxu0 %v2182
    %v2226 = vpop.f32.mrf.mxu0
    %v2227 = vadd.f32 0.0, %v2226
    %v2228 = vpop.f32.mrf.mxu0
    %v2229 = vpop.f32.mrf.mxu0
    %v2230 = vadd.f32 0.0, %v2229
    %v2231 = vpop.f32.mrf.mxu0
    %2232 = vdwg.mxu0
    %v2233 = vpack.c.bf16 %v2222, %v2219
    %v2234 = vpack.c.bf16 %v2230, %v2227
    %s2235 = scalar_lea.vmem %s4, 24
    %v2236 = vld [vmem:[%s2235] sm:$0xf]
    %v2238 = vsel %vm132, %v2233, 0
    %v2241 = vsel %vm132, %v2234, 0
    %v2244 = vsel %vm506, %v2236, 0
    %2246 = vmatprep.subr.bf16.mxu0 0
    %2247 = vmatpush1.bf16.msra.mxu0 0
    %2248 = vmatprep.subr.bf16.mxu0 0
    %2249 = vmatpush1.bf16.msra.mxu0 0
    %2250 = vmatprep.subr.bf16.mxu0 0
    %2251 = vmatpush1.bf16.msra.mxu0 0
    %2252 = vmatprep.subr.bf16.mxu0 0
    %2253 = vmatpush1.bf16.msra.mxu0 0
    %2254 = vmatprep.subr.bf16.mxu0 0
    %2255 = vmatpush1.bf16.msra.mxu0 0
    %2256 = vmatprep.subr.bf16.mxu0 0
    %2257 = vmatpush1.bf16.msra.mxu0 0
    %2258 = vmatprep.subr.bf16.mxu0 0
    %2259 = vmatpush1.bf16.msra.mxu0 0
    %2260 = vmatprep.subr.bf16.mxu0 0
    %2261 = vmatpush1.bf16.msra.mxu0 %v2244
    %2262 = vmatprep.subr.bf16.mxu0 0
    %2263 = vmatpush2.bf16.msra.mxu0 0
    %2264 = vmatprep.subr.bf16.mxu0 0
    %2265 = vmatpush2.bf16.msra.mxu0 0
    %2266 = vmatprep.subr.bf16.mxu0 0
    %2267 = vmatpush2.bf16.msra.mxu0 0
    %2268 = vmatprep.subr.bf16.mxu0 0
    %2269 = vmatpush2.bf16.msra.mxu0 0
    %2270 = vmatprep.subr.bf16.mxu0 0
    %2271 = vmatpush2.bf16.msra.mxu0 0
    %2272 = vmatprep.subr.bf16.mxu0 0
    %2273 = vmatpush2.bf16.msra.mxu0 0
    %2274 = vmatprep.subr.bf16.mxu0 0
    %2275 = vmatpush2.bf16.msra.mxu0 0
    %2276 = vmatprep.subr.bf16.mxu0 0
    %2277 = vmatpush2.bf16.msra.mxu0 0
    %2278 = vmatprep.mubr.bf16.mxu0 0
    %2279 = vmatmul.mubr.bf16.gmra.mxu0 %v2238
    %v2280 = vpop.f32.mrf.mxu0
    %v2281 = vadd.f32 0.0, %v2280
    %v2282 = vpop.f32.mrf.mxu0
    %v2283 = vpop.f32.mrf.mxu0
    %v2284 = vadd.f32 0.0, %v2283
    %v2285 = vpop.f32.mrf.mxu0
    %2286 = vmatprep.mubr.bf16.mxu0 0
    %2287 = vmatmul.mubr.bf16.gmra.mxu0 %v2241
    %v2288 = vpop.f32.mrf.mxu0
    %v2289 = vadd.f32 0.0, %v2288
    %v2290 = vpop.f32.mrf.mxu0
    %v2291 = vpop.f32.mrf.mxu0
    %v2292 = vadd.f32 0.0, %v2291
    %v2293 = vpop.f32.mrf.mxu0
    %2294 = vdwg.mxu0
    %v2295 = vadd.f32 %v2035, %v2281
    %v2296 = vadd.f32 %v2038, %v2284
    %v2297 = vadd.f32 %v2043, %v2289
    %v2298 = vadd.f32 %v2046, %v2292
    %2299 = vrot.lane.b32.xlu0 %v1557, 104
    %v2300 = vpop.permute.xlu0 %2299
    %2301 = vrot.lane.b32.xlu0 %v1558, 104
    %v2302 = vpop.permute.xlu0 %2301
    %2303 = vrot.lane.b32.xlu0 %v1557, 72
    %v2304 = vpop.permute.xlu0 %2303
    %2305 = vrot.lane.b32.xlu0 %v1558, 72
    %v2306 = vpop.permute.xlu0 %2305
    %v2308 = vsel %vm132, %v2300, 0
    %v2311 = vsel %vm132, %v2302, 0
    %v2314 = vsel %vm132, %v2304, 0
    %v2317 = vsel %vm132, %v2306, 0
    %2319 = vmatprep.subr.bf16.mxu0 0
    %2320 = vmatpush1.bf16.xpose.msra.mxu0 0
    %2321 = vmatprep.subr.bf16.mxu0 0
    %2322 = vmatpush1.bf16.xpose.msra.mxu0 0
    %2323 = vmatprep.subr.bf16.mxu0 0
    %2324 = vmatpush1.bf16.xpose.msra.mxu0 0
    %2325 = vmatprep.subr.bf16.mxu0 0
    %2326 = vmatpush1.bf16.xpose.msra.mxu0 0
    %2327 = vmatprep.subr.bf16.mxu0 0
    %2328 = vmatpush1.bf16.xpose.msra.mxu0 0
    %2329 = vmatprep.subr.bf16.mxu0 0
    %2330 = vmatpush1.bf16.xpose.msra.mxu0 0
    %2331 = vmatprep.subr.bf16.mxu0 0
    %2332 = vmatpush1.bf16.xpose.msra.mxu0 %v2317
    %2333 = vmatprep.subr.bf16.mxu0 0
    %2334 = vmatpush1.bf16.xpose.msra.mxu0 %v2314
    %2335 = vmatprep.subr.bf16.mxu0 0
    %2336 = vmatpush2.bf16.xpose.msra.mxu0 0
    %2337 = vmatprep.subr.bf16.mxu0 0
    %2338 = vmatpush2.bf16.xpose.msra.mxu0 0
    %2339 = vmatprep.subr.bf16.mxu0 0
    %2340 = vmatpush2.bf16.xpose.msra.mxu0 0
    %2341 = vmatprep.subr.bf16.mxu0 0
    %2342 = vmatpush2.bf16.xpose.msra.mxu0 0
    %2343 = vmatprep.subr.bf16.mxu0 0
    %2344 = vmatpush2.bf16.xpose.msra.mxu0 0
    %2345 = vmatprep.subr.bf16.mxu0 0
    %2346 = vmatpush2.bf16.xpose.msra.mxu0 0
    %2347 = vmatprep.subr.bf16.mxu0 0
    %2348 = vmatpush2.bf16.xpose.msra.mxu0 0
    %2349 = vmatprep.subr.bf16.mxu0 0
    %2350 = vmatpush2.bf16.xpose.msra.mxu0 0
    %2351 = vmatprep.mubr.bf16.mxu0 0
    %2352 = vmatmul.mubr.bf16.gmra.mxu0 %v2308
    %v2353 = vpop.f32.mrf.mxu0
    %v2354 = vadd.f32 0.0, %v2353
    %v2355 = vpop.f32.mrf.mxu0
    %v2356 = vpop.f32.mrf.mxu0
    %v2357 = vadd.f32 0.0, %v2356
    %v2358 = vpop.f32.mrf.mxu0
    %2359 = vmatprep.mubr.bf16.mxu0 0
    %2360 = vmatmul.mubr.bf16.gmra.mxu0 %v2311
    %v2361 = vpop.f32.mrf.mxu0
    %v2362 = vadd.f32 0.0, %v2361
    %v2363 = vpop.f32.mrf.mxu0
    %v2364 = vpop.f32.mrf.mxu0
    %v2365 = vadd.f32 0.0, %v2364
    %v2366 = vpop.f32.mrf.mxu0
    %2367 = vdwg.mxu0
    %v2368 = vmul.f32 %v2354, 0.35355338
    %v2369 = vmul.f32 %v2357, 0.35355338
    %v2370 = vmul.f32 %v2362, 0.35355338
    %v2371 = vmul.f32 %v2365, 0.35355338
    %v2372 = vadd.f32 %v2368, %v41
    %v2373 = vadd.f32 %v2369, %v42
    %v2374 = vadd.f32 %v2370, %v43
    %v2375 = vadd.f32 %v2371, %v44
    %v2376 = vsel %vm68, %v2372, -inf
    %2377 = vmax.xlane.f32.xlu0 %v2376
    %v2378 = vpop.xlane.xlu0 %2377
    %v2379 = vsel %vm68, %v2373, -inf
    %2380 = vmax.xlane.f32.xlu0 %v2379
    %v2381 = vpop.xlane.xlu0 %2380
    %v2382 = vsel %vm68, %v2374, -inf
    %2383 = vmax.xlane.f32.xlu0 %v2382
    %v2384 = vpop.xlane.xlu0 %2383
    %v2385 = vsel %vm68, %v2375, -inf
    %2386 = vmax.xlane.f32.xlu0 %v2385
    %v2387 = vpop.xlane.xlu0 %2386
    %v2388 = vsub.f32 %v2372, %v2378
    %v2389 = vsub.f32 %v2373, %v2381
    %v2390 = vsub.f32 %v2374, %v2384
    %v2391 = vsub.f32 %v2375, %v2387
    %v2392 = vmul.f32 %v2388, 1.442695
    %v2393 = vpow.pop %v2392
    %v2394 = vmul.f32 %v2389, 1.442695
    %v2395 = vpow.pop %v2394
    %v2396 = vmul.f32 %v2390, 1.442695
    %v2397 = vpow.pop %v2396
    %v2398 = vmul.f32 %v2391, 1.442695
    %v2399 = vpow.pop %v2398
    %v2400 = vsel %vm68, %v2393, 0.0
    %2401 = vadd.xlane.f32.xlu0 %v2400
    %v2402 = vpop.xlane.xlu0 %2401
    %v2403 = vsel %vm68, %v2395, 0.0
    %2404 = vadd.xlane.f32.xlu0 %v2403
    %v2405 = vpop.xlane.xlu0 %2404
    %v2406 = vsel %vm68, %v2397, 0.0
    %2407 = vadd.xlane.f32.xlu0 %v2406
    %v2408 = vpop.xlane.xlu0 %2407
    %v2409 = vsel %vm68, %v2399, 0.0
    %2410 = vadd.xlane.f32.xlu0 %v2409
    %v2411 = vpop.xlane.xlu0 %2410
    %v2412 = vrcp.pop %v2402
    %v2413 = vrcp.pop %v2405
    %v2414 = vrcp.pop %v2408
    %v2415 = vrcp.pop %v2411
    %v2416 = vmul.f32 %v2393, %v2412
    %v2417 = vmul.f32 %v2395, %v2413
    %v2418 = vmul.f32 %v2397, %v2414
    %v2419 = vmul.f32 %v2399, %v2415
    %v2420 = vpack.c.bf16 %v2417, %v2416
    %v2421 = vpack.c.bf16 %v2419, %v2418
    %2422 = vrot.lane.b32.xlu0 %v1557, 40
    %v2423 = vpop.permute.xlu0 %2422
    %2424 = vrot.lane.b32.xlu0 %v1558, 40
    %v2425 = vpop.permute.xlu0 %2424
    %v2429 = vsel %vm68, %v2420, 0
    %v2432 = vsel %vm68, %v2421, 0
    %2434 = vmatprep.subr.bf16.mxu0 0
    %2435 = vmatpush1.bf16.msra.mxu0 0
    %2436 = vmatprep.subr.bf16.mxu0 0
    %2437 = vmatpush1.bf16.msra.mxu0 0
    %2438 = vmatprep.subr.bf16.mxu0 0
    %2439 = vmatpush1.bf16.msra.mxu0 0
    %2440 = vmatprep.subr.bf16.mxu0 0
    %2441 = vmatpush1.bf16.msra.mxu0 0
    %2442 = vmatprep.subr.bf16.mxu0 0
    %2443 = vmatpush1.bf16.msra.mxu0 0
    %2444 = vmatprep.subr.bf16.mxu0 0
    %2445 = vmatpush1.bf16.msra.mxu0 0
    %2446 = vmatprep.subr.bf16.mxu0 0
    %2447 = vmatpush1.bf16.msra.mxu0 %v2425
    %2448 = vmatprep.subr.bf16.mxu0 0
    %2449 = vmatpush1.bf16.msra.mxu0 %v2423
    %2450 = vmatprep.subr.bf16.mxu0 0
    %2451 = vmatpush2.bf16.msra.mxu0 0
    %2452 = vmatprep.subr.bf16.mxu0 0
    %2453 = vmatpush2.bf16.msra.mxu0 0
    %2454 = vmatprep.subr.bf16.mxu0 0
    %2455 = vmatpush2.bf16.msra.mxu0 0
    %2456 = vmatprep.subr.bf16.mxu0 0
    %2457 = vmatpush2.bf16.msra.mxu0 0
    %2458 = vmatprep.subr.bf16.mxu0 0
    %2459 = vmatpush2.bf16.msra.mxu0 0
    %2460 = vmatprep.subr.bf16.mxu0 0
    %2461 = vmatpush2.bf16.msra.mxu0 0
    %2462 = vmatprep.subr.bf16.mxu0 0
    %2463 = vmatpush2.bf16.msra.mxu0 0
    %2464 = vmatprep.subr.bf16.mxu0 0
    %2465 = vmatpush2.bf16.msra.mxu0 0
    %2466 = vmatprep.mubr.bf16.mxu0 0
    %2467 = vmatmul.mubr.bf16.gmra.mxu0 %v2429
    %v2468 = vpop.f32.mrf.mxu0
    %v2469 = vadd.f32 0.0, %v2468
    %v2470 = vpop.f32.mrf.mxu0
    %v2471 = vpop.f32.mrf.mxu0
    %v2472 = vadd.f32 0.0, %v2471
    %v2473 = vpop.f32.mrf.mxu0
    %2474 = vmatprep.mubr.bf16.mxu0 0
    %2475 = vmatmul.mubr.bf16.gmra.mxu0 %v2432
    %v2476 = vpop.f32.mrf.mxu0
    %v2477 = vadd.f32 0.0, %v2476
    %v2478 = vpop.f32.mrf.mxu0
    %v2479 = vpop.f32.mrf.mxu0
    %v2480 = vadd.f32 0.0, %v2479
    %v2481 = vpop.f32.mrf.mxu0
    %2482 = vdwg.mxu0
    %v2483 = vpack.c.bf16 %v2472, %v2469
    %v2484 = vpack.c.bf16 %v2480, %v2477
    %s2485 = scalar_lea.vmem %s4, 28
    %v2486 = vld [vmem:[%s2485] sm:$0xf]
    %v2488 = vsel %vm132, %v2483, 0
    %v2491 = vsel %vm132, %v2484, 0
    %v2494 = vsel %vm506, %v2486, 0
    %2496 = vmatprep.subr.bf16.mxu0 0
    %2497 = vmatpush1.bf16.msra.mxu0 0
    %2498 = vmatprep.subr.bf16.mxu0 0
    %2499 = vmatpush1.bf16.msra.mxu0 0
    %2500 = vmatprep.subr.bf16.mxu0 0
    %2501 = vmatpush1.bf16.msra.mxu0 0
    %2502 = vmatprep.subr.bf16.mxu0 0
    %2503 = vmatpush1.bf16.msra.mxu0 0
    %2504 = vmatprep.subr.bf16.mxu0 0
    %2505 = vmatpush1.bf16.msra.mxu0 0
    %2506 = vmatprep.subr.bf16.mxu0 0
    %2507 = vmatpush1.bf16.msra.mxu0 0
    %2508 = vmatprep.subr.bf16.mxu0 0
    %2509 = vmatpush1.bf16.msra.mxu0 0
    %2510 = vmatprep.subr.bf16.mxu0 0
    %2511 = vmatpush1.bf16.msra.mxu0 %v2494
    %2512 = vmatprep.subr.bf16.mxu0 0
    %2513 = vmatpush2.bf16.msra.mxu0 0
    %2514 = vmatprep.subr.bf16.mxu0 0
    %2515 = vmatpush2.bf16.msra.mxu0 0
    %2516 = vmatprep.subr.bf16.mxu0 0
    %2517 = vmatpush2.bf16.msra.mxu0 0
    %2518 = vmatprep.subr.bf16.mxu0 0
    %2519 = vmatpush2.bf16.msra.mxu0 0
    %2520 = vmatprep.subr.bf16.mxu0 0
    %2521 = vmatpush2.bf16.msra.mxu0 0
    %2522 = vmatprep.subr.bf16.mxu0 0
    %2523 = vmatpush2.bf16.msra.mxu0 0
    %2524 = vmatprep.subr.bf16.mxu0 0
    %2525 = vmatpush2.bf16.msra.mxu0 0
    %2526 = vmatprep.subr.bf16.mxu0 0
    %2527 = vmatpush2.bf16.msra.mxu0 0
    %2528 = vmatprep.mubr.bf16.mxu0 0
    %2529 = vmatmul.mubr.bf16.gmra.mxu0 %v2488
    %v2530 = vpop.f32.mrf.mxu0
    %v2531 = vadd.f32 0.0, %v2530
    %v2532 = vpop.f32.mrf.mxu0
    %v2533 = vpop.f32.mrf.mxu0
    %v2534 = vadd.f32 0.0, %v2533
    %v2535 = vpop.f32.mrf.mxu0
    %2536 = vmatprep.mubr.bf16.mxu0 0
    %2537 = vmatmul.mubr.bf16.gmra.mxu0 %v2491
    %v2538 = vpop.f32.mrf.mxu0
    %v2539 = vadd.f32 0.0, %v2538
    %v2540 = vpop.f32.mrf.mxu0
    %v2541 = vpop.f32.mrf.mxu0
    %v2542 = vadd.f32 0.0, %v2541
    %v2543 = vpop.f32.mrf.mxu0
    %2544 = vdwg.mxu0
    %v2545 = vadd.f32 %v2295, %v2531
    %v2546 = vadd.f32 %v2296, %v2534
    %v2547 = vadd.f32 %v2297, %v2539
    %v2548 = vadd.f32 %v2298, %v2542
    %v2549 = vlaneseq
    %v2550 = vshrl.u32 %v2549, 7
    %v2551 = vsub.s32 1, %v2550
    %v2552 = vrot.slane %v1478, %v2551
    %v2553 = vadd.f32 %v2545, %v2552
    %v2554 = vadd.f32 %v2546, %v2552
    %v2555 = vadd.f32 %v2547, %v2552
    %v2556 = vadd.f32 %v2548, %v2552
    %v2557 = vadd.f32 %v1473, %v2553
    %v2558 = vadd.f32 %v1474, %v2554
    %v2559 = vadd.f32 %v1475, %v2555
    %v2560 = vadd.f32 %v1476, %v2556
    %v2561 = vsel %vm68, %v2557, 0.0
    %2562 = vadd.xlane.f32.xlu0 %v2561
    %v2563 = vpop.xlane.xlu0 %2562
    %v2564 = vsel %vm68, %v2558, 0.0
    %2565 = vadd.xlane.f32.xlu0 %v2564
    %v2566 = vpop.xlane.xlu0 %2565
    %v2567 = vsel %vm68, %v2559, 0.0
    %2568 = vadd.xlane.f32.xlu0 %v2567
    %v2569 = vpop.xlane.xlu0 %2568
    %v2570 = vsel %vm68, %v2560, 0.0
    %2571 = vadd.xlane.f32.xlu0 %v2570
    %v2572 = vpop.xlane.xlu0 %2571
    %v2573 = vmul.f32 %v2563, %v1141
    %v2574 = vmul.f32 %v2566, %v1141
    %v2575 = vmul.f32 %v2569, %v1141
    %v2576 = vmul.f32 %v2572, %v1141
    %v2577 = vsub.f32 %v2557, %v2573
    %v2578 = vsub.f32 %v2558, %v2574
    %v2579 = vsub.f32 %v2559, %v2575
    %v2580 = vsub.f32 %v2560, %v2576
    %v2581 = vmul.f32 %v2577, %v2577
    %v2582 = vmul.f32 %v2578, %v2578
    %v2583 = vmul.f32 %v2579, %v2579
    %v2584 = vmul.f32 %v2580, %v2580
    %v2585 = vsel %vm68, %v2581, 0.0
    %2586 = vadd.xlane.f32.xlu0 %v2585
    %v2587 = vpop.xlane.xlu0 %2586
    %v2588 = vsel %vm68, %v2582, 0.0
    %2589 = vadd.xlane.f32.xlu0 %v2588
    %v2590 = vpop.xlane.xlu0 %2589
    %v2591 = vsel %vm68, %v2583, 0.0
    %2592 = vadd.xlane.f32.xlu0 %v2591
    %v2593 = vpop.xlane.xlu0 %2592
    %v2594 = vsel %vm68, %v2584, 0.0
    %2595 = vadd.xlane.f32.xlu0 %v2594
    %v2596 = vpop.xlane.xlu0 %2595
    %v2597 = vmul.f32 %v2587, %v1141
    %v2598 = vmul.f32 %v2590, %v1141
    %v2599 = vmul.f32 %v2593, %v1141
    %v2600 = vmul.f32 %v2596, %v1141
    %v2601 = vadd.f32 %v2597, 1e-12
    %v2602 = vadd.f32 %v2598, 1e-12
    %v2603 = vadd.f32 %v2599, 1e-12
    %v2604 = vadd.f32 %v2600, 1e-12
    %v2605 = vrsqrt.pop %v2601
    %v2606 = vrsqrt.pop %v2602
    %v2607 = vrsqrt.pop %v2603
    %v2608 = vrsqrt.pop %v2604
    %v2609 = vmul.f32 %v2577, %v2605
    %v2610 = vmul.f32 %v2578, %v2606
    %v2611 = vmul.f32 %v2579, %v2607
    %v2612 = vmul.f32 %v2580, %v2608
    %v2613 = vlaneseq
    %v2614 = vshrl.u32 %v2613, 7
    %v2615 = vsub.s32 2, %v2614
    %v2616 = vrot.slane %v1478, %v2615
    %v2617 = vmul.f32 %v2609, %v2616
    %v2618 = vmul.f32 %v2610, %v2616
    %v2619 = vmul.f32 %v2611, %v2616
    %v2620 = vmul.f32 %v2612, %v2616
    %v2621 = vlaneseq
    %v2622 = vshrl.u32 %v2621, 7
    %v2623 = vsub.s32 3, %v2622
    %v2624 = vrot.slane %v1478, %v2623
    %v2625 = vadd.f32 %v2617, %v2624
    %v2626 = vadd.f32 %v2618, %v2624
    %v2627 = vadd.f32 %v2619, %v2624
    %v2628 = vadd.f32 %v2620, %v2624
    %v2629 = vpack.c.bf16 %v2626, %v2625
    %v2630 = vpack.c.bf16 %v2628, %v2627
    %s2631 = scalar_lea.vmem %s5, 16
    %v2632 = vld [vmem:[%s2631] sm:$0xf]
    %v2633 = vld [vmem:[%s2631 + $0x4] sm:$0xf]
    %v2634 = vld [vmem:[%s2631 + $0x8] sm:$0xf]
    %v2635 = vld [vmem:[%s2631 + $0xc] sm:$0xf]
    %v2636 = vlaneseq
    %v2637 = vshrl.u32 %v2636, 7
    %v2638 = vsub.s32 4, %v2637
    %v2639 = vrot.slane %v1478, %v2638
    %v2644 = vunpack.c.l.b16 %v2632
    %v2645 = vunpack.c.l.b16 %v2633
    %v2646 = vunpack.c.l.b16 %v2634
    %v2647 = vunpack.c.l.b16 %v2635
    %v2648 = vpack.c.b16 %v2645, %v2644
    %v2649 = vpack.c.b16 %v2647, %v2646
    %v2653 = vsel %vm68, %v2629, 0
    %v2656 = vsel %vm68, %v2630, 0
    %2658 = vmatprep.subr.bf16.mxu0 0
    %2659 = vmatpush1.bf16.msra.mxu0 0
    %2660 = vmatprep.subr.bf16.mxu0 0
    %2661 = vmatpush1.bf16.msra.mxu0 0
    %2662 = vmatprep.subr.bf16.mxu0 0
    %2663 = vmatpush1.bf16.msra.mxu0 0
    %2664 = vmatprep.subr.bf16.mxu0 0
    %2665 = vmatpush1.bf16.msra.mxu0 0
    %2666 = vmatprep.subr.bf16.mxu0 0
    %2667 = vmatpush1.bf16.msra.mxu0 0
    %2668 = vmatprep.subr.bf16.mxu0 0
    %2669 = vmatpush1.bf16.msra.mxu0 0
    %2670 = vmatprep.subr.bf16.mxu0 0
    %2671 = vmatpush1.bf16.msra.mxu0 %v2649
    %2672 = vmatprep.subr.bf16.mxu0 0
    %2673 = vmatpush1.bf16.msra.mxu0 %v2648
    %2674 = vmatprep.subr.bf16.mxu0 0
    %2675 = vmatpush2.bf16.msra.mxu0 0
    %2676 = vmatprep.subr.bf16.mxu0 0
    %2677 = vmatpush2.bf16.msra.mxu0 0
    %2678 = vmatprep.subr.bf16.mxu0 0
    %2679 = vmatpush2.bf16.msra.mxu0 0
    %2680 = vmatprep.subr.bf16.mxu0 0
    %2681 = vmatpush2.bf16.msra.mxu0 0
    %2682 = vmatprep.subr.bf16.mxu0 0
    %2683 = vmatpush2.bf16.msra.mxu0 0
    %2684 = vmatprep.subr.bf16.mxu0 0
    %2685 = vmatpush2.bf16.msra.mxu0 0
    %2686 = vmatprep.subr.bf16.mxu0 0
    %2687 = vmatpush2.bf16.msra.mxu0 0
    %2688 = vmatprep.subr.bf16.mxu0 0
    %2689 = vmatpush2.bf16.msra.mxu0 0
    %2690 = vmatprep.mubr.bf16.mxu0 0
    %2691 = vmatmul.mubr.bf16.gmra.mxu0 %v2653
    %v2692 = vpop.f32.mrf.mxu0
    %v2693 = vadd.f32 %v2639, %v2692
    %v2694 = vpop.f32.mrf.mxu0
    %v2695 = vpop.f32.mrf.mxu0
    %v2696 = vadd.f32 %v2639, %v2695
    %v2697 = vpop.f32.mrf.mxu0
    %2698 = vmatprep.mubr.bf16.mxu0 0
    %2699 = vmatmul.mubr.bf16.gmra.mxu0 %v2656
    %v2700 = vpop.f32.mrf.mxu0
    %v2701 = vadd.f32 %v2639, %v2700
    %v2702 = vpop.f32.mrf.mxu0
    %v2703 = vpop.f32.mrf.mxu0
    %v2704 = vadd.f32 %v2639, %v2703
    %v2705 = vpop.f32.mrf.mxu0
    %2706 = vdwg.mxu0
    %v2707 = vmul.f32 %v2693, %v2693
    %v2708 = vmul.f32 %v2696, %v2696
    %v2709 = vmul.f32 %v2701, %v2701
    %v2710 = vmul.f32 %v2704, %v2704
    %v2711 = vmul.f32 %v2693, %v2707
    %v2712 = vmul.f32 %v2696, %v2708
    %v2713 = vmul.f32 %v2701, %v2709
    %v2714 = vmul.f32 %v2704, %v2710
    %v2715 = vmul.f32 %v2711, 0.044715
    %v2716 = vmul.f32 %v2712, 0.044715
    %v2717 = vmul.f32 %v2713, 0.044715
    %v2718 = vmul.f32 %v2714, 0.044715
    %v2719 = vadd.f32 %v2693, %v2715
    %v2720 = vadd.f32 %v2696, %v2716
    %v2721 = vadd.f32 %v2701, %v2717
    %v2722 = vadd.f32 %v2704, %v2718
    %v2723 = vmul.f32 %v2719, 0.7978846
    %v2724 = vmul.f32 %v2720, 0.7978846
    %v2725 = vmul.f32 %v2721, 0.7978846
    %v2726 = vmul.f32 %v2722, 0.7978846
    %v2727 = vtanh.pop %v2723
    %v2728 = vtanh.pop %v2724
    %v2729 = vtanh.pop %v2725
    %v2730 = vtanh.pop %v2726
    %v2731 = vadd.f32 %v2727, 1.0
    %v2732 = vadd.f32 %v2728, 1.0
    %v2733 = vadd.f32 %v2729, 1.0
    %v2734 = vadd.f32 %v2730, 1.0
    %v2735 = vmul.f32 %v2731, 0.5
    %v2736 = vmul.f32 %v2732, 0.5
    %v2737 = vmul.f32 %v2733, 0.5
    %v2738 = vmul.f32 %v2734, 0.5
    %v2739 = vmul.f32 %v2693, %v2735
    %v2740 = vmul.f32 %v2696, %v2736
    %v2741 = vmul.f32 %v2701, %v2737
    %v2742 = vmul.f32 %v2704, %v2738
    %v2743 = vpack.c.bf16 %v2740, %v2739
    %v2744 = vpack.c.bf16 %v2742, %v2741
    %s2745 = scalar_lea.vmem %s6, 32
    %v2746 = vld [vmem:[%s2745] sm:$0xf]
    %v2747 = vld [vmem:[%s2745 + $0x4] sm:$0xf]
    %v2748 = vld [vmem:[%s2745 + $0x8] sm:$0xf]
    %v2749 = vld [vmem:[%s2745 + $0xc] sm:$0xf]
    %v2750 = vld [vmem:[%s2745 + $0x10] sm:$0xf]
    %v2751 = vld [vmem:[%s2745 + $0x14] sm:$0xf]
    %v2752 = vld [vmem:[%s2745 + $0x18] sm:$0xf]
    %v2753 = vld [vmem:[%s2745 + $0x1c] sm:$0xf]
    %v2754 = vlaneseq
    %v2755 = vshrl.u32 %v2754, 7
    %v2756 = vsub.s32 5, %v2755
    %v2757 = vrot.slane %v1478, %v2756
    %v2766 = vunpack.c.l.b16 %v2746
    %v2767 = vunpack.c.l.b16 %v2747
    %v2768 = vunpack.c.l.b16 %v2748
    %v2769 = vunpack.c.l.b16 %v2749
    %v2770 = vunpack.c.l.b16 %v2750
    %v2771 = vunpack.c.l.b16 %v2751
    %v2772 = vunpack.c.l.b16 %v2752
    %v2773 = vunpack.c.l.b16 %v2753
    %v2774 = vpack.c.b16 %v2767, %v2766
    %v2775 = vpack.c.b16 %v2769, %v2768
    %v2776 = vpack.c.b16 %v2771, %v2770
    %v2777 = vpack.c.b16 %v2773, %v2772
    %v2783 = vsel %vm1349, %v2743, 0
    %v2786 = vsel %vm1349, %v2744, 0
    %2788 = vmatprep.subr.bf16.mxu0 0
    %2789 = vmatpush1.bf16.msra.mxu0 0
    %2790 = vmatprep.subr.bf16.mxu0 0
    %2791 = vmatpush1.bf16.msra.mxu0 0
    %2792 = vmatprep.subr.bf16.mxu0 0
    %2793 = vmatpush1.bf16.msra.mxu0 0
    %2794 = vmatprep.subr.bf16.mxu0 0
    %2795 = vmatpush1.bf16.msra.mxu0 0
    %2796 = vmatprep.subr.bf16.mxu0 0
    %2797 = vmatpush1.bf16.msra.mxu0 %v2777
    %2798 = vmatprep.subr.bf16.mxu0 0
    %2799 = vmatpush1.bf16.msra.mxu0 %v2776
    %2800 = vmatprep.subr.bf16.mxu0 0
    %2801 = vmatpush1.bf16.msra.mxu0 %v2775
    %2802 = vmatprep.subr.bf16.mxu0 0
    %2803 = vmatpush1.bf16.msra.mxu0 %v2774
    %2804 = vmatprep.subr.bf16.mxu0 0
    %2805 = vmatpush2.bf16.msra.mxu0 0
    %2806 = vmatprep.subr.bf16.mxu0 0
    %2807 = vmatpush2.bf16.msra.mxu0 0
    %2808 = vmatprep.subr.bf16.mxu0 0
    %2809 = vmatpush2.bf16.msra.mxu0 0
    %2810 = vmatprep.subr.bf16.mxu0 0
    %2811 = vmatpush2.bf16.msra.mxu0 0
    %2812 = vmatprep.subr.bf16.mxu0 0
    %2813 = vmatpush2.bf16.msra.mxu0 0
    %2814 = vmatprep.subr.bf16.mxu0 0
    %2815 = vmatpush2.bf16.msra.mxu0 0
    %2816 = vmatprep.subr.bf16.mxu0 0
    %2817 = vmatpush2.bf16.msra.mxu0 0
    %2818 = vmatprep.subr.bf16.mxu0 0
    %2819 = vmatpush2.bf16.msra.mxu0 0
    %2820 = vmatprep.mubr.bf16.mxu0 0
    %2821 = vmatmul.mubr.bf16.gmra.mxu0 %v2783
    %v2822 = vpop.f32.mrf.mxu0
    %v2823 = vadd.f32 %v2757, %v2822
    %v2824 = vpop.f32.mrf.mxu0
    %v2825 = vpop.f32.mrf.mxu0
    %v2826 = vadd.f32 %v2757, %v2825
    %v2827 = vpop.f32.mrf.mxu0
    %2828 = vmatprep.mubr.bf16.mxu0 0
    %2829 = vmatmul.mubr.bf16.gmra.mxu0 %v2786
    %v2830 = vpop.f32.mrf.mxu0
    %v2831 = vadd.f32 %v2757, %v2830
    %v2832 = vpop.f32.mrf.mxu0
    %v2833 = vpop.f32.mrf.mxu0
    %v2834 = vadd.f32 %v2757, %v2833
    %v2835 = vpop.f32.mrf.mxu0
    %2836 = vdwg.mxu0
    %v2837 = vadd.f32 %v2625, %v2823
    %v2838 = vadd.f32 %v2626, %v2826
    %v2839 = vadd.f32 %v2627, %v2831
    %v2840 = vadd.f32 %v2628, %v2834
    %v2841 = vsel %vm68, %v2837, 0.0
    %2842 = vadd.xlane.f32.xlu0 %v2841
    %v2843 = vpop.xlane.xlu0 %2842
    %v2844 = vsel %vm68, %v2838, 0.0
    %2845 = vadd.xlane.f32.xlu0 %v2844
    %v2846 = vpop.xlane.xlu0 %2845
    %v2847 = vsel %vm68, %v2839, 0.0
    %2848 = vadd.xlane.f32.xlu0 %v2847
    %v2849 = vpop.xlane.xlu0 %2848
    %v2850 = vsel %vm68, %v2840, 0.0
    %2851 = vadd.xlane.f32.xlu0 %v2850
    %v2852 = vpop.xlane.xlu0 %2851
    %v2853 = vmul.f32 %v2843, %v1141
    %v2854 = vmul.f32 %v2846, %v1141
    %v2855 = vmul.f32 %v2849, %v1141
    %v2856 = vmul.f32 %v2852, %v1141
    %v2857 = vsub.f32 %v2837, %v2853
    %v2858 = vsub.f32 %v2838, %v2854
    %v2859 = vsub.f32 %v2839, %v2855
    %v2860 = vsub.f32 %v2840, %v2856
    %v2861 = vmul.f32 %v2857, %v2857
    %v2862 = vmul.f32 %v2858, %v2858
    %v2863 = vmul.f32 %v2859, %v2859
    %v2864 = vmul.f32 %v2860, %v2860
    %v2865 = vsel %vm68, %v2861, 0.0
    %2866 = vadd.xlane.f32.xlu0 %v2865
    %v2867 = vpop.xlane.xlu0 %2866
    %v2868 = vsel %vm68, %v2862, 0.0
    %2869 = vadd.xlane.f32.xlu0 %v2868
    %v2870 = vpop.xlane.xlu0 %2869
    %v2871 = vsel %vm68, %v2863, 0.0
    %2872 = vadd.xlane.f32.xlu0 %v2871
    %v2873 = vpop.xlane.xlu0 %2872
    %v2874 = vsel %vm68, %v2864, 0.0
    %2875 = vadd.xlane.f32.xlu0 %v2874
    %v2876 = vpop.xlane.xlu0 %2875
    %v2877 = vmul.f32 %v2867, %v1141
    %v2878 = vmul.f32 %v2870, %v1141
    %v2879 = vmul.f32 %v2873, %v1141
    %v2880 = vmul.f32 %v2876, %v1141
    %v2881 = vadd.f32 %v2877, 1e-12
    %v2882 = vadd.f32 %v2878, 1e-12
    %v2883 = vadd.f32 %v2879, 1e-12
    %v2884 = vadd.f32 %v2880, 1e-12
    %v2885 = vrsqrt.pop %v2881
    %v2886 = vrsqrt.pop %v2882
    %v2887 = vrsqrt.pop %v2883
    %v2888 = vrsqrt.pop %v2884
    %v2889 = vmul.f32 %v2857, %v2885
    %v2890 = vmul.f32 %v2858, %v2886
    %v2891 = vmul.f32 %v2859, %v2887
    %v2892 = vmul.f32 %v2860, %v2888
    %v2893 = vlaneseq
    %v2894 = vshrl.u32 %v2893, 7
    %v2895 = vsub.s32 6, %v2894
    %v2896 = vrot.slane %v1478, %v2895
    %v2897 = vmul.f32 %v2889, %v2896
    %v2898 = vmul.f32 %v2890, %v2896
    %v2899 = vmul.f32 %v2891, %v2896
    %v2900 = vmul.f32 %v2892, %v2896
    %v2901 = vlaneseq
    %v2902 = vshrl.u32 %v2901, 7
    %v2903 = vsub.s32 7, %v2902
    %v2904 = vrot.slane %v1478, %v2903
    %v2905 = vadd.f32 %v2897, %v2904
    %v2906 = vadd.f32 %v2898, %v2904
    %v2907 = vadd.f32 %v2899, %v2904
    %v2908 = vadd.f32 %v2900, %v2904
    %v2909 = vld [vmem:[%s2] sm:$0x3]
    %v2911 = vsel %vm68, %v2909, 0
    %2913 = vmatprep.subr.mxu0 0.0
    %2914 = vmatpush1.msra.mxu0 0.0
    %2915 = vmatprep.subr.mxu0 0.0
    %2916 = vmatpush1.msra.mxu0 0.0
    %2917 = vmatprep.subr.mxu0 0.0
    %2918 = vmatpush1.msra.mxu0 0.0
    %2919 = vmatprep.subr.mxu0 0.0
    %2920 = vmatpush1.msra.mxu0 0.0
    %2921 = vmatprep.subr.mxu0 0.0
    %2922 = vmatpush1.msra.mxu0 0.0
    %2923 = vmatprep.subr.mxu0 0.0
    %2924 = vmatpush1.msra.mxu0 0.0
    %2925 = vmatprep.subr.mxu0 0.0
    %2926 = vmatpush1.msra.mxu0 0.0
    %2927 = vmatprep.subr.mxu0 0.0
    %2928 = vmatpush1.msra.mxu0 0.0
    %2929 = vmatprep.subr.mxu0 0.0
    %2930 = vmatpush1.msra.mxu0 0.0
    %2931 = vmatprep.subr.mxu0 0.0
    %2932 = vmatpush1.msra.mxu0 0.0
    %2933 = vmatprep.subr.mxu0 0.0
    %2934 = vmatpush1.msra.mxu0 0.0
    %2935 = vmatprep.subr.mxu0 0.0
    %2936 = vmatpush1.msra.mxu0 0.0
    %2937 = vmatprep.subr.mxu0 0.0
    %2938 = vmatpush1.msra.mxu0 %v2908
    %2939 = vmatprep.subr.mxu0 0.0
    %2940 = vmatpush1.msra.mxu0 %v2907
    %2941 = vmatprep.subr.mxu0 0.0
    %2942 = vmatpush1.msra.mxu0 %v2906
    %2943 = vmatprep.subr.mxu0 0.0
    %2944 = vmatpush1.msra.mxu0 %v2905
    %2945 = vmatprep.subr.mxu0 0.0
    %2946 = vmatpush2.msra.mxu0 0.0
    %2947 = vmatprep.subr.mxu0 0.0
    %2948 = vmatpush2.msra.mxu0 0.0
    %2949 = vmatprep.subr.mxu0 0.0
    %2950 = vmatpush2.msra.mxu0 0.0
    %2951 = vmatprep.subr.mxu0 0.0
    %2952 = vmatpush2.msra.mxu0 0.0
    %2953 = vmatprep.subr.mxu0 0.0
    %2954 = vmatpush2.msra.mxu0 0.0
    %2955 = vmatprep.subr.mxu0 0.0
    %2956 = vmatpush2.msra.mxu0 0.0
    %2957 = vmatprep.subr.mxu0 0.0
    %2958 = vmatpush2.msra.mxu0 0.0
    %2959 = vmatprep.subr.mxu0 0.0
    %2960 = vmatpush2.msra.mxu0 0.0
    %2961 = vmatprep.subr.mxu0 0.0
    %2962 = vmatpush2.msra.mxu0 0.0
    %2963 = vmatprep.subr.mxu0 0.0
    %2964 = vmatpush2.msra.mxu0 0.0
    %2965 = vmatprep.subr.mxu0 0.0
    %2966 = vmatpush2.msra.mxu0 0.0
    %2967 = vmatprep.subr.mxu0 0.0
    %2968 = vmatpush2.msra.mxu0 0.0
    %2969 = vmatprep.subr.mxu0 0.0
    %2970 = vmatpush2.msra.mxu0 0.0
    %2971 = vmatprep.subr.mxu0 0.0
    %2972 = vmatpush2.msra.mxu0 0.0
    %2973 = vmatprep.subr.mxu0 0.0
    %2974 = vmatpush2.msra.mxu0 0.0
    %2975 = vmatprep.subr.mxu0 0.0
    %2976 = vmatpush2.msra.mxu0 0.0
    %2977 = vmatprep.mubr.f32.mxu0 0.0
    %2978 = vmatmul.mubr.f32.gmra.mxu0 %v2911
    %v2979 = vpop.f32.mrf.mxu0
    %v2980 = vadd.f32 0.0, %v2979
    %v2981 = vpop.f32.mrf.mxu0
    %2982 = vdwg.mxu0
    %v2983 = vld [vmem:[%s8] sm:$0xff]
    %v2984 = vld [vmem:[%s8 + $0x8] sm:$0xff]
    %v2985 = vld [vmem:[%s8 + $0x10] sm:$0xff]
    %v2986 = vld [vmem:[%s8 + $0x18] sm:$0xff]
    %v2987 = vld [vmem:[%s9] sm:$0x1]
    %v2989 = vlaneseq
    %v2990 = vshrl.u32 %v2989, 7
    %v2991 = vsub.s32 0, %v2990
    %v2992 = vrot.slane %v2987, %v2991
    %v2995 = vsel %vm68, %v2980, 0
    %2997 = vmatprep.subr.mxu0 0.0
    %2998 = vmatpush1.msra.mxu0 0.0
    %2999 = vmatprep.subr.mxu0 0.0
    %3000 = vmatpush1.msra.mxu0 0.0
    %3001 = vmatprep.subr.mxu0 0.0
    %3002 = vmatpush1.msra.mxu0 0.0
    %3003 = vmatprep.subr.mxu0 0.0
    %3004 = vmatpush1.msra.mxu0 0.0
    %3005 = vmatprep.subr.mxu0 0.0
    %3006 = vmatpush1.msra.mxu0 0.0
    %3007 = vmatprep.subr.mxu0 0.0
    %3008 = vmatpush1.msra.mxu0 0.0
    %3009 = vmatprep.subr.mxu0 0.0
    %3010 = vmatpush1.msra.mxu0 0.0
    %3011 = vmatprep.subr.mxu0 0.0
    %3012 = vmatpush1.msra.mxu0 0.0
    %3013 = vmatprep.subr.mxu0 0.0
    %3014 = vmatpush1.msra.mxu0 0.0
    %3015 = vmatprep.subr.mxu0 0.0
    %3016 = vmatpush1.msra.mxu0 0.0
    %3017 = vmatprep.subr.mxu0 0.0
    %3018 = vmatpush1.msra.mxu0 0.0
    %3019 = vmatprep.subr.mxu0 0.0
    %3020 = vmatpush1.msra.mxu0 0.0
    %3021 = vmatprep.subr.mxu0 0.0
    %3022 = vmatpush1.msra.mxu0 %v2986
    %3023 = vmatprep.subr.mxu0 0.0
    %3024 = vmatpush1.msra.mxu0 %v2985
    %3025 = vmatprep.subr.mxu0 0.0
    %3026 = vmatpush1.msra.mxu0 %v2984
    %3027 = vmatprep.subr.mxu0 0.0
    %3028 = vmatpush1.msra.mxu0 %v2983
    %3029 = vmatprep.subr.mxu0 0.0
    %3030 = vmatpush2.msra.mxu0 0.0
    %3031 = vmatprep.subr.mxu0 0.0
    %3032 = vmatpush2.msra.mxu0 0.0
    %3033 = vmatprep.subr.mxu0 0.0
    %3034 = vmatpush2.msra.mxu0 0.0
    %3035 = vmatprep.subr.mxu0 0.0
    %3036 = vmatpush2.msra.mxu0 0.0
    %3037 = vmatprep.subr.mxu0 0.0
    %3038 = vmatpush2.msra.mxu0 0.0
    %3039 = vmatprep.subr.mxu0 0.0
    %3040 = vmatpush2.msra.mxu0 0.0
    %3041 = vmatprep.subr.mxu0 0.0
    %3042 = vmatpush2.msra.mxu0 0.0
    %3043 = vmatprep.subr.mxu0 0.0
    %3044 = vmatpush2.msra.mxu0 0.0
    %3045 = vmatprep.subr.mxu0 0.0
    %3046 = vmatpush2.msra.mxu0 0.0
    %3047 = vmatprep.subr.mxu0 0.0
    %3048 = vmatpush2.msra.mxu0 0.0
    %3049 = vmatprep.subr.mxu0 0.0
    %3050 = vmatpush2.msra.mxu0 0.0
    %3051 = vmatprep.subr.mxu0 0.0
    %3052 = vmatpush2.msra.mxu0 0.0
    %3053 = vmatprep.subr.mxu0 0.0
    %3054 = vmatpush2.msra.mxu0 0.0
    %3055 = vmatprep.subr.mxu0 0.0
    %3056 = vmatpush2.msra.mxu0 0.0
    %3057 = vmatprep.subr.mxu0 0.0
    %3058 = vmatpush2.msra.mxu0 0.0
    %3059 = vmatprep.subr.mxu0 0.0
    %3060 = vmatpush2.msra.mxu0 0.0
    %3061 = vmatprep.mubr.f32.mxu0 0.0
    %3062 = vmatmul.mubr.f32.gmra.mxu0 %v2995
    %v3063 = vpop.f32.mrf.mxu0
    %v3064 = vadd.f32 %v2992, %v3063
    %v3065 = vpop.f32.mrf.mxu0
    %3066 = vdwg.mxu0
    %3067 = vst [vmem:[#allocation2] sm:$0x3] %v3064
    // Predicated region
    $region42: #{_embed_and_encode.1} parent=1 // pred_check
      _
    $region43: #{_embed_and_encode.1} parent=1 // pred_check_branch
      %3069 = sbr.rel (0) target = $region45
    $region44: #{_embed_and_encode.1} parent=1 // pred_region
      %s3071 = ssub.s32 32, 32
      %3072 = vsyncadd [#allocation3], %s3071
      %s3074 = sshll.u32 [#allocation2], 4
      %s3075 = int_to_ptr.vmem [resolvable:$true] %s3074
      %3077 = dma.vmem_to_hbm [thread:$0]  %s3075, 32, %s10, [#allocation3]
    $region45: #{_embed_and_encode.1} parent=1 // pred_fallthru
      _
    // Predicated region
    $region46: #{_embed_and_encode.1} parent=1 // pred_check
      _
    $region47: #{_embed_and_encode.1} parent=1 // pred_check_branch
      %3079 = sbr.rel (0) target = $region49
    $region48: #{_embed_and_encode.1} parent=1 // pred_region
      %3080 = dma.done [#allocation3], 32
    $region49: #{_embed_and_encode.1} parent=1 // pred_fallthru
      _
    %3081 = vsyncpa [#allocation3], 1

</llo_original>
